<compile_context>
chip_gen: v6e
topology: v6e:2x2x1
jax: 0.10.0
libtpu: 0.0.40
codegen_flags: <defaults>
</compile_context>

<pallas_src>
import jax
import jax.numpy as jnp
from jax.experimental import pallas as pl
from jax.experimental.pallas import tpu as pltpu

D_HIDDEN = 16
IMAGE_CHANNEL = 1
BN_EPS = 1e-5
LRELU_SLOPE = 0.2

MATMUL_DTYPE = jnp.bfloat16     # MXU operand dtype (patches / conv weights)
ACT_DTYPE = jnp.bfloat16        # inter-layer activation storage dtype
_VMEM_LIMIT = 64 * 1024 * 1024  # explicit scoped-VMEM cap (v5e default is 16 MiB)


# ----------------------------- Pallas kernels ------------------------------

def conv_lrelu_kernel(p_ref, w_ref, o_ref):
    # (tm, K) @ (K, N) on MXU (bf16 in, f32 accumulate), LeakyReLU(0.2) on VPU.
    y = jnp.dot(p_ref[...], w_ref[...], preferred_element_type=jnp.float32)
    z = jnp.where(y > 0, y, LRELU_SLOPE * y)
    o_ref[...] = z.astype(o_ref.dtype)


def conv_bn_lrelu_kernel(p_ref, w_ref, g_ref, b_ref, o_ref):
    # matmul -> BatchNorm2d (training-mode batch stats, biased variance,
    # one-pass E[y^2]-mean^2, eps=1e-5) -> LeakyReLU(0.2).  All math in f32.
    y = jnp.dot(p_ref[...], w_ref[...], preferred_element_type=jnp.float32)
    mean = jnp.mean(y, axis=0, keepdims=True)
    mean_sq = jnp.mean(y * y, axis=0, keepdims=True)
    var = jnp.maximum(mean_sq - mean * mean, 0.0)
    z = (y - mean) * jax.lax.rsqrt(var + BN_EPS) * g_ref[...] + b_ref[...]
    z = jnp.where(z > 0, z, LRELU_SLOPE * z)
    o_ref[...] = z.astype(o_ref.dtype)


def conv_bn_lrelu_sigmoid_head_kernel(p_ref, w_ref, g_ref, b_ref,
                                      w5_ref, gmat_ref, o_ref):
    # Layer 4 (conv + BN + LeakyReLU) with the layer-5 (4x4 valid conv, Cout=1)
    # + sigmoid folded into the epilogue:
    #   out[b] = sigmoid( sum_{rows r of image b, channels c} a[r, c] * w5t[r, c] )
    # realized as elementwise multiply + lane reduction + tiny group matmul.
    y = jnp.dot(p_ref[...], w_ref[...], preferred_element_type=jnp.float32)  # (B*16, 128)
    mean = jnp.mean(y, axis=0, keepdims=True)
    mean_sq = jnp.mean(y * y, axis=0, keepdims=True)
    var = jnp.maximum(mean_sq - mean * mean, 0.0)
    z = (y - mean) * jax.lax.rsqrt(var + BN_EPS) * g_ref[...] + b_ref[...]
    a = jnp.where(z > 0, z, LRELU_SLOPE * z)                                 # (B*16, 128)
    s = jnp.sum(a * w5_ref[...], axis=1, keepdims=True)                      # (B*16, 1)
    logits = jnp.dot(gmat_ref[...], s, preferred_element_type=jnp.float32)   # (B, 1)
    o_ref[...] = jax.nn.sigmoid(logits)


# --------------------------- pallas_call wrappers ---------------------------

def _vmem_specs(n):
    return [pl.BlockSpec(memory_space=pltpu.MemorySpace.VMEM) for _ in range(n)]


def _pick_tile_m(M):
    for tm in (1024, 512, 256, 128):
        if M % tm == 0:
            return tm
    return M


def conv_lrelu(p, w):
    """Layer 1: gridded over M (rows = B*Ho*Wo), parallel axis."""
    M, K = p.shape
    N = w.shape[1]
    tm = _pick_tile_m(M)
    return pl.pallas_call(
        conv_lrelu_kernel,
        out_shape=jax.ShapeDtypeStruct((M, N), ACT_DTYPE),
        grid=(M // tm,),
        in_specs=[pl.BlockSpec((tm, K), lambda i: (i, 0)),
                  pl.BlockSpec((K, N), lambda i: (0, 0))],
        out_specs=pl.BlockSpec((tm, N), lambda i: (i, 0)),
        compiler_params=pltpu.CompilerParams(
            dimension_semantics=("parallel",),
            vmem_limit_bytes=_VMEM_LIMIT),
    )(p, w)


def conv_bn_lrelu(p, w, g, b):
    """Layers 2/3: whole arrays resident (batch stats need full M)."""
    M = p.shape[0]
    N = w.shape[1]
    return pl.pallas_call(
        conv_bn_lrelu_kernel,
        out_shape=jax.ShapeDtypeStruct((M, N), ACT_DTYPE),
        in_specs=_vmem_specs(4),
        out_specs=pl.BlockSpec(memory_space=pltpu.MemorySpace.VMEM),
        compiler_params=pltpu.CompilerParams(vmem_limit_bytes=_VMEM_LIMIT),
    )(p, w, g, b)


def conv_bn_lrelu_sigmoid_head(p, w, g, b, w5t, gmat):
    """Layer 4 + folded layer 5 + sigmoid."""
    B = gmat.shape[0]
    return pl.pallas_call(
        conv_bn_lrelu_sigmoid_head_kernel,
        out_shape=jax.ShapeDtypeStruct((B, 1), jnp.float32),
        in_specs=_vmem_specs(6),
        out_specs=pl.BlockSpec(memory_space=pltpu.MemorySpace.VMEM),
        compiler_params=pltpu.CompilerParams(vmem_limit_bytes=_VMEM_LIMIT),
    )(p, w, g, b, w5t, gmat)


# ------------------------------ JAX glue ------------------------------------

def im2col_nhwc(x, kh, kw, stride, pad):
    """x: (B, H, W, C) -> patches (B*Ho*Wo, kh*kw*C), column order (kh, kw, C)."""
    B, H, W, C = x.shape
    if pad:
        x = jnp.pad(x, ((0, 0), (pad, pad), (pad, pad), (0, 0)))
    Ho = (H + 2 * pad - kh) // stride + 1
    Wo = (W + 2 * pad - kw) // stride + 1
    cols = []
    for i in range(kh):
        for j in range(kw):
            cols.append(x[:, i:i + (Ho - 1) * stride + 1:stride,
                          j:j + (Wo - 1) * stride + 1:stride, :])   # (B,Ho,Wo,C)
    p = jnp.stack(cols, axis=3)                                     # (B,Ho,Wo,kh*kw,C)
    return p.reshape(B * Ho * Wo, kh * kw * C), Ho, Wo


def conv_w_to_mat(w):
    """PyTorch conv weight (Cout, Cin, KH, KW) -> (KH*KW*Cin, Cout) (kh,kw,cin order)."""
    Cout, Cin, KH, KW = w.shape
    return w.transpose(2, 3, 1, 0).reshape(KH * KW * Cin, Cout)


def init_params(key):
    """Parameters in PyTorch layout (OIHW conv weights, BN gamma=1 / beta=0)."""
    ks = jax.random.split(key, 5)

    def conv_w(k, cout, cin, kh=4, kw=4):
        return 0.02 * jax.random.normal(k, (cout, cin, kh, kw), jnp.float32)

    return {
        "w1": conv_w(ks[0], D_HIDDEN, IMAGE_CHANNEL),
        "w2": conv_w(ks[1], D_HIDDEN * 2, D_HIDDEN),
        "w3": conv_w(ks[2], D_HIDDEN * 4, D_HIDDEN * 2),
        "w4": conv_w(ks[3], D_HIDDEN * 8, D_HIDDEN * 4),
        "w5": conv_w(ks[4], 1, D_HIDDEN * 8),
        "g2": jnp.ones((1, D_HIDDEN * 2), jnp.float32),
        "b2": jnp.zeros((1, D_HIDDEN * 2), jnp.float32),
        "g3": jnp.ones((1, D_HIDDEN * 4), jnp.float32),
        "b3": jnp.zeros((1, D_HIDDEN * 4), jnp.float32),
        "g4": jnp.ones((1, D_HIDDEN * 8), jnp.float32),
        "b4": jnp.zeros((1, D_HIDDEN * 8), jnp.float32),
    }


def prepare_params(params):
    """Convert PyTorch-layout params into kernel-ready matrices (done once)."""
    kp = {
        "w1m": conv_w_to_mat(params["w1"]).astype(MATMUL_DTYPE),   # (16, 16)
        "w2m": conv_w_to_mat(params["w2"]).astype(MATMUL_DTYPE),   # (256, 32)
        "w3m": conv_w_to_mat(params["w3"]).astype(MATMUL_DTYPE),   # (512, 64)
        "w4m": conv_w_to_mat(params["w4"]).astype(MATMUL_DTYPE),   # (1024, 128)
        # Layer-5 weight as a per-output-pixel (16, 128) row block, NHWC order:
        # w5m[oh*4+ow, c] = w5[0, c, oh, ow]   (kept f32 for the f32 epilogue).
        "w5m": params["w5"].transpose(0, 2, 3, 1).reshape(16, D_HIDDEN * 8),
    }
    for k in ("g2", "b2", "g3", "b3", "g4", "b4"):
        kp[k] = params[k]
    return kp


def discriminator_forward(x, kp):
    """x: (B, IMAGE_CHANNEL, 64, 64) NCHW float32 -> (B,) probabilities."""
    B = x.shape[0]

    # NCHW -> NHWC once; never go back.
    x = jnp.transpose(x, (0, 2, 3, 1)).astype(MATMUL_DTYPE)        # (B, 64, 64, 1)

    # Layer 1: Conv(1 -> 16, k4 s2 p1) + LeakyReLU(0.2)
    p, Ho, Wo = im2col_nhwc(x, 4, 4, 2, 1)                         # (B*1024, 16)
    y = conv_lrelu(p, kp["w1m"])                                   # (B*1024, 16)
    x = y.reshape(B, Ho, Wo, -1)                                   # NHWC, no transpose

    # Layer 2: Conv(16 -> 32) + BN + LeakyReLU
    p, Ho, Wo = im2col_nhwc(x, 4, 4, 2, 1)                         # (B*256, 256)
    y = conv_bn_lrelu(p, kp["w2m"], kp["g2"], kp["b2"])            # (B*256, 32)
    x = y.reshape(B, Ho, Wo, -1)

    # Layer 3: Conv(32 -> 64) + BN + LeakyReLU
    p, Ho, Wo = im2col_nhwc(x, 4, 4, 2, 1)                         # (B*64, 512)
    y = conv_bn_lrelu(p, kp["w3m"], kp["g3"], kp["b3"])            # (B*64, 64)
    x = y.reshape(B, Ho, Wo, -1)

    # Layer 4 + 5: Conv(64 -> 128) + BN + LeakyReLU, then the 4x4 valid
    # Conv(128 -> 1) + Sigmoid folded into the same kernel.
    p, Ho, Wo = im2col_nhwc(x, 4, 4, 2, 1)                         # (B*16, 1024)
    w5t = jnp.tile(kp["w5m"], (B, 1))                              # (B*16, 128)
    gmat = jnp.kron(jnp.eye(B, dtype=jnp.float32),
                    jnp.ones((1, Ho * Wo), jnp.float32))           # (B, B*16)
    out = conv_bn_lrelu_sigmoid_head(p, kp["w4m"], kp["g4"], kp["b4"],
                                     w5t, gmat)                    # (B, 1)

    # .view(-1, 1).squeeze(1)
    return out.reshape(-1)


if __name__ == "__main__":
    key = jax.random.PRNGKey(0)
    k_param, k_x = jax.random.split(key)
    params = init_params(k_param)
    kparams = prepare_params(params)

    # The final 4x4 valid conv implies a 64x64 input.
    B = 2
    x = jax.random.normal(k_x, (B, IMAGE_CHANNEL, 64, 64), jnp.float32)

    fwd = jax.jit(discriminator_forward)
    out = fwd(x, kparams)
    jax.block_until_ready(out)

    assert out.shape == (B,), out.shape
    assert bool(jnp.all(jnp.isfinite(out))), "non-finite output"
    assert bool(jnp.all((out >= 0.0) & (out <= 1.0))), "sigmoid range violated"
    print("KERNEL_OK")
</pallas_src>

<mosaic_0001>
module attributes {stable_mosaic.version = 11 : i64} {
  func.func @conv_lrelu_kernel(%arg0: i32, %arg1: memref<1024x16xbf16, #tpu.memory_space<vmem>>, %arg2: memref<16x16xbf16, #tpu.memory_space<vmem>>, %arg3: memref<1024x16xbf16, #tpu.memory_space<vmem>>) attributes {dimension_semantics = [#tpu.dimension_semantics<parallel>], iteration_bounds = array<i64: 2>, scalar_prefetch = 0 : i64, scratch_operands = 0 : i64, tpu.core_type = #tpu.core_type<tc>, window_params = [{transform_indices = @transform_0, window_bounds = array<i64: 1024, 16>}, {pipeline_mode = #tpu.pipeline_mode<synchronous>, transform_indices = @transform_1, window_bounds = array<i64: 16, 16>}, {transform_indices = @transform_2, window_bounds = array<i64: 1024, 16>}]} {
    %c0 = arith.constant 0 : index
    %c0_0 = arith.constant 0 : index
    %0 = vector.load %arg1[%c0, %c0_0] : memref<1024x16xbf16, #tpu.memory_space<vmem>>, vector<1024x16xbf16>
    %c0_1 = arith.constant 0 : index
    %c0_2 = arith.constant 0 : index
    %1 = vector.load %arg2[%c0_1, %c0_2] : memref<16x16xbf16, #tpu.memory_space<vmem>>, vector<16x16xbf16>
    %cst = arith.constant dense<0.000000e+00> : vector<1024x16xf32>
    %2 = tpu.matmul %0, %1, %cst {dimension_numbers = #tpu.dot_dimension_numbers<[1], [0], [0], [1], [0, 0, 1, 1], [], []>} : vector<1024x16xbf16>, vector<16x16xbf16>, vector<1024x16xf32> -> vector<1024x16xf32>
    %cst_3 = arith.constant 0.000000e+00 : f32
    %3 = vector.broadcast %cst_3 : f32 to vector<1024x16xf32>
    %4 = arith.cmpf ogt, %2, %3 : vector<1024x16xf32>
    %cst_4 = arith.constant 2.000000e-01 : f32
    %5 = vector.broadcast %cst_4 : f32 to vector<1024x16xf32>
    %6 = arith.mulf %5, %2 : vector<1024x16xf32>
    %7 = arith.select %4, %2, %6 : vector<1024x16xi1>, vector<1024x16xf32>
    %8 = arith.truncf %7 : vector<1024x16xf32> to vector<1024x16xbf16>
    %c0_5 = arith.constant 0 : index
    %c0_6 = arith.constant 0 : index
    %9 = vector.load %arg3[%c0_5, %c0_6] : memref<1024x16xbf16, #tpu.memory_space<vmem>>, vector<1024x16xbf16>
    tpu.vector_store %arg3[%c0_5, %c0_6], %8 {strides = array<i32>} : memref<1024x16xbf16, #tpu.memory_space<vmem>>, vector<1024x16xbf16>,
    return
  }
  func.func @transform_0(%arg0: i32) -> (i32, i32) {
    %c0_i32 = arith.constant 0 : i32
    %c0_i32_0 = arith.constant 0 : i32
    return %arg0, %c0_i32 : i32, i32
  }
  func.func @transform_1(%arg0: i32) -> (i32, i32) {
    %c0_i32 = arith.constant 0 : i32
    %c0_i32_0 = arith.constant 0 : i32
    %c0_i32_1 = arith.constant 0 : i32
    return %c0_i32, %c0_i32_0 : i32, i32
  }
  func.func @transform_2(%arg0: i32) -> (i32, i32) {
    %c0_i32 = arith.constant 0 : i32
    %c0_i32_0 = arith.constant 0 : i32
    return %arg0, %c0_i32 : i32, i32
  }
}

module attributes {stable_mosaic.version = 11 : i64} {
  func.func @conv_bn_lrelu_kernel(%arg0: memref<512x256xbf16, #tpu.memory_space<vmem>>, %arg1: memref<256x32xbf16, #tpu.memory_space<vmem>>, %arg2: memref<1x32xf32, #tpu.memory_space<vmem>>, %arg3: memref<1x32xf32, #tpu.memory_space<vmem>>, %arg4: memref<512x32xbf16, #tpu.memory_space<vmem>>) attributes {dimension_semantics = [], scalar_prefetch = 0 : i64, scratch_operands = 0 : i64, tpu.core_type = #tpu.core_type<tc>} {
    %c0 = arith.constant 0 : index
    %c0_0 = arith.constant 0 : index
    %0 = vector.load %arg0[%c0, %c0_0] : memref<512x256xbf16, #tpu.memory_space<vmem>>, vector<512x256xbf16>
    %c0_1 = arith.constant 0 : index
    %c0_2 = arith.constant 0 : index
    %1 = vector.load %arg1[%c0_1, %c0_2] : memref<256x32xbf16, #tpu.memory_space<vmem>>, vector<256x32xbf16>
    %cst = arith.constant dense<0.000000e+00> : vector<512x32xf32>
    %2 = tpu.matmul %0, %1, %cst {dimension_numbers = #tpu.dot_dimension_numbers<[1], [0], [0], [1], [0, 0, 1, 1], [], []>} : vector<512x256xbf16>, vector<256x32xbf16>, vector<512x32xf32> -> vector<512x32xf32>
    %cst_3 = arith.constant dense<0.000000e+00> : vector<32xf32>
    %3 = vector.multi_reduction <add>, %2, %cst_3 [0] : vector<512x32xf32> to vector<32xf32>
    %4 = vector.shape_cast %3 : vector<32xf32> to vector<1x32xf32>
    %cst_4 = arith.constant 5.120000e+02 : f32
    %5 = vector.broadcast %cst_4 : f32 to vector<1x32xf32>
    %6 = arith.divf %4, %5 : vector<1x32xf32>
    %7 = arith.mulf %2, %2 : vector<512x32xf32>
    %cst_5 = arith.constant dense<0.000000e+00> : vector<32xf32>
    %8 = vector.multi_reduction <add>, %7, %cst_5 [0] : vector<512x32xf32> to vector<32xf32>
    %9 = vector.shape_cast %8 : vector<32xf32> to vector<1x32xf32>
    %cst_6 = arith.constant 5.120000e+02 : f32
    %10 = vector.broadcast %cst_6 : f32 to vector<1x32xf32>
    %11 = arith.divf %9, %10 : vector<1x32xf32>
    %12 = arith.mulf %6, %6 : vector<1x32xf32>
    %13 = arith.subf %11, %12 : vector<1x32xf32>
    %cst_7 = arith.constant 0.000000e+00 : f32
    %14 = vector.broadcast %cst_7 : f32 to vector<1x32xf32>
    %15 = arith.maximumf %13, %14 : vector<1x32xf32>
    %16 = vector.broadcast %6 : vector<1x32xf32> to vector<512x32xf32>
    %17 = arith.subf %2, %16 : vector<512x32xf32>
    %cst_8 = arith.constant 9.99999974E-6 : f32
    %18 = vector.broadcast %cst_8 : f32 to vector<1x32xf32>
    %19 = arith.addf %15, %18 : vector<1x32xf32>
    %20 = math.rsqrt %19 : vector<1x32xf32>
    %21 = vector.broadcast %20 : vector<1x32xf32> to vector<512x32xf32>
    %22 = arith.mulf %17, %21 : vector<512x32xf32>
    %c0_9 = arith.constant 0 : index
    %c0_10 = arith.constant 0 : index
    %23 = vector.load %arg2[%c0_9, %c0_10] : memref<1x32xf32, #tpu.memory_space<vmem>>, vector<1x32xf32>
    %24 = vector.broadcast %23 : vector<1x32xf32> to vector<512x32xf32>
    %25 = arith.mulf %22, %24 : vector<512x32xf32>
    %c0_11 = arith.constant 0 : index
    %c0_12 = arith.constant 0 : index
    %26 = vector.load %arg3[%c0_11, %c0_12] : memref<1x32xf32, #tpu.memory_space<vmem>>, vector<1x32xf32>
    %27 = vector.broadcast %26 : vector<1x32xf32> to vector<512x32xf32>
    %28 = arith.addf %25, %27 : vector<512x32xf32>
    %cst_13 = arith.constant 0.000000e+00 : f32
    %29 = vector.broadcast %cst_13 : f32 to vector<512x32xf32>
    %30 = arith.cmpf ogt, %28, %29 : vector<512x32xf32>
    %cst_14 = arith.constant 2.000000e-01 : f32
    %31 = vector.broadcast %cst_14 : f32 to vector<512x32xf32>
    %32 = arith.mulf %31, %28 : vector<512x32xf32>
    %33 = arith.select %30, %28, %32 : vector<512x32xi1>, vector<512x32xf32>
    %34 = arith.truncf %33 : vector<512x32xf32> to vector<512x32xbf16>
    %c0_15 = arith.constant 0 : index
    %c0_16 = arith.constant 0 : index
    %35 = vector.load %arg4[%c0_15, %c0_16] : memref<512x32xbf16, #tpu.memory_space<vmem>>, vector<512x32xbf16>
    tpu.vector_store %arg4[%c0_15, %c0_16], %34 {strides = array<i32>} : memref<512x32xbf16, #tpu.memory_space<vmem>>, vector<512x32xbf16>,
    return
  }
}

module attributes {stable_mosaic.version = 11 : i64} {
  func.func @conv_bn_lrelu_kernel(%arg0: memref<128x512xbf16, #tpu.memory_space<vmem>>, %arg1: memref<512x64xbf16, #tpu.memory_space<vmem>>, %arg2: memref<1x64xf32, #tpu.memory_space<vmem>>, %arg3: memref<1x64xf32, #tpu.memory_space<vmem>>, %arg4: memref<128x64xbf16, #tpu.memory_space<vmem>>) attributes {dimension_semantics = [], scalar_prefetch = 0 : i64, scratch_operands = 0 : i64, tpu.core_type = #tpu.core_type<tc>} {
    %c0 = arith.constant 0 : index
    %c0_0 = arith.constant 0 : index
    %0 = vector.load %arg0[%c0, %c0_0] : memref<128x512xbf16, #tpu.memory_space<vmem>>, vector<128x512xbf16>
    %c0_1 = arith.constant 0 : index
    %c0_2 = arith.constant 0 : index
    %1 = vector.load %arg1[%c0_1, %c0_2] : memref<512x64xbf16, #tpu.memory_space<vmem>>, vector<512x64xbf16>
    %cst = arith.constant dense<0.000000e+00> : vector<128x64xf32>
    %2 = tpu.matmul %0, %1, %cst {dimension_numbers = #tpu.dot_dimension_numbers<[1], [0], [0], [1], [0, 0, 1, 1], [], []>} : vector<128x512xbf16>, vector<512x64xbf16>, vector<128x64xf32> -> vector<128x64xf32>
    %cst_3 = arith.constant dense<0.000000e+00> : vector<64xf32>
    %3 = vector.multi_reduction <add>, %2, %cst_3 [0] : vector<128x64xf32> to vector<64xf32>
    %4 = vector.shape_cast %3 : vector<64xf32> to vector<1x64xf32>
    %cst_4 = arith.constant 1.280000e+02 : f32
    %5 = vector.broadcast %cst_4 : f32 to vector<1x64xf32>
    %6 = arith.divf %4, %5 : vector<1x64xf32>
    %7 = arith.mulf %2, %2 : vector<128x64xf32>
    %cst_5 = arith.constant dense<0.000000e+00> : vector<64xf32>
    %8 = vector.multi_reduction <add>, %7, %cst_5 [0] : vector<128x64xf32> to vector<64xf32>
    %9 = vector.shape_cast %8 : vector<64xf32> to vector<1x64xf32>
    %cst_6 = arith.constant 1.280000e+02 : f32
    %10 = vector.broadcast %cst_6 : f32 to vector<1x64xf32>
    %11 = arith.divf %9, %10 : vector<1x64xf32>
    %12 = arith.mulf %6, %6 : vector<1x64xf32>
    %13 = arith.subf %11, %12 : vector<1x64xf32>
    %cst_7 = arith.constant 0.000000e+00 : f32
    %14 = vector.broadcast %cst_7 : f32 to vector<1x64xf32>
    %15 = arith.maximumf %13, %14 : vector<1x64xf32>
    %16 = vector.broadcast %6 : vector<1x64xf32> to vector<128x64xf32>
    %17 = arith.subf %2, %16 : vector<128x64xf32>
    %cst_8 = arith.constant 9.99999974E-6 : f32
    %18 = vector.broadcast %cst_8 : f32 to vector<1x64xf32>
    %19 = arith.addf %15, %18 : vector<1x64xf32>
    %20 = math.rsqrt %19 : vector<1x64xf32>
    %21 = vector.broadcast %20 : vector<1x64xf32> to vector<128x64xf32>
    %22 = arith.mulf %17, %21 : vector<128x64xf32>
    %c0_9 = arith.constant 0 : index
    %c0_10 = arith.constant 0 : index
    %23 = vector.load %arg2[%c0_9, %c0_10] : memref<1x64xf32, #tpu.memory_space<vmem>>, vector<1x64xf32>
    %24 = vector.broadcast %23 : vector<1x64xf32> to vector<128x64xf32>
    %25 = arith.mulf %22, %24 : vector<128x64xf32>
    %c0_11 = arith.constant 0 : index
    %c0_12 = arith.constant 0 : index
    %26 = vector.load %arg3[%c0_11, %c0_12] : memref<1x64xf32, #tpu.memory_space<vmem>>, vector<1x64xf32>
    %27 = vector.broadcast %26 : vector<1x64xf32> to vector<128x64xf32>
    %28 = arith.addf %25, %27 : vector<128x64xf32>
    %cst_13 = arith.constant 0.000000e+00 : f32
    %29 = vector.broadcast %cst_13 : f32 to vector<128x64xf32>
    %30 = arith.cmpf ogt, %28, %29 : vector<128x64xf32>
    %cst_14 = arith.constant 2.000000e-01 : f32
    %31 = vector.broadcast %cst_14 : f32 to vector<128x64xf32>
    %32 = arith.mulf %31, %28 : vector<128x64xf32>
    %33 = arith.select %30, %28, %32 : vector<128x64xi1>, vector<128x64xf32>
    %34 = arith.truncf %33 : vector<128x64xf32> to vector<128x64xbf16>
    %c0_15 = arith.constant 0 : index
    %c0_16 = arith.constant 0 : index
    %35 = vector.load %arg4[%c0_15, %c0_16] : memref<128x64xbf16, #tpu.memory_space<vmem>>, vector<128x64xbf16>
    tpu.vector_store %arg4[%c0_15, %c0_16], %34 {strides = array<i32>} : memref<128x64xbf16, #tpu.memory_space<vmem>>, vector<128x64xbf16>,
    return
  }
}

module attributes {stable_mosaic.version = 11 : i64} {
  func.func @conv_bn_lrelu_sigmoid_head_kernel(%arg0: memref<32x1024xbf16, #tpu.memory_space<vmem>>, %arg1: memref<1024x128xbf16, #tpu.memory_space<vmem>>, %arg2: memref<1x128xf32, #tpu.memory_space<vmem>>, %arg3: memref<1x128xf32, #tpu.memory_space<vmem>>, %arg4: memref<32x128xf32, #tpu.memory_space<vmem>>, %arg5: memref<2x32xf32, #tpu.memory_space<vmem>>, %arg6: memref<2x1xf32, #tpu.memory_space<vmem>>) attributes {dimension_semantics = [], scalar_prefetch = 0 : i64, scratch_operands = 0 : i64, tpu.core_type = #tpu.core_type<tc>} {
    %c0 = arith.constant 0 : index
    %c0_0 = arith.constant 0 : index
    %0 = vector.load %arg0[%c0, %c0_0] : memref<32x1024xbf16, #tpu.memory_space<vmem>>, vector<32x1024xbf16>
    %c0_1 = arith.constant 0 : index
    %c0_2 = arith.constant 0 : index
    %1 = vector.load %arg1[%c0_1, %c0_2] : memref<1024x128xbf16, #tpu.memory_space<vmem>>, vector<1024x128xbf16>
    %cst = arith.constant dense<0.000000e+00> : vector<32x128xf32>
    %2 = tpu.matmul %0, %1, %cst {dimension_numbers = #tpu.dot_dimension_numbers<[1], [0], [0], [1], [0, 0, 1, 1], [], []>} : vector<32x1024xbf16>, vector<1024x128xbf16>, vector<32x128xf32> -> vector<32x128xf32>
    %cst_3 = arith.constant dense<0.000000e+00> : vector<128xf32>
    %3 = vector.multi_reduction <add>, %2, %cst_3 [0] : vector<32x128xf32> to vector<128xf32>
    %4 = vector.shape_cast %3 : vector<128xf32> to vector<1x128xf32>
    %cst_4 = arith.constant 3.200000e+01 : f32
    %5 = vector.broadcast %cst_4 : f32 to vector<1x128xf32>
    %6 = arith.divf %4, %5 : vector<1x128xf32>
    %7 = arith.mulf %2, %2 : vector<32x128xf32>
    %cst_5 = arith.constant dense<0.000000e+00> : vector<128xf32>
    %8 = vector.multi_reduction <add>, %7, %cst_5 [0] : vector<32x128xf32> to vector<128xf32>
    %9 = vector.shape_cast %8 : vector<128xf32> to vector<1x128xf32>
    %cst_6 = arith.constant 3.200000e+01 : f32
    %10 = vector.broadcast %cst_6 : f32 to vector<1x128xf32>
    %11 = arith.divf %9, %10 : vector<1x128xf32>
    %12 = arith.mulf %6, %6 : vector<1x128xf32>
    %13 = arith.subf %11, %12 : vector<1x128xf32>
    %cst_7 = arith.constant 0.000000e+00 : f32
    %14 = vector.broadcast %cst_7 : f32 to vector<1x128xf32>
    %15 = arith.maximumf %13, %14 : vector<1x128xf32>
    %16 = vector.broadcast %6 : vector<1x128xf32> to vector<32x128xf32>
    %17 = arith.subf %2, %16 : vector<32x128xf32>
    %cst_8 = arith.constant 9.99999974E-6 : f32
    %18 = vector.broadcast %cst_8 : f32 to vector<1x128xf32>
    %19 = arith.addf %15, %18 : vector<1x128xf32>
    %20 = math.rsqrt %19 : vector<1x128xf32>
    %21 = vector.broadcast %20 : vector<1x128xf32> to vector<32x128xf32>
    %22 = arith.mulf %17, %21 : vector<32x128xf32>
    %c0_9 = arith.constant 0 : index
    %c0_10 = arith.constant 0 : index
    %23 = vector.load %arg2[%c0_9, %c0_10] : memref<1x128xf32, #tpu.memory_space<vmem>>, vector<1x128xf32>
    %24 = vector.broadcast %23 : vector<1x128xf32> to vector<32x128xf32>
    %25 = arith.mulf %22, %24 : vector<32x128xf32>
    %c0_11 = arith.constant 0 : index
    %c0_12 = arith.constant 0 : index
    %26 = vector.load %arg3[%c0_11, %c0_12] : memref<1x128xf32, #tpu.memory_space<vmem>>, vector<1x128xf32>
    %27 = vector.broadcast %26 : vector<1x128xf32> to vector<32x128xf32>
    %28 = arith.addf %25, %27 : vector<32x128xf32>
    %cst_13 = arith.constant 0.000000e+00 : f32
    %29 = vector.broadcast %cst_13 : f32 to vector<32x128xf32>
    %30 = arith.cmpf ogt, %28, %29 : vector<32x128xf32>
    %cst_14 = arith.constant 2.000000e-01 : f32
    %31 = vector.broadcast %cst_14 : f32 to vector<32x128xf32>
    %32 = arith.mulf %31, %28 : vector<32x128xf32>
    %33 = arith.select %30, %28, %32 : vector<32x128xi1>, vector<32x128xf32>
    %c0_15 = arith.constant 0 : index
    %c0_16 = arith.constant 0 : index
    %34 = vector.load %arg4[%c0_15, %c0_16] : memref<32x128xf32, #tpu.memory_space<vmem>>, vector<32x128xf32>
    %35 = arith.mulf %33, %34 : vector<32x128xf32>
    %cst_17 = arith.constant dense<0.000000e+00> : vector<32xf32>
    %36 = vector.multi_reduction <add>, %35, %cst_17 [1] : vector<32x128xf32> to vector<32xf32>
    %37 = vector.shape_cast %36 : vector<32xf32> to vector<32x1xf32>
    %c0_18 = arith.constant 0 : index
    %c0_19 = arith.constant 0 : index
    %38 = vector.load %arg5[%c0_18, %c0_19] : memref<2x32xf32, #tpu.memory_space<vmem>>, vector<2x32xf32>
    %cst_20 = arith.constant dense<0.000000e+00> : vector<2x1xf32>
    %39 = tpu.matmul %38, %37, %cst_20 {dimension_numbers = #tpu.dot_dimension_numbers<[1], [0], [0], [1], [0, 0, 1, 1], [], []>} : vector<2x32xf32>, vector<32x1xf32>, vector<2x1xf32> -> vector<2x1xf32>
    %40 = arith.negf %39 : vector<2x1xf32>
    %41 = math.exp %40 : vector<2x1xf32>
    %cst_21 = arith.constant 1.000000e+00 : f32
    %42 = vector.broadcast %cst_21 : f32 to vector<2x1xf32>
    %43 = arith.addf %42, %41 : vector<2x1xf32>
    %44 = arith.divf %42, %43 : vector<2x1xf32>
    %c0_22 = arith.constant 0 : index
    %c0_23 = arith.constant 0 : index
    %45 = vector.load %arg6[%c0_22, %c0_23] : memref<2x1xf32, #tpu.memory_space<vmem>>, vector<2x1xf32>
    tpu.vector_store %arg6[%c0_22, %c0_23], %44 {strides = array<i32>} : memref<2x1xf32, #tpu.memory_space<vmem>>, vector<2x1xf32>,
    return
  }
}

</mosaic_0001>

<llo_original>
// kernel: discriminator_forward.4
$region0: #{discriminator_forward.4}
  #allocation0 [shape = 'u32[]', space=smem, size = 0x4, offset = 0x4, fixed_abs, tag = 'smem constant byte address 0x4 - core index']
  #allocation1 [shape = 'u32[144,128]{1,0:T(1,128)}', space=vmem, size = 0x12000, scoped, tag = 'internal scratch']
  %s0 = inlined_call_operand.vmem [shape: bf16[2048,16], index: 0, kind: input, shape index: {}]
  %s1 = inlined_call_operand.hbm [shape: bf16[16,16], index: 1, kind: input, shape index: {}]
  %s2 = inlined_call_operand.vmem [shape: bf16[2048,16], index: 2, kind: output, shape index: {}]
  %s3 = sld [smem:[#allocation0]]
  $region45: #{discriminator_forward.4} parent=0
    _
  %s5 = ssub.s32 1, %s3
  %s6 = scalar_select 0, %s5, %s3
  $region1: #{discriminator_forward.4} parent=0
    #allocation2 [shape = 'u8[4096]{0}', space=vmem, size = 0x1000, scoped, tag = 'input window, operand 1, single buffered']
    #allocation3 [shape = 's32[2]{0}', space=sflag, size = 0x8, scoped, tag = 'scoped memory for discriminator_forward.4']
    %7 = vsyncpa [#allocation3], 0
    loop: start=0, step=1, limit=4
    $region2: #{discriminator_forward.4} parent=1 // loop_pre_header
      _
    $region3: #{discriminator_forward.4} parent=1 // loop_header
      %s9 = sphi 0, %s13
      %p10 = scmp.ge.s32.totalorder %s9, 4
      %s19 = sphi 0, %s21
      %s22 = sphi 0, %s19
      %s23 = sphi 0, %s22
      %s39 = sphi 0, %s23
      %s43 = sphi 0, %s43
      %s45 = sphi 0, %s43
      %s46 = sphi 0, %s45
      %s60 = sphi 0, %s46
      %s66 = sphi 0, %s68
      %s69 = sphi 0, %s66
      %s70 = sphi 0, %s69
      %s86 = sphi 0, %s70
    $region4: #{discriminator_forward.4} parent=1 // loop_header_branch
      %12 = sbr.rel (%p10) target = $region8
    $region5: #{discriminator_forward.4} parent=1 // loop_body
      %s14 = ssub.s32 %s9, 1
      %s15 = ssub.s32 %s9, 2
      %s16 = sadd.s32 %s9, 1
      %s17 = ssub.s32 %s9, %s16
      %p18 = scmp.eq.s32.totalorder %s17, 0
      %s20 = sadd.s32 %s19, 1
      %s21 = scalar_select %p18, %s19, %s20
      %p24 = pneg %p18
      %p25 = scmp.eq.s32.totalorder %s9, 1
      %p26 = por %p24, %p25
      %p27 = scmp.ne.s32.totalorder %s19, %s22
      %p28 = scmp.eq.s32.totalorder %s9, 0
      %p29 = por %p27, %p28
      %p30 = scmp.ne.s32.totalorder %s19, %s22
      %p31 = scmp.eq.s32.totalorder %s14, 1
      %p32 = por %p30, %p31
      %p33 = scmp.ne.s32.totalorder %s22, %s23
      %p34 = scmp.eq.s32.totalorder %s14, 0
      %p35 = por %p33, %p34
      %p36 = scmp.ne.s32.totalorder %s22, %s23
      %p37 = scmp.eq.s32.totalorder %s15, 1
      %p38 = por %p36, %p37
      %p40 = scmp.ne.s32.totalorder %s23, %s39
      %p41 = scmp.eq.s32.totalorder %s15, 0
      %p42 = por %p40, %p41
      %s44 = sadd.s32 %s43, 1
      %p47 = scmp.eq.s32.totalorder %s9, 1
      %p48 = scmp.ne.s32.totalorder %s43, %s45
      %p49 = scmp.eq.s32.totalorder %s9, 0
      %p50 = por %p48, %p49
      %p51 = scmp.ne.s32.totalorder %s43, %s45
      %p52 = scmp.eq.s32.totalorder %s14, 1
      %p53 = por %p51, %p52
      %p54 = scmp.ne.s32.totalorder %s45, %s46
      %p55 = scmp.eq.s32.totalorder %s14, 0
      %p56 = por %p54, %p55
      %p57 = scmp.ne.s32.totalorder %s45, %s46
      %p58 = scmp.eq.s32.totalorder %s15, 1
      %p59 = por %p57, %p58
      %p61 = scmp.ne.s32.totalorder %s46, %s60
      %p62 = scmp.eq.s32.totalorder %s15, 0
      %p63 = por %p61, %p62
      %s64 = ssub.s32 %s9, %s16
      %p65 = scmp.eq.s32.totalorder %s64, 0
      %s67 = sadd.s32 %s66, 1
      %s68 = scalar_select %p65, %s66, %s67
      %p71 = pneg %p65
      %p72 = scmp.eq.s32.totalorder %s9, 1
      %p73 = por %p71, %p72
      %p74 = scmp.ne.s32.totalorder %s66, %s69
      %p75 = scmp.eq.s32.totalorder %s9, 0
      %p76 = por %p74, %p75
      %p77 = scmp.ne.s32.totalorder %s66, %s69
      %p78 = scmp.eq.s32.totalorder %s14, 1
      %p79 = por %p77, %p78
      %p80 = scmp.ne.s32.totalorder %s69, %s70
      %p81 = scmp.eq.s32.totalorder %s14, 0
      %p82 = por %p80, %p81
      %p83 = scmp.ne.s32.totalorder %s69, %s70
      %p84 = scmp.eq.s32.totalorder %s15, 1
      %p85 = por %p83, %p84
      %p87 = scmp.ne.s32.totalorder %s70, %s86
      %p88 = scmp.eq.s32.totalorder %s15, 0
      %p89 = por %p87, %p88
      %p90 = scmp.le.s32.totalorder 1, %s9
      %p91 = scmp.lt.s32.totalorder %s9, 3
      %p92 = pnand %p90, %p91
      %p93 = pneg %p92
      // Predicated region
      $region9: #{discriminator_forward.4} parent=5 // pred_check
        _
      $region10: #{discriminator_forward.4} parent=5 // pred_check_branch
        %95 = sbr.rel (%p92) target = $region12
      $region11: #{discriminator_forward.4} parent=5 // pred_region
        %s96 = ssub.s32 %s9, 1
        // Predicated region
        $region13: #{discriminator_forward.4} parent=11 // pred_check
          %p97 = pneg %p56
        $region14: #{discriminator_forward.4} parent=11 // pred_check_branch
          %99 = sbr.rel (%p97) target = $region16
        $region15: #{discriminator_forward.4} parent=11 // pred_region
          %s101 = ssub.s32 128, 128
          %102 = vsyncadd [#allocation3], %s101
          %s103 = sshll.u32 [#allocation2], 4
          %s104 = int_to_ptr.vmem [resolvable:$true] %s103
          %109 = dma.hbm_to_vmem [thread:$0]  %s1, 128, %s104, [#allocation3], 64, 64, 4
        $region16: #{discriminator_forward.4} parent=11 // pred_fallthru
          _
      $region12: #{discriminator_forward.4} parent=5 // pred_fallthru
        _
      %p110 = scmp.lt.s32.totalorder %s9, 2
      // Predicated region
      $region17: #{discriminator_forward.4} parent=5 // pred_check
        %p111 = pneg %p110
      $region18: #{discriminator_forward.4} parent=5 // pred_check_branch
        %113 = sbr.rel (%p111) target = $region20
      $region19: #{discriminator_forward.4} parent=5 // pred_region
        // Predicated region
        $region21: #{discriminator_forward.4} parent=19 // pred_check
          %p114 = pneg %p29
        $region22: #{discriminator_forward.4} parent=19 // pred_check_branch
          %116 = sbr.rel (%p114) target = $region24
        $region23: #{discriminator_forward.4} parent=19 // pred_region
          %s117 = smul.u32 128, %s9
          %p118 = scmp.lt.s32.totalorder %s117, 255
          %s119 = scalar_select %p118, %s117, 255
          %s120 = smul.addr %s119, 4
          %s121 = scalar_lea.vmem %s0, %s120
          %s122 = smul.u32 128, %s9
        $region24: #{discriminator_forward.4} parent=19 // pred_fallthru
          _
      $region20: #{discriminator_forward.4} parent=5 // pred_fallthru
        _
      %p123 = scmp.le.s32.totalorder 1, %s9
      %p124 = scmp.lt.s32.totalorder %s9, 3
      %p125 = pnand %p123, %p124
      %p126 = pneg %p125
      // Predicated region
      $region25: #{discriminator_forward.4} parent=5 // pred_check
        _
      $region26: #{discriminator_forward.4} parent=5 // pred_check_branch
        %128 = sbr.rel (%p125) target = $region28
      $region27: #{discriminator_forward.4} parent=5 // pred_region
        %s129 = ssub.s32 %s9, 1
        // Predicated region
        $region29: #{discriminator_forward.4} parent=27 // pred_check
          %p130 = pneg %p56
        $region30: #{discriminator_forward.4} parent=27 // pred_check_branch
          %132 = sbr.rel (%p130) target = $region32
        $region31: #{discriminator_forward.4} parent=27 // pred_region
          %133 = dma.done [#allocation3], 128
        $region32: #{discriminator_forward.4} parent=27 // pred_fallthru
          _
        %s134 = smul.u32 128, %s14
        %p135 = scmp.lt.s32.totalorder %s134, 255
        %s136 = scalar_select %p135, %s134, 255
        %s137 = smul.addr %s136, 4
        %s138 = scalar_lea.vmem %s0, %s137
        %p139 = pneg %p35
        %p140 = pneg %p32
        %p141 = pneg %p56
        %p142 = pneg %p53
        %p143 = pneg %p82
        %p144 = pneg %p79
        %s145 = smul.u32 128, %s14
        %p146 = scmp.lt.s32.totalorder %s145, 255
        %s147 = scalar_select %p146, %s145, 255
        %s148 = smul.addr %s147, 4
        %s149 = scalar_lea.vmem %s2, %s148
        %s150 = smul.u32 128, %s14
        %p151 = scmp.lt.s32.totalorder %s150, 255
        %s152 = scalar_select %p151, %s150, 255
        %s153 = smul.addr %s152, 4
        %s154 = scalar_lea.vmem %s0, %s153
        %s155 = smul.u32 128, %s14
        %s156 = smul.u32 128, %s14
        %p157 = scmp.lt.s32.totalorder %s156, 255
        %s158 = scalar_select %p157, %s156, 255
        %s159 = smul.addr %s158, 4
        %s160 = scalar_lea.vmem %s2, %s159
        %s161 = smul.u32 128, %s14
        %v163 = vld [vmem:[%s154] sm:$0xf]
        %v164 = vld [vmem:[%s154 + $0x4] sm:$0xf]
        %v165 = vld [vmem:[%s154 + $0x8] sm:$0xf]
        %v166 = vld [vmem:[%s154 + $0xc] sm:$0xf]
        %v167 = vld [vmem:[%s154 + $0x10] sm:$0xf]
        %v168 = vld [vmem:[%s154 + $0x14] sm:$0xf]
        %v169 = vld [vmem:[%s154 + $0x18] sm:$0xf]
        %v170 = vld [vmem:[%s154 + $0x1c] sm:$0xf]
        %v171 = vld [vmem:[%s154 + $0x20] sm:$0xf]
        %v172 = vld [vmem:[%s154 + $0x24] sm:$0xf]
        %v173 = vld [vmem:[%s154 + $0x28] sm:$0xf]
        %v174 = vld [vmem:[%s154 + $0x2c] sm:$0xf]
        %v175 = vld [vmem:[%s154 + $0x30] sm:$0xf]
        %v176 = vld [vmem:[%s154 + $0x34] sm:$0xf]
        %v177 = vld [vmem:[%s154 + $0x38] sm:$0xf]
        %v178 = vld [vmem:[%s154 + $0x3c] sm:$0xf]
        %v179 = vld [vmem:[%s154 + $0x40] sm:$0xf]
        %v180 = vld [vmem:[%s154 + $0x44] sm:$0xf]
        %v181 = vld [vmem:[%s154 + $0x48] sm:$0xf]
        %v182 = vld [vmem:[%s154 + $0x4c] sm:$0xf]
        %v183 = vld [vmem:[%s154 + $0x50] sm:$0xf]
        %v184 = vld [vmem:[%s154 + $0x54] sm:$0xf]
        %v185 = vld [vmem:[%s154 + $0x58] sm:$0xf]
        %v186 = vld [vmem:[%s154 + $0x5c] sm:$0xf]
        %v187 = vld [vmem:[%s154 + $0x60] sm:$0xf]
        %v188 = vld [vmem:[%s154 + $0x64] sm:$0xf]
        %v189 = vld [vmem:[%s154 + $0x68] sm:$0xf]
        %v190 = vld [vmem:[%s154 + $0x6c] sm:$0xf]
        %v191 = vld [vmem:[%s154 + $0x70] sm:$0xf]
        %v192 = vld [vmem:[%s154 + $0x74] sm:$0xf]
        %v193 = vld [vmem:[%s154 + $0x78] sm:$0xf]
        %v194 = vld [vmem:[%s154 + $0x7c] sm:$0xf]
        %v195 = vld [vmem:[%s154 + $0x80] sm:$0xf]
        %v196 = vld [vmem:[%s154 + $0x84] sm:$0xf]
        %v197 = vld [vmem:[%s154 + $0x88] sm:$0xf]
        %v198 = vld [vmem:[%s154 + $0x8c] sm:$0xf]
        %v199 = vld [vmem:[%s154 + $0x90] sm:$0xf]
        %v200 = vld [vmem:[%s154 + $0x94] sm:$0xf]
        %v201 = vld [vmem:[%s154 + $0x98] sm:$0xf]
        %v202 = vld [vmem:[%s154 + $0x9c] sm:$0xf]
        %v203 = vld [vmem:[%s154 + $0xa0] sm:$0xf]
        %v204 = vld [vmem:[%s154 + $0xa4] sm:$0xf]
        %v205 = vld [vmem:[%s154 + $0xa8] sm:$0xf]
        %v206 = vld [vmem:[%s154 + $0xac] sm:$0xf]
        %v207 = vld [vmem:[%s154 + $0xb0] sm:$0xf]
        %v208 = vld [vmem:[%s154 + $0xb4] sm:$0xf]
        %v209 = vld [vmem:[%s154 + $0xb8] sm:$0xf]
        %v210 = vld [vmem:[%s154 + $0xbc] sm:$0xf]
        %v211 = vld [vmem:[%s154 + $0xc0] sm:$0xf]
        %v212 = vld [vmem:[%s154 + $0xc4] sm:$0xf]
        %v213 = vld [vmem:[%s154 + $0xc8] sm:$0xf]
        %v214 = vld [vmem:[%s154 + $0xcc] sm:$0xf]
        %v215 = vld [vmem:[%s154 + $0xd0] sm:$0xf]
        %v216 = vld [vmem:[%s154 + $0xd4] sm:$0xf]
        %v217 = vld [vmem:[%s154 + $0xd8] sm:$0xf]
        %v218 = vld [vmem:[%s154 + $0xdc] sm:$0xf]
        %v219 = vld [vmem:[%s154 + $0xe0] sm:$0xf]
        %v220 = vld [vmem:[%s154 + $0xe4] sm:$0xf]
        %v221 = vld [vmem:[%s154 + $0xe8] sm:$0xf]
        %v222 = vld [vmem:[%s154 + $0xec] sm:$0xf]
        %v223 = vld [vmem:[%s154 + $0xf0] sm:$0xf]
        %v224 = vld [vmem:[%s154 + $0xf4] sm:$0xf]
        %v225 = vld [vmem:[%s154 + $0xf8] sm:$0xf]
        %v226 = vld [vmem:[%s154 + $0xfc] sm:$0xf]
        %v227 = vld [vmem:[%s154 + $0x100] sm:$0xf]
        %v228 = vld [vmem:[%s154 + $0x104] sm:$0xf]
        %v229 = vld [vmem:[%s154 + $0x108] sm:$0xf]
        %v230 = vld [vmem:[%s154 + $0x10c] sm:$0xf]
        %v231 = vld [vmem:[%s154 + $0x110] sm:$0xf]
        %v232 = vld [vmem:[%s154 + $0x114] sm:$0xf]
        %v233 = vld [vmem:[%s154 + $0x118] sm:$0xf]
        %v234 = vld [vmem:[%s154 + $0x11c] sm:$0xf]
        %v235 = vld [vmem:[%s154 + $0x120] sm:$0xf]
        %v236 = vld [vmem:[%s154 + $0x124] sm:$0xf]
        %v237 = vld [vmem:[%s154 + $0x128] sm:$0xf]
        %v238 = vld [vmem:[%s154 + $0x12c] sm:$0xf]
        %v239 = vld [vmem:[%s154 + $0x130] sm:$0xf]
        %v240 = vld [vmem:[%s154 + $0x134] sm:$0xf]
        %v241 = vld [vmem:[%s154 + $0x138] sm:$0xf]
        %v242 = vld [vmem:[%s154 + $0x13c] sm:$0xf]
        %v243 = vld [vmem:[%s154 + $0x140] sm:$0xf]
        %v244 = vld [vmem:[%s154 + $0x144] sm:$0xf]
        %v245 = vld [vmem:[%s154 + $0x148] sm:$0xf]
        %v246 = vld [vmem:[%s154 + $0x14c] sm:$0xf]
        %v247 = vld [vmem:[%s154 + $0x150] sm:$0xf]
        %v248 = vld [vmem:[%s154 + $0x154] sm:$0xf]
        %v249 = vld [vmem:[%s154 + $0x158] sm:$0xf]
        %v250 = vld [vmem:[%s154 + $0x15c] sm:$0xf]
        %v251 = vld [vmem:[%s154 + $0x160] sm:$0xf]
        %v252 = vld [vmem:[%s154 + $0x164] sm:$0xf]
        %v253 = vld [vmem:[%s154 + $0x168] sm:$0xf]
        %v254 = vld [vmem:[%s154 + $0x16c] sm:$0xf]
        %v255 = vld [vmem:[%s154 + $0x170] sm:$0xf]
        %v256 = vld [vmem:[%s154 + $0x174] sm:$0xf]
        %v257 = vld [vmem:[%s154 + $0x178] sm:$0xf]
        %v258 = vld [vmem:[%s154 + $0x17c] sm:$0xf]
        %v259 = vld [vmem:[%s154 + $0x180] sm:$0xf]
        %v260 = vld [vmem:[%s154 + $0x184] sm:$0xf]
        %v261 = vld [vmem:[%s154 + $0x188] sm:$0xf]
        %v262 = vld [vmem:[%s154 + $0x18c] sm:$0xf]
        %v263 = vld [vmem:[%s154 + $0x190] sm:$0xf]
        %v264 = vld [vmem:[%s154 + $0x194] sm:$0xf]
        %v265 = vld [vmem:[%s154 + $0x198] sm:$0xf]
        %v266 = vld [vmem:[%s154 + $0x19c] sm:$0xf]
        %v267 = vld [vmem:[%s154 + $0x1a0] sm:$0xf]
        %v268 = vld [vmem:[%s154 + $0x1a4] sm:$0xf]
        %v269 = vld [vmem:[%s154 + $0x1a8] sm:$0xf]
        %v270 = vld [vmem:[%s154 + $0x1ac] sm:$0xf]
        %v271 = vld [vmem:[%s154 + $0x1b0] sm:$0xf]
        %v272 = vld [vmem:[%s154 + $0x1b4] sm:$0xf]
        %v273 = vld [vmem:[%s154 + $0x1b8] sm:$0xf]
        %v274 = vld [vmem:[%s154 + $0x1bc] sm:$0xf]
        %v275 = vld [vmem:[%s154 + $0x1c0] sm:$0xf]
        %v276 = vld [vmem:[%s154 + $0x1c4] sm:$0xf]
        %v277 = vld [vmem:[%s154 + $0x1c8] sm:$0xf]
        %v278 = vld [vmem:[%s154 + $0x1cc] sm:$0xf]
        %v279 = vld [vmem:[%s154 + $0x1d0] sm:$0xf]
        %v280 = vld [vmem:[%s154 + $0x1d4] sm:$0xf]
        %v281 = vld [vmem:[%s154 + $0x1d8] sm:$0xf]
        %v282 = vld [vmem:[%s154 + $0x1dc] sm:$0xf]
        %v283 = vld [vmem:[%s154 + $0x1e0] sm:$0xf]
        %v284 = vld [vmem:[%s154 + $0x1e4] sm:$0xf]
        %v285 = vld [vmem:[%s154 + $0x1e8] sm:$0xf]
        %v286 = vld [vmem:[%s154 + $0x1ec] sm:$0xf]
        %v287 = vld [vmem:[%s154 + $0x1f0] sm:$0xf]
        %v288 = vld [vmem:[%s154 + $0x1f4] sm:$0xf]
        %v289 = vld [vmem:[%s154 + $0x1f8] sm:$0xf]
        %v290 = vld [vmem:[%s154 + $0x1fc] sm:$0xf]
        %v291 = vld [vmem:[#allocation2] sm:$0xf]
        %v292 = vld [vmem:[#allocation2 + $0x4] sm:$0xf]
        %v421 = vunpack.c.l.b16 %v163
        %v422 = vunpack.c.l.b16 %v164
        %v423 = vunpack.c.l.b16 %v165
        %v424 = vunpack.c.l.b16 %v166
        %v425 = vunpack.c.l.b16 %v167
        %v426 = vunpack.c.l.b16 %v168
        %v427 = vunpack.c.l.b16 %v169
        %v428 = vunpack.c.l.b16 %v170
        %v429 = vunpack.c.l.b16 %v171
        %v430 = vunpack.c.l.b16 %v172
        %v431 = vunpack.c.l.b16 %v173
        %v432 = vunpack.c.l.b16 %v174
        %v433 = vunpack.c.l.b16 %v175
        %v434 = vunpack.c.l.b16 %v176
        %v435 = vunpack.c.l.b16 %v177
        %v436 = vunpack.c.l.b16 %v178
        %v437 = vunpack.c.l.b16 %v179
        %v438 = vunpack.c.l.b16 %v180
        %v439 = vunpack.c.l.b16 %v181
        %v440 = vunpack.c.l.b16 %v182
        %v441 = vunpack.c.l.b16 %v183
        %v442 = vunpack.c.l.b16 %v184
        %v443 = vunpack.c.l.b16 %v185
        %v444 = vunpack.c.l.b16 %v186
        %v445 = vunpack.c.l.b16 %v187
        %v446 = vunpack.c.l.b16 %v188
        %v447 = vunpack.c.l.b16 %v189
        %v448 = vunpack.c.l.b16 %v190
        %v449 = vunpack.c.l.b16 %v191
        %v450 = vunpack.c.l.b16 %v192
        %v451 = vunpack.c.l.b16 %v193
        %v452 = vunpack.c.l.b16 %v194
        %v453 = vunpack.c.l.b16 %v195
        %v454 = vunpack.c.l.b16 %v196
        %v455 = vunpack.c.l.b16 %v197
        %v456 = vunpack.c.l.b16 %v198
        %v457 = vunpack.c.l.b16 %v199
        %v458 = vunpack.c.l.b16 %v200
        %v459 = vunpack.c.l.b16 %v201
        %v460 = vunpack.c.l.b16 %v202
        %v461 = vunpack.c.l.b16 %v203
        %v462 = vunpack.c.l.b16 %v204
        %v463 = vunpack.c.l.b16 %v205
        %v464 = vunpack.c.l.b16 %v206
        %v465 = vunpack.c.l.b16 %v207
        %v466 = vunpack.c.l.b16 %v208
        %v467 = vunpack.c.l.b16 %v209
        %v468 = vunpack.c.l.b16 %v210
        %v469 = vunpack.c.l.b16 %v211
        %v470 = vunpack.c.l.b16 %v212
        %v471 = vunpack.c.l.b16 %v213
        %v472 = vunpack.c.l.b16 %v214
        %v473 = vunpack.c.l.b16 %v215
        %v474 = vunpack.c.l.b16 %v216
        %v475 = vunpack.c.l.b16 %v217
        %v476 = vunpack.c.l.b16 %v218
        %v477 = vunpack.c.l.b16 %v219
        %v478 = vunpack.c.l.b16 %v220
        %v479 = vunpack.c.l.b16 %v221
        %v480 = vunpack.c.l.b16 %v222
        %v481 = vunpack.c.l.b16 %v223
        %v482 = vunpack.c.l.b16 %v224
        %v483 = vunpack.c.l.b16 %v225
        %v484 = vunpack.c.l.b16 %v226
        %v485 = vunpack.c.l.b16 %v227
        %v486 = vunpack.c.l.b16 %v228
        %v487 = vunpack.c.l.b16 %v229
        %v488 = vunpack.c.l.b16 %v230
        %v489 = vunpack.c.l.b16 %v231
        %v490 = vunpack.c.l.b16 %v232
        %v491 = vunpack.c.l.b16 %v233
        %v492 = vunpack.c.l.b16 %v234
        %v493 = vunpack.c.l.b16 %v235
        %v494 = vunpack.c.l.b16 %v236
        %v495 = vunpack.c.l.b16 %v237
        %v496 = vunpack.c.l.b16 %v238
        %v497 = vunpack.c.l.b16 %v239
        %v498 = vunpack.c.l.b16 %v240
        %v499 = vunpack.c.l.b16 %v241
        %v500 = vunpack.c.l.b16 %v242
        %v501 = vunpack.c.l.b16 %v243
        %v502 = vunpack.c.l.b16 %v244
        %v503 = vunpack.c.l.b16 %v245
        %v504 = vunpack.c.l.b16 %v246
        %v505 = vunpack.c.l.b16 %v247
        %v506 = vunpack.c.l.b16 %v248
        %v507 = vunpack.c.l.b16 %v249
        %v508 = vunpack.c.l.b16 %v250
        %v509 = vunpack.c.l.b16 %v251
        %v510 = vunpack.c.l.b16 %v252
        %v511 = vunpack.c.l.b16 %v253
        %v512 = vunpack.c.l.b16 %v254
        %v513 = vunpack.c.l.b16 %v255
        %v514 = vunpack.c.l.b16 %v256
        %v515 = vunpack.c.l.b16 %v257
        %v516 = vunpack.c.l.b16 %v258
        %v517 = vunpack.c.l.b16 %v259
        %v518 = vunpack.c.l.b16 %v260
        %v519 = vunpack.c.l.b16 %v261
        %v520 = vunpack.c.l.b16 %v262
        %v521 = vunpack.c.l.b16 %v263
        %v522 = vunpack.c.l.b16 %v264
        %v523 = vunpack.c.l.b16 %v265
        %v524 = vunpack.c.l.b16 %v266
        %v525 = vunpack.c.l.b16 %v267
        %v526 = vunpack.c.l.b16 %v268
        %v527 = vunpack.c.l.b16 %v269
        %v528 = vunpack.c.l.b16 %v270
        %v529 = vunpack.c.l.b16 %v271
        %v530 = vunpack.c.l.b16 %v272
        %v531 = vunpack.c.l.b16 %v273
        %v532 = vunpack.c.l.b16 %v274
        %v533 = vunpack.c.l.b16 %v275
        %v534 = vunpack.c.l.b16 %v276
        %v535 = vunpack.c.l.b16 %v277
        %v536 = vunpack.c.l.b16 %v278
        %v537 = vunpack.c.l.b16 %v279
        %v538 = vunpack.c.l.b16 %v280
        %v539 = vunpack.c.l.b16 %v281
        %v540 = vunpack.c.l.b16 %v282
        %v541 = vunpack.c.l.b16 %v283
        %v542 = vunpack.c.l.b16 %v284
        %v543 = vunpack.c.l.b16 %v285
        %v544 = vunpack.c.l.b16 %v286
        %v545 = vunpack.c.l.b16 %v287
        %v546 = vunpack.c.l.b16 %v288
        %v547 = vunpack.c.l.b16 %v289
        %v548 = vunpack.c.l.b16 %v290
        %v549 = vpack.c.b16 %v422, %v421
        %v550 = vpack.c.b16 %v424, %v423
        %v551 = vpack.c.b16 %v426, %v425
        %v552 = vpack.c.b16 %v428, %v427
        %v553 = vpack.c.b16 %v430, %v429
        %v554 = vpack.c.b16 %v432, %v431
        %v555 = vpack.c.b16 %v434, %v433
        %v556 = vpack.c.b16 %v436, %v435
        %v557 = vpack.c.b16 %v438, %v437
        %v558 = vpack.c.b16 %v440, %v439
        %v559 = vpack.c.b16 %v442, %v441
        %v560 = vpack.c.b16 %v444, %v443
        %v561 = vpack.c.b16 %v446, %v445
        %v562 = vpack.c.b16 %v448, %v447
        %v563 = vpack.c.b16 %v450, %v449
        %v564 = vpack.c.b16 %v452, %v451
        %v565 = vpack.c.b16 %v454, %v453
        %v566 = vpack.c.b16 %v456, %v455
        %v567 = vpack.c.b16 %v458, %v457
        %v568 = vpack.c.b16 %v460, %v459
        %v569 = vpack.c.b16 %v462, %v461
        %v570 = vpack.c.b16 %v464, %v463
        %v571 = vpack.c.b16 %v466, %v465
        %v572 = vpack.c.b16 %v468, %v467
        %v573 = vpack.c.b16 %v470, %v469
        %v574 = vpack.c.b16 %v472, %v471
        %v575 = vpack.c.b16 %v474, %v473
        %v576 = vpack.c.b16 %v476, %v475
        %v577 = vpack.c.b16 %v478, %v477
        %v578 = vpack.c.b16 %v480, %v479
        %v579 = vpack.c.b16 %v482, %v481
        %v580 = vpack.c.b16 %v484, %v483
        %v581 = vpack.c.b16 %v486, %v485
        %v582 = vpack.c.b16 %v488, %v487
        %v583 = vpack.c.b16 %v490, %v489
        %v584 = vpack.c.b16 %v492, %v491
        %v585 = vpack.c.b16 %v494, %v493
        %v586 = vpack.c.b16 %v496, %v495
        %v587 = vpack.c.b16 %v498, %v497
        %v588 = vpack.c.b16 %v500, %v499
        %v589 = vpack.c.b16 %v502, %v501
        %v590 = vpack.c.b16 %v504, %v503
        %v591 = vpack.c.b16 %v506, %v505
        %v592 = vpack.c.b16 %v508, %v507
        %v593 = vpack.c.b16 %v510, %v509
        %v594 = vpack.c.b16 %v512, %v511
        %v595 = vpack.c.b16 %v514, %v513
        %v596 = vpack.c.b16 %v516, %v515
        %v597 = vpack.c.b16 %v518, %v517
        %v598 = vpack.c.b16 %v520, %v519
        %v599 = vpack.c.b16 %v522, %v521
        %v600 = vpack.c.b16 %v524, %v523
        %v601 = vpack.c.b16 %v526, %v525
        %v602 = vpack.c.b16 %v528, %v527
        %v603 = vpack.c.b16 %v530, %v529
        %v604 = vpack.c.b16 %v532, %v531
        %v605 = vpack.c.b16 %v534, %v533
        %v606 = vpack.c.b16 %v536, %v535
        %v607 = vpack.c.b16 %v538, %v537
        %v608 = vpack.c.b16 %v540, %v539
        %v609 = vpack.c.b16 %v542, %v541
        %v610 = vpack.c.b16 %v544, %v543
        %v611 = vpack.c.b16 %v546, %v545
        %v612 = vpack.c.b16 %v548, %v547
        %v615 = vunpack.c.l.b16 %v291
        %v616 = vunpack.c.l.b16 %v292
        %v617 = vpack.c.b16 %v616, %v615
        %vm619 = vcmask 130048
        %v621 = vsel %vm619, %v549, 0
        %v624 = vsel %vm619, %v550, 0
        %v627 = vsel %vm619, %v551, 0
        %v630 = vsel %vm619, %v552, 0
        %v633 = vsel %vm619, %v553, 0
        %v636 = vsel %vm619, %v554, 0
        %v639 = vsel %vm619, %v555, 0
        %v642 = vsel %vm619, %v556, 0
        %v645 = vsel %vm619, %v557, 0
        %v648 = vsel %vm619, %v558, 0
        %v651 = vsel %vm619, %v559, 0
        %v654 = vsel %vm619, %v560, 0
        %v657 = vsel %vm619, %v561, 0
        %v660 = vsel %vm619, %v562, 0
        %v663 = vsel %vm619, %v563, 0
        %v666 = vsel %vm619, %v564, 0
        %v669 = vsel %vm619, %v565, 0
        %v672 = vsel %vm619, %v566, 0
        %v675 = vsel %vm619, %v567, 0
        %v678 = vsel %vm619, %v568, 0
        %v681 = vsel %vm619, %v569, 0
        %v684 = vsel %vm619, %v570, 0
        %v687 = vsel %vm619, %v571, 0
        %v690 = vsel %vm619, %v572, 0
        %v693 = vsel %vm619, %v573, 0
        %v696 = vsel %vm619, %v574, 0
        %v699 = vsel %vm619, %v575, 0
        %v702 = vsel %vm619, %v576, 0
        %v705 = vsel %vm619, %v577, 0
        %v708 = vsel %vm619, %v578, 0
        %v711 = vsel %vm619, %v579, 0
        %v714 = vsel %vm619, %v580, 0
        %v717 = vsel %vm619, %v581, 0
        %v720 = vsel %vm619, %v582, 0
        %v723 = vsel %vm619, %v583, 0
        %v726 = vsel %vm619, %v584, 0
        %v729 = vsel %vm619, %v585, 0
        %v732 = vsel %vm619, %v586, 0
        %v735 = vsel %vm619, %v587, 0
        %v738 = vsel %vm619, %v588, 0
        %v741 = vsel %vm619, %v589, 0
        %v744 = vsel %vm619, %v590, 0
        %v747 = vsel %vm619, %v591, 0
        %v750 = vsel %vm619, %v592, 0
        %v753 = vsel %vm619, %v593, 0
        %v756 = vsel %vm619, %v594, 0
        %v759 = vsel %vm619, %v595, 0
        %v762 = vsel %vm619, %v596, 0
        %v765 = vsel %vm619, %v597, 0
        %v768 = vsel %vm619, %v598, 0
        %v771 = vsel %vm619, %v599, 0
        %v774 = vsel %vm619, %v600, 0
        %v777 = vsel %vm619, %v601, 0
        %v780 = vsel %vm619, %v602, 0
        %v783 = vsel %vm619, %v603, 0
        %v786 = vsel %vm619, %v604, 0
        %v789 = vsel %vm619, %v605, 0
        %v792 = vsel %vm619, %v606, 0
        %v795 = vsel %vm619, %v607, 0
        %v798 = vsel %vm619, %v608, 0
        %v801 = vsel %vm619, %v609, 0
        %v804 = vsel %vm619, %v610, 0
        %v807 = vsel %vm619, %v611, 0
        %v810 = vsel %vm619, %v612, 0
        %812 = vmatprep.subr.bf16.mxu0 0
        %813 = vmatpush1.bf16.msra.mxu0 0
        %814 = vmatprep.subr.bf16.mxu0 0
        %815 = vmatpush1.bf16.msra.mxu0 0
        %816 = vmatprep.subr.bf16.mxu0 0
        %817 = vmatpush1.bf16.msra.mxu0 0
        %818 = vmatprep.subr.bf16.mxu0 0
        %819 = vmatpush1.bf16.msra.mxu0 0
        %820 = vmatprep.subr.bf16.mxu0 0
        %821 = vmatpush1.bf16.msra.mxu0 0
        %822 = vmatprep.subr.bf16.mxu0 0
        %823 = vmatpush1.bf16.msra.mxu0 0
        %824 = vmatprep.subr.bf16.mxu0 0
        %825 = vmatpush1.bf16.msra.mxu0 0
        %826 = vmatprep.subr.bf16.mxu0 0
        %827 = vmatpush1.bf16.msra.mxu0 %v617
        %828 = vmatprep.subr.bf16.mxu0 0
        %829 = vmatpush2.bf16.msra.mxu0 0
        %830 = vmatprep.subr.bf16.mxu0 0
        %831 = vmatpush2.bf16.msra.mxu0 0
        %832 = vmatprep.subr.bf16.mxu0 0
        %833 = vmatpush2.bf16.msra.mxu0 0
        %834 = vmatprep.subr.bf16.mxu0 0
        %835 = vmatpush2.bf16.msra.mxu0 0
        %836 = vmatprep.subr.bf16.mxu0 0
        %837 = vmatpush2.bf16.msra.mxu0 0
        %838 = vmatprep.subr.bf16.mxu0 0
        %839 = vmatpush2.bf16.msra.mxu0 0
        %840 = vmatprep.subr.bf16.mxu0 0
        %841 = vmatpush2.bf16.msra.mxu0 0
        %842 = vmatprep.subr.bf16.mxu0 0
        %843 = vmatpush2.bf16.msra.mxu0 0
        %844 = vmatprep.mubr.bf16.mxu0 0
        %845 = vmatmul.mubr.bf16.gmra.mxu0 %v621
        %v846 = vpop.f32.mrf.mxu0
        %v847 = vadd.f32 0.0, %v846
        %v848 = vpop.f32.mrf.mxu0
        %v849 = vpop.f32.mrf.mxu0
        %v850 = vadd.f32 0.0, %v849
        %v851 = vpop.f32.mrf.mxu0
        %852 = vmatprep.mubr.bf16.mxu0 0
        %853 = vmatmul.mubr.bf16.gmra.mxu0 %v624
        %v854 = vpop.f32.mrf.mxu0
        %v855 = vadd.f32 0.0, %v854
        %v856 = vpop.f32.mrf.mxu0
        %v857 = vpop.f32.mrf.mxu0
        %v858 = vadd.f32 0.0, %v857
        %v859 = vpop.f32.mrf.mxu0
        %860 = vmatprep.mubr.bf16.mxu0 0
        %861 = vmatmul.mubr.bf16.gmra.mxu0 %v627
        %v862 = vpop.f32.mrf.mxu0
        %v863 = vadd.f32 0.0, %v862
        %v864 = vpop.f32.mrf.mxu0
        %v865 = vpop.f32.mrf.mxu0
        %v866 = vadd.f32 0.0, %v865
        %v867 = vpop.f32.mrf.mxu0
        %868 = vmatprep.mubr.bf16.mxu0 0
        %869 = vmatmul.mubr.bf16.gmra.mxu0 %v630
        %v870 = vpop.f32.mrf.mxu0
        %v871 = vadd.f32 0.0, %v870
        %v872 = vpop.f32.mrf.mxu0
        %v873 = vpop.f32.mrf.mxu0
        %v874 = vadd.f32 0.0, %v873
        %v875 = vpop.f32.mrf.mxu0
        %876 = vmatprep.mubr.bf16.mxu0 0
        %877 = vmatmul.mubr.bf16.gmra.mxu0 %v633
        %v878 = vpop.f32.mrf.mxu0
        %v879 = vadd.f32 0.0, %v878
        %v880 = vpop.f32.mrf.mxu0
        %v881 = vpop.f32.mrf.mxu0
        %v882 = vadd.f32 0.0, %v881
        %v883 = vpop.f32.mrf.mxu0
        %884 = vmatprep.mubr.bf16.mxu0 0
        %885 = vmatmul.mubr.bf16.gmra.mxu0 %v636
        %v886 = vpop.f32.mrf.mxu0
        %v887 = vadd.f32 0.0, %v886
        %v888 = vpop.f32.mrf.mxu0
        %v889 = vpop.f32.mrf.mxu0
        %v890 = vadd.f32 0.0, %v889
        %v891 = vpop.f32.mrf.mxu0
        %892 = vmatprep.mubr.bf16.mxu0 0
        %893 = vmatmul.mubr.bf16.gmra.mxu0 %v639
        %v894 = vpop.f32.mrf.mxu0
        %v895 = vadd.f32 0.0, %v894
        %v896 = vpop.f32.mrf.mxu0
        %v897 = vpop.f32.mrf.mxu0
        %v898 = vadd.f32 0.0, %v897
        %v899 = vpop.f32.mrf.mxu0
        %900 = vmatprep.mubr.bf16.mxu0 0
        %901 = vmatmul.mubr.bf16.gmra.mxu0 %v642
        %v902 = vpop.f32.mrf.mxu0
        %v903 = vadd.f32 0.0, %v902
        %v904 = vpop.f32.mrf.mxu0
        %v905 = vpop.f32.mrf.mxu0
        %v906 = vadd.f32 0.0, %v905
        %v907 = vpop.f32.mrf.mxu0
        %908 = vmatprep.mubr.bf16.mxu0 0
        %909 = vmatmul.mubr.bf16.gmra.mxu0 %v645
        %v910 = vpop.f32.mrf.mxu0
        %v911 = vadd.f32 0.0, %v910
        %v912 = vpop.f32.mrf.mxu0
        %v913 = vpop.f32.mrf.mxu0
        %v914 = vadd.f32 0.0, %v913
        %v915 = vpop.f32.mrf.mxu0
        %916 = vmatprep.mubr.bf16.mxu0 0
        %917 = vmatmul.mubr.bf16.gmra.mxu0 %v648
        %v918 = vpop.f32.mrf.mxu0
        %v919 = vadd.f32 0.0, %v918
        %v920 = vpop.f32.mrf.mxu0
        %v921 = vpop.f32.mrf.mxu0
        %v922 = vadd.f32 0.0, %v921
        %v923 = vpop.f32.mrf.mxu0
        %924 = vmatprep.mubr.bf16.mxu0 0
        %925 = vmatmul.mubr.bf16.gmra.mxu0 %v651
        %v926 = vpop.f32.mrf.mxu0
        %v927 = vadd.f32 0.0, %v926
        %v928 = vpop.f32.mrf.mxu0
        %v929 = vpop.f32.mrf.mxu0
        %v930 = vadd.f32 0.0, %v929
        %v931 = vpop.f32.mrf.mxu0
        %932 = vmatprep.mubr.bf16.mxu0 0
        %933 = vmatmul.mubr.bf16.gmra.mxu0 %v654
        %v934 = vpop.f32.mrf.mxu0
        %v935 = vadd.f32 0.0, %v934
        %v936 = vpop.f32.mrf.mxu0
        %v937 = vpop.f32.mrf.mxu0
        %v938 = vadd.f32 0.0, %v937
        %v939 = vpop.f32.mrf.mxu0
        %940 = vmatprep.mubr.bf16.mxu0 0
        %941 = vmatmul.mubr.bf16.gmra.mxu0 %v657
        %v942 = vpop.f32.mrf.mxu0
        %v943 = vadd.f32 0.0, %v942
        %v944 = vpop.f32.mrf.mxu0
        %v945 = vpop.f32.mrf.mxu0
        %v946 = vadd.f32 0.0, %v945
        %v947 = vpop.f32.mrf.mxu0
        %948 = vmatprep.mubr.bf16.mxu0 0
        %949 = vmatmul.mubr.bf16.gmra.mxu0 %v660
        %v950 = vpop.f32.mrf.mxu0
        %v951 = vadd.f32 0.0, %v950
        %v952 = vpop.f32.mrf.mxu0
        %v953 = vpop.f32.mrf.mxu0
        %v954 = vadd.f32 0.0, %v953
        %v955 = vpop.f32.mrf.mxu0
        %956 = vmatprep.mubr.bf16.mxu0 0
        %957 = vmatmul.mubr.bf16.gmra.mxu0 %v663
        %v958 = vpop.f32.mrf.mxu0
        %v959 = vadd.f32 0.0, %v958
        %v960 = vpop.f32.mrf.mxu0
        %v961 = vpop.f32.mrf.mxu0
        %v962 = vadd.f32 0.0, %v961
        %v963 = vpop.f32.mrf.mxu0
        %964 = vmatprep.mubr.bf16.mxu0 0
        %965 = vmatmul.mubr.bf16.gmra.mxu0 %v666
        %v966 = vpop.f32.mrf.mxu0
        %v967 = vadd.f32 0.0, %v966
        %v968 = vpop.f32.mrf.mxu0
        %v969 = vpop.f32.mrf.mxu0
        %v970 = vadd.f32 0.0, %v969
        %v971 = vpop.f32.mrf.mxu0
        %972 = vmatprep.mubr.bf16.mxu0 0
        %973 = vmatmul.mubr.bf16.gmra.mxu0 %v669
        %v974 = vpop.f32.mrf.mxu0
        %v975 = vadd.f32 0.0, %v974
        %v976 = vpop.f32.mrf.mxu0
        %v977 = vpop.f32.mrf.mxu0
        %v978 = vadd.f32 0.0, %v977
        %v979 = vpop.f32.mrf.mxu0
        %980 = vmatprep.mubr.bf16.mxu0 0
        %981 = vmatmul.mubr.bf16.gmra.mxu0 %v672
        %v982 = vpop.f32.mrf.mxu0
        %v983 = vadd.f32 0.0, %v982
        %v984 = vpop.f32.mrf.mxu0
        %v985 = vpop.f32.mrf.mxu0
        %v986 = vadd.f32 0.0, %v985
        %v987 = vpop.f32.mrf.mxu0
        %988 = vmatprep.mubr.bf16.mxu0 0
        %989 = vmatmul.mubr.bf16.gmra.mxu0 %v675
        %v990 = vpop.f32.mrf.mxu0
        %v991 = vadd.f32 0.0, %v990
        %v992 = vpop.f32.mrf.mxu0
        %v993 = vpop.f32.mrf.mxu0
        %v994 = vadd.f32 0.0, %v993
        %v995 = vpop.f32.mrf.mxu0
        %996 = vmatprep.mubr.bf16.mxu0 0
        %997 = vmatmul.mubr.bf16.gmra.mxu0 %v678
        %v998 = vpop.f32.mrf.mxu0
        %v999 = vadd.f32 0.0, %v998
        %v1000 = vpop.f32.mrf.mxu0
        %v1001 = vpop.f32.mrf.mxu0
        %v1002 = vadd.f32 0.0, %v1001
        %v1003 = vpop.f32.mrf.mxu0
        %1004 = vmatprep.mubr.bf16.mxu0 0
        %1005 = vmatmul.mubr.bf16.gmra.mxu0 %v681
        %v1006 = vpop.f32.mrf.mxu0
        %v1007 = vadd.f32 0.0, %v1006
        %v1008 = vpop.f32.mrf.mxu0
        %v1009 = vpop.f32.mrf.mxu0
        %v1010 = vadd.f32 0.0, %v1009
        %v1011 = vpop.f32.mrf.mxu0
        %1012 = vmatprep.mubr.bf16.mxu0 0
        %1013 = vmatmul.mubr.bf16.gmra.mxu0 %v684
        %v1014 = vpop.f32.mrf.mxu0
        %v1015 = vadd.f32 0.0, %v1014
        %v1016 = vpop.f32.mrf.mxu0
        %v1017 = vpop.f32.mrf.mxu0
        %v1018 = vadd.f32 0.0, %v1017
        %v1019 = vpop.f32.mrf.mxu0
        %1020 = vmatprep.mubr.bf16.mxu0 0
        %1021 = vmatmul.mubr.bf16.gmra.mxu0 %v687
        %v1022 = vpop.f32.mrf.mxu0
        %v1023 = vadd.f32 0.0, %v1022
        %v1024 = vpop.f32.mrf.mxu0
        %v1025 = vpop.f32.mrf.mxu0
        %v1026 = vadd.f32 0.0, %v1025
        %v1027 = vpop.f32.mrf.mxu0
        %1028 = vmatprep.mubr.bf16.mxu0 0
        %1029 = vmatmul.mubr.bf16.gmra.mxu0 %v690
        %v1030 = vpop.f32.mrf.mxu0
        %v1031 = vadd.f32 0.0, %v1030
        %v1032 = vpop.f32.mrf.mxu0
        %v1033 = vpop.f32.mrf.mxu0
        %v1034 = vadd.f32 0.0, %v1033
        %v1035 = vpop.f32.mrf.mxu0
        %1036 = vmatprep.mubr.bf16.mxu0 0
        %1037 = vmatmul.mubr.bf16.gmra.mxu0 %v693
        %v1038 = vpop.f32.mrf.mxu0
        %v1039 = vadd.f32 0.0, %v1038
        %v1040 = vpop.f32.mrf.mxu0
        %v1041 = vpop.f32.mrf.mxu0
        %v1042 = vadd.f32 0.0, %v1041
        %v1043 = vpop.f32.mrf.mxu0
        %1044 = vmatprep.mubr.bf16.mxu0 0
        %1045 = vmatmul.mubr.bf16.gmra.mxu0 %v696
        %v1046 = vpop.f32.mrf.mxu0
        %v1047 = vadd.f32 0.0, %v1046
        %v1048 = vpop.f32.mrf.mxu0
        %v1049 = vpop.f32.mrf.mxu0
        %v1050 = vadd.f32 0.0, %v1049
        %v1051 = vpop.f32.mrf.mxu0
        %1052 = vmatprep.mubr.bf16.mxu0 0
        %1053 = vmatmul.mubr.bf16.gmra.mxu0 %v699
        %v1054 = vpop.f32.mrf.mxu0
        %v1055 = vadd.f32 0.0, %v1054
        %v1056 = vpop.f32.mrf.mxu0
        %v1057 = vpop.f32.mrf.mxu0
        %v1058 = vadd.f32 0.0, %v1057
        %v1059 = vpop.f32.mrf.mxu0
        %1060 = vmatprep.mubr.bf16.mxu0 0
        %1061 = vmatmul.mubr.bf16.gmra.mxu0 %v702
        %v1062 = vpop.f32.mrf.mxu0
        %v1063 = vadd.f32 0.0, %v1062
        %v1064 = vpop.f32.mrf.mxu0
        %v1065 = vpop.f32.mrf.mxu0
        %v1066 = vadd.f32 0.0, %v1065
        %v1067 = vpop.f32.mrf.mxu0
        %1068 = vmatprep.mubr.bf16.mxu0 0
        %1069 = vmatmul.mubr.bf16.gmra.mxu0 %v705
        %v1070 = vpop.f32.mrf.mxu0
        %v1071 = vadd.f32 0.0, %v1070
        %v1072 = vpop.f32.mrf.mxu0
        %v1073 = vpop.f32.mrf.mxu0
        %v1074 = vadd.f32 0.0, %v1073
        %v1075 = vpop.f32.mrf.mxu0
        %1076 = vmatprep.mubr.bf16.mxu0 0
        %1077 = vmatmul.mubr.bf16.gmra.mxu0 %v708
        %v1078 = vpop.f32.mrf.mxu0
        %v1079 = vadd.f32 0.0, %v1078
        %v1080 = vpop.f32.mrf.mxu0
        %v1081 = vpop.f32.mrf.mxu0
        %v1082 = vadd.f32 0.0, %v1081
        %v1083 = vpop.f32.mrf.mxu0
        %1084 = vmatprep.mubr.bf16.mxu0 0
        %1085 = vmatmul.mubr.bf16.gmra.mxu0 %v711
        %v1086 = vpop.f32.mrf.mxu0
        %v1087 = vadd.f32 0.0, %v1086
        %v1088 = vpop.f32.mrf.mxu0
        %v1089 = vpop.f32.mrf.mxu0
        %v1090 = vadd.f32 0.0, %v1089
        %v1091 = vpop.f32.mrf.mxu0
        %1092 = vmatprep.mubr.bf16.mxu0 0
        %1093 = vmatmul.mubr.bf16.gmra.mxu0 %v714
        %v1094 = vpop.f32.mrf.mxu0
        %v1095 = vadd.f32 0.0, %v1094
        %v1096 = vpop.f32.mrf.mxu0
        %v1097 = vpop.f32.mrf.mxu0
        %v1098 = vadd.f32 0.0, %v1097
        %v1099 = vpop.f32.mrf.mxu0
        %1100 = vmatprep.mubr.bf16.mxu0 0
        %1101 = vmatmul.mubr.bf16.gmra.mxu0 %v717
        %v1102 = vpop.f32.mrf.mxu0
        %v1103 = vadd.f32 0.0, %v1102
        %v1104 = vpop.f32.mrf.mxu0
        %v1105 = vpop.f32.mrf.mxu0
        %v1106 = vadd.f32 0.0, %v1105
        %v1107 = vpop.f32.mrf.mxu0
        %1108 = vmatprep.mubr.bf16.mxu0 0
        %1109 = vmatmul.mubr.bf16.gmra.mxu0 %v720
        %v1110 = vpop.f32.mrf.mxu0
        %v1111 = vadd.f32 0.0, %v1110
        %v1112 = vpop.f32.mrf.mxu0
        %v1113 = vpop.f32.mrf.mxu0
        %v1114 = vadd.f32 0.0, %v1113
        %v1115 = vpop.f32.mrf.mxu0
        %1116 = vmatprep.mubr.bf16.mxu0 0
        %1117 = vmatmul.mubr.bf16.gmra.mxu0 %v723
        %v1118 = vpop.f32.mrf.mxu0
        %v1119 = vadd.f32 0.0, %v1118
        %v1120 = vpop.f32.mrf.mxu0
        %v1121 = vpop.f32.mrf.mxu0
        %v1122 = vadd.f32 0.0, %v1121
        %v1123 = vpop.f32.mrf.mxu0
        %1124 = vmatprep.mubr.bf16.mxu0 0
        %1125 = vmatmul.mubr.bf16.gmra.mxu0 %v726
        %v1126 = vpop.f32.mrf.mxu0
        %v1127 = vadd.f32 0.0, %v1126
        %v1128 = vpop.f32.mrf.mxu0
        %v1129 = vpop.f32.mrf.mxu0
        %v1130 = vadd.f32 0.0, %v1129
        %v1131 = vpop.f32.mrf.mxu0
        %1132 = vmatprep.mubr.bf16.mxu0 0
        %1133 = vmatmul.mubr.bf16.gmra.mxu0 %v729
        %v1134 = vpop.f32.mrf.mxu0
        %v1135 = vadd.f32 0.0, %v1134
        %v1136 = vpop.f32.mrf.mxu0
        %v1137 = vpop.f32.mrf.mxu0
        %v1138 = vadd.f32 0.0, %v1137
        %v1139 = vpop.f32.mrf.mxu0
        %1140 = vmatprep.mubr.bf16.mxu0 0
        %1141 = vmatmul.mubr.bf16.gmra.mxu0 %v732
        %v1142 = vpop.f32.mrf.mxu0
        %v1143 = vadd.f32 0.0, %v1142
        %v1144 = vpop.f32.mrf.mxu0
        %v1145 = vpop.f32.mrf.mxu0
        %v1146 = vadd.f32 0.0, %v1145
        %v1147 = vpop.f32.mrf.mxu0
        %1148 = vmatprep.mubr.bf16.mxu0 0
        %1149 = vmatmul.mubr.bf16.gmra.mxu0 %v735
        %v1150 = vpop.f32.mrf.mxu0
        %v1151 = vadd.f32 0.0, %v1150
        %v1152 = vpop.f32.mrf.mxu0
        %v1153 = vpop.f32.mrf.mxu0
        %v1154 = vadd.f32 0.0, %v1153
        %v1155 = vpop.f32.mrf.mxu0
        %1156 = vmatprep.mubr.bf16.mxu0 0
        %1157 = vmatmul.mubr.bf16.gmra.mxu0 %v738
        %v1158 = vpop.f32.mrf.mxu0
        %v1159 = vadd.f32 0.0, %v1158
        %v1160 = vpop.f32.mrf.mxu0
        %v1161 = vpop.f32.mrf.mxu0
        %v1162 = vadd.f32 0.0, %v1161
        %v1163 = vpop.f32.mrf.mxu0
        %1164 = vmatprep.mubr.bf16.mxu0 0
        %1165 = vmatmul.mubr.bf16.gmra.mxu0 %v741
        %v1166 = vpop.f32.mrf.mxu0
        %v1167 = vadd.f32 0.0, %v1166
        %v1168 = vpop.f32.mrf.mxu0
        %v1169 = vpop.f32.mrf.mxu0
        %v1170 = vadd.f32 0.0, %v1169
        %v1171 = vpop.f32.mrf.mxu0
        %1172 = vmatprep.mubr.bf16.mxu0 0
        %1173 = vmatmul.mubr.bf16.gmra.mxu0 %v744
        %v1174 = vpop.f32.mrf.mxu0
        %v1175 = vadd.f32 0.0, %v1174
        %v1176 = vpop.f32.mrf.mxu0
        %v1177 = vpop.f32.mrf.mxu0
        %v1178 = vadd.f32 0.0, %v1177
        %v1179 = vpop.f32.mrf.mxu0
        %1180 = vmatprep.mubr.bf16.mxu0 0
        %1181 = vmatmul.mubr.bf16.gmra.mxu0 %v747
        %v1182 = vpop.f32.mrf.mxu0
        %v1183 = vadd.f32 0.0, %v1182
        %v1184 = vpop.f32.mrf.mxu0
        %v1185 = vpop.f32.mrf.mxu0
        %v1186 = vadd.f32 0.0, %v1185
        %v1187 = vpop.f32.mrf.mxu0
        %1188 = vmatprep.mubr.bf16.mxu0 0
        %1189 = vmatmul.mubr.bf16.gmra.mxu0 %v750
        %v1190 = vpop.f32.mrf.mxu0
        %v1191 = vadd.f32 0.0, %v1190
        %v1192 = vpop.f32.mrf.mxu0
        %v1193 = vpop.f32.mrf.mxu0
        %v1194 = vadd.f32 0.0, %v1193
        %v1195 = vpop.f32.mrf.mxu0
        %1196 = vmatprep.mubr.bf16.mxu0 0
        %1197 = vmatmul.mubr.bf16.gmra.mxu0 %v753
        %v1198 = vpop.f32.mrf.mxu0
        %v1199 = vadd.f32 0.0, %v1198
        %v1200 = vpop.f32.mrf.mxu0
        %v1201 = vpop.f32.mrf.mxu0
        %v1202 = vadd.f32 0.0, %v1201
        %v1203 = vpop.f32.mrf.mxu0
        %1204 = vmatprep.mubr.bf16.mxu0 0
        %1205 = vmatmul.mubr.bf16.gmra.mxu0 %v756
        %v1206 = vpop.f32.mrf.mxu0
        %v1207 = vadd.f32 0.0, %v1206
        %v1208 = vpop.f32.mrf.mxu0
        %v1209 = vpop.f32.mrf.mxu0
        %v1210 = vadd.f32 0.0, %v1209
        %v1211 = vpop.f32.mrf.mxu0
        %1212 = vmatprep.mubr.bf16.mxu0 0
        %1213 = vmatmul.mubr.bf16.gmra.mxu0 %v759
        %v1214 = vpop.f32.mrf.mxu0
        %v1215 = vadd.f32 0.0, %v1214
        %v1216 = vpop.f32.mrf.mxu0
        %v1217 = vpop.f32.mrf.mxu0
        %v1218 = vadd.f32 0.0, %v1217
        %v1219 = vpop.f32.mrf.mxu0
        %1220 = vmatprep.mubr.bf16.mxu0 0
        %1221 = vmatmul.mubr.bf16.gmra.mxu0 %v762
        %v1222 = vpop.f32.mrf.mxu0
        %v1223 = vadd.f32 0.0, %v1222
        %v1224 = vpop.f32.mrf.mxu0
        %v1225 = vpop.f32.mrf.mxu0
        %v1226 = vadd.f32 0.0, %v1225
        %v1227 = vpop.f32.mrf.mxu0
        %1228 = vmatprep.mubr.bf16.mxu0 0
        %1229 = vmatmul.mubr.bf16.gmra.mxu0 %v765
        %v1230 = vpop.f32.mrf.mxu0
        %v1231 = vadd.f32 0.0, %v1230
        %v1232 = vpop.f32.mrf.mxu0
        %v1233 = vpop.f32.mrf.mxu0
        %v1234 = vadd.f32 0.0, %v1233
        %v1235 = vpop.f32.mrf.mxu0
        %1236 = vmatprep.mubr.bf16.mxu0 0
        %1237 = vmatmul.mubr.bf16.gmra.mxu0 %v768
        %v1238 = vpop.f32.mrf.mxu0
        %v1239 = vadd.f32 0.0, %v1238
        %v1240 = vpop.f32.mrf.mxu0
        %v1241 = vpop.f32.mrf.mxu0
        %v1242 = vadd.f32 0.0, %v1241
        %v1243 = vpop.f32.mrf.mxu0
        %1244 = vmatprep.mubr.bf16.mxu0 0
        %1245 = vmatmul.mubr.bf16.gmra.mxu0 %v771
        %v1246 = vpop.f32.mrf.mxu0
        %v1247 = vadd.f32 0.0, %v1246
        %v1248 = vpop.f32.mrf.mxu0
        %v1249 = vpop.f32.mrf.mxu0
        %v1250 = vadd.f32 0.0, %v1249
        %v1251 = vpop.f32.mrf.mxu0
        %1252 = vmatprep.mubr.bf16.mxu0 0
        %1253 = vmatmul.mubr.bf16.gmra.mxu0 %v774
        %v1254 = vpop.f32.mrf.mxu0
        %v1255 = vadd.f32 0.0, %v1254
        %v1256 = vpop.f32.mrf.mxu0
        %v1257 = vpop.f32.mrf.mxu0
        %v1258 = vadd.f32 0.0, %v1257
        %v1259 = vpop.f32.mrf.mxu0
        %1260 = vmatprep.mubr.bf16.mxu0 0
        %1261 = vmatmul.mubr.bf16.gmra.mxu0 %v777
        %v1262 = vpop.f32.mrf.mxu0
        %v1263 = vadd.f32 0.0, %v1262
        %v1264 = vpop.f32.mrf.mxu0
        %v1265 = vpop.f32.mrf.mxu0
        %v1266 = vadd.f32 0.0, %v1265
        %v1267 = vpop.f32.mrf.mxu0
        %1268 = vmatprep.mubr.bf16.mxu0 0
        %1269 = vmatmul.mubr.bf16.gmra.mxu0 %v780
        %v1270 = vpop.f32.mrf.mxu0
        %v1271 = vadd.f32 0.0, %v1270
        %v1272 = vpop.f32.mrf.mxu0
        %v1273 = vpop.f32.mrf.mxu0
        %v1274 = vadd.f32 0.0, %v1273
        %v1275 = vpop.f32.mrf.mxu0
        %1276 = vmatprep.mubr.bf16.mxu0 0
        %1277 = vmatmul.mubr.bf16.gmra.mxu0 %v783
        %v1278 = vpop.f32.mrf.mxu0
        %v1279 = vadd.f32 0.0, %v1278
        %v1280 = vpop.f32.mrf.mxu0
        %v1281 = vpop.f32.mrf.mxu0
        %v1282 = vadd.f32 0.0, %v1281
        %v1283 = vpop.f32.mrf.mxu0
        %1284 = vmatprep.mubr.bf16.mxu0 0
        %1285 = vmatmul.mubr.bf16.gmra.mxu0 %v786
        %v1286 = vpop.f32.mrf.mxu0
        %v1287 = vadd.f32 0.0, %v1286
        %v1288 = vpop.f32.mrf.mxu0
        %v1289 = vpop.f32.mrf.mxu0
        %v1290 = vadd.f32 0.0, %v1289
        %v1291 = vpop.f32.mrf.mxu0
        %1292 = vmatprep.mubr.bf16.mxu0 0
        %1293 = vmatmul.mubr.bf16.gmra.mxu0 %v789
        %v1294 = vpop.f32.mrf.mxu0
        %v1295 = vadd.f32 0.0, %v1294
        %v1296 = vpop.f32.mrf.mxu0
        %v1297 = vpop.f32.mrf.mxu0
        %v1298 = vadd.f32 0.0, %v1297
        %v1299 = vpop.f32.mrf.mxu0
        %1300 = vmatprep.mubr.bf16.mxu0 0
        %1301 = vmatmul.mubr.bf16.gmra.mxu0 %v792
        %v1302 = vpop.f32.mrf.mxu0
        %v1303 = vadd.f32 0.0, %v1302
        %v1304 = vpop.f32.mrf.mxu0
        %v1305 = vpop.f32.mrf.mxu0
        %v1306 = vadd.f32 0.0, %v1305
        %v1307 = vpop.f32.mrf.mxu0
        %1308 = vmatprep.mubr.bf16.mxu0 0
        %1309 = vmatmul.mubr.bf16.gmra.mxu0 %v795
        %v1310 = vpop.f32.mrf.mxu0
        %v1311 = vadd.f32 0.0, %v1310
        %v1312 = vpop.f32.mrf.mxu0
        %v1313 = vpop.f32.mrf.mxu0
        %v1314 = vadd.f32 0.0, %v1313
        %v1315 = vpop.f32.mrf.mxu0
        %1316 = vmatprep.mubr.bf16.mxu0 0
        %1317 = vmatmul.mubr.bf16.gmra.mxu0 %v798
        %v1318 = vpop.f32.mrf.mxu0
        %v1319 = vadd.f32 0.0, %v1318
        %v1320 = vpop.f32.mrf.mxu0
        %v1321 = vpop.f32.mrf.mxu0
        %v1322 = vadd.f32 0.0, %v1321
        %v1323 = vpop.f32.mrf.mxu0
        %1324 = vmatprep.mubr.bf16.mxu0 0
        %1325 = vmatmul.mubr.bf16.gmra.mxu0 %v801
        %v1326 = vpop.f32.mrf.mxu0
        %v1327 = vadd.f32 0.0, %v1326
        %v1328 = vpop.f32.mrf.mxu0
        %v1329 = vpop.f32.mrf.mxu0
        %v1330 = vadd.f32 0.0, %v1329
        %v1331 = vpop.f32.mrf.mxu0
        %1332 = vmatprep.mubr.bf16.mxu0 0
        %1333 = vmatmul.mubr.bf16.gmra.mxu0 %v804
        %v1334 = vpop.f32.mrf.mxu0
        %v1335 = vadd.f32 0.0, %v1334
        %v1336 = vpop.f32.mrf.mxu0
        %v1337 = vpop.f32.mrf.mxu0
        %v1338 = vadd.f32 0.0, %v1337
        %v1339 = vpop.f32.mrf.mxu0
        %1340 = vmatprep.mubr.bf16.mxu0 0
        %1341 = vmatmul.mubr.bf16.gmra.mxu0 %v807
        %v1342 = vpop.f32.mrf.mxu0
        %v1343 = vadd.f32 0.0, %v1342
        %v1344 = vpop.f32.mrf.mxu0
        %v1345 = vpop.f32.mrf.mxu0
        %v1346 = vadd.f32 0.0, %v1345
        %v1347 = vpop.f32.mrf.mxu0
        %1348 = vmatprep.mubr.bf16.mxu0 0
        %1349 = vmatmul.mubr.bf16.gmra.mxu0 %v810
        %v1350 = vpop.f32.mrf.mxu0
        %v1351 = vadd.f32 0.0, %v1350
        %v1352 = vpop.f32.mrf.mxu0
        %v1353 = vpop.f32.mrf.mxu0
        %v1354 = vadd.f32 0.0, %v1353
        %v1355 = vpop.f32.mrf.mxu0
        %1356 = vdwg.mxu0
        %vm1357 = vcmp.gt.f32.partialorder %v847, 0.0
        %vm1358 = vcmp.gt.f32.partialorder %v850, 0.0
        %vm1359 = vcmp.gt.f32.partialorder %v855, 0.0
        %vm1360 = vcmp.gt.f32.partialorder %v858, 0.0
        %vm1361 = vcmp.gt.f32.partialorder %v863, 0.0
        %vm1362 = vcmp.gt.f32.partialorder %v866, 0.0
        %vm1363 = vcmp.gt.f32.partialorder %v871, 0.0
        %vm1364 = vcmp.gt.f32.partialorder %v874, 0.0
        %vm1365 = vcmp.gt.f32.partialorder %v879, 0.0
        %vm1366 = vcmp.gt.f32.partialorder %v882, 0.0
        %vm1367 = vcmp.gt.f32.partialorder %v887, 0.0
        %vm1368 = vcmp.gt.f32.partialorder %v890, 0.0
        %vm1369 = vcmp.gt.f32.partialorder %v895, 0.0
        %vm1370 = vcmp.gt.f32.partialorder %v898, 0.0
        %vm1371 = vcmp.gt.f32.partialorder %v903, 0.0
        %vm1372 = vcmp.gt.f32.partialorder %v906, 0.0
        %vm1373 = vcmp.gt.f32.partialorder %v911, 0.0
        %vm1374 = vcmp.gt.f32.partialorder %v914, 0.0
        %vm1375 = vcmp.gt.f32.partialorder %v919, 0.0
        %vm1376 = vcmp.gt.f32.partialorder %v922, 0.0
        %vm1377 = vcmp.gt.f32.partialorder %v927, 0.0
        %vm1378 = vcmp.gt.f32.partialorder %v930, 0.0
        %vm1379 = vcmp.gt.f32.partialorder %v935, 0.0
        %vm1380 = vcmp.gt.f32.partialorder %v938, 0.0
        %vm1381 = vcmp.gt.f32.partialorder %v943, 0.0
        %vm1382 = vcmp.gt.f32.partialorder %v946, 0.0
        %vm1383 = vcmp.gt.f32.partialorder %v951, 0.0
        %vm1384 = vcmp.gt.f32.partialorder %v954, 0.0
        %vm1385 = vcmp.gt.f32.partialorder %v959, 0.0
        %vm1386 = vcmp.gt.f32.partialorder %v962, 0.0
        %vm1387 = vcmp.gt.f32.partialorder %v967, 0.0
        %vm1388 = vcmp.gt.f32.partialorder %v970, 0.0
        %vm1389 = vcmp.gt.f32.partialorder %v975, 0.0
        %vm1390 = vcmp.gt.f32.partialorder %v978, 0.0
        %vm1391 = vcmp.gt.f32.partialorder %v983, 0.0
        %vm1392 = vcmp.gt.f32.partialorder %v986, 0.0
        %vm1393 = vcmp.gt.f32.partialorder %v991, 0.0
        %vm1394 = vcmp.gt.f32.partialorder %v994, 0.0
        %vm1395 = vcmp.gt.f32.partialorder %v999, 0.0
        %vm1396 = vcmp.gt.f32.partialorder %v1002, 0.0
        %vm1397 = vcmp.gt.f32.partialorder %v1007, 0.0
        %vm1398 = vcmp.gt.f32.partialorder %v1010, 0.0
        %vm1399 = vcmp.gt.f32.partialorder %v1015, 0.0
        %vm1400 = vcmp.gt.f32.partialorder %v1018, 0.0
        %vm1401 = vcmp.gt.f32.partialorder %v1023, 0.0
        %vm1402 = vcmp.gt.f32.partialorder %v1026, 0.0
        %vm1403 = vcmp.gt.f32.partialorder %v1031, 0.0
        %vm1404 = vcmp.gt.f32.partialorder %v1034, 0.0
        %vm1405 = vcmp.gt.f32.partialorder %v1039, 0.0
        %vm1406 = vcmp.gt.f32.partialorder %v1042, 0.0
        %vm1407 = vcmp.gt.f32.partialorder %v1047, 0.0
        %vm1408 = vcmp.gt.f32.partialorder %v1050, 0.0
        %vm1409 = vcmp.gt.f32.partialorder %v1055, 0.0
        %vm1410 = vcmp.gt.f32.partialorder %v1058, 0.0
        %vm1411 = vcmp.gt.f32.partialorder %v1063, 0.0
        %vm1412 = vcmp.gt.f32.partialorder %v1066, 0.0
        %vm1413 = vcmp.gt.f32.partialorder %v1071, 0.0
        %vm1414 = vcmp.gt.f32.partialorder %v1074, 0.0
        %vm1415 = vcmp.gt.f32.partialorder %v1079, 0.0
        %vm1416 = vcmp.gt.f32.partialorder %v1082, 0.0
        %vm1417 = vcmp.gt.f32.partialorder %v1087, 0.0
        %vm1418 = vcmp.gt.f32.partialorder %v1090, 0.0
        %vm1419 = vcmp.gt.f32.partialorder %v1095, 0.0
        %vm1420 = vcmp.gt.f32.partialorder %v1098, 0.0
        %vm1421 = vcmp.gt.f32.partialorder %v1103, 0.0
        %vm1422 = vcmp.gt.f32.partialorder %v1106, 0.0
        %vm1423 = vcmp.gt.f32.partialorder %v1111, 0.0
        %vm1424 = vcmp.gt.f32.partialorder %v1114, 0.0
        %vm1425 = vcmp.gt.f32.partialorder %v1119, 0.0
        %vm1426 = vcmp.gt.f32.partialorder %v1122, 0.0
        %vm1427 = vcmp.gt.f32.partialorder %v1127, 0.0
        %vm1428 = vcmp.gt.f32.partialorder %v1130, 0.0
        %vm1429 = vcmp.gt.f32.partialorder %v1135, 0.0
        %vm1430 = vcmp.gt.f32.partialorder %v1138, 0.0
        %vm1431 = vcmp.gt.f32.partialorder %v1143, 0.0
        %vm1432 = vcmp.gt.f32.partialorder %v1146, 0.0
        %vm1433 = vcmp.gt.f32.partialorder %v1151, 0.0
        %vm1434 = vcmp.gt.f32.partialorder %v1154, 0.0
        %vm1435 = vcmp.gt.f32.partialorder %v1159, 0.0
        %vm1436 = vcmp.gt.f32.partialorder %v1162, 0.0
        %vm1437 = vcmp.gt.f32.partialorder %v1167, 0.0
        %vm1438 = vcmp.gt.f32.partialorder %v1170, 0.0
        %vm1439 = vcmp.gt.f32.partialorder %v1175, 0.0
        %vm1440 = vcmp.gt.f32.partialorder %v1178, 0.0
        %vm1441 = vcmp.gt.f32.partialorder %v1183, 0.0
        %vm1442 = vcmp.gt.f32.partialorder %v1186, 0.0
        %vm1443 = vcmp.gt.f32.partialorder %v1191, 0.0
        %vm1444 = vcmp.gt.f32.partialorder %v1194, 0.0
        %vm1445 = vcmp.gt.f32.partialorder %v1199, 0.0
        %vm1446 = vcmp.gt.f32.partialorder %v1202, 0.0
        %vm1447 = vcmp.gt.f32.partialorder %v1207, 0.0
        %vm1448 = vcmp.gt.f32.partialorder %v1210, 0.0
        %vm1449 = vcmp.gt.f32.partialorder %v1215, 0.0
        %vm1450 = vcmp.gt.f32.partialorder %v1218, 0.0
        %vm1451 = vcmp.gt.f32.partialorder %v1223, 0.0
        %vm1452 = vcmp.gt.f32.partialorder %v1226, 0.0
        %vm1453 = vcmp.gt.f32.partialorder %v1231, 0.0
        %vm1454 = vcmp.gt.f32.partialorder %v1234, 0.0
        %vm1455 = vcmp.gt.f32.partialorder %v1239, 0.0
        %vm1456 = vcmp.gt.f32.partialorder %v1242, 0.0
        %vm1457 = vcmp.gt.f32.partialorder %v1247, 0.0
        %vm1458 = vcmp.gt.f32.partialorder %v1250, 0.0
        %vm1459 = vcmp.gt.f32.partialorder %v1255, 0.0
        %vm1460 = vcmp.gt.f32.partialorder %v1258, 0.0
        %vm1461 = vcmp.gt.f32.partialorder %v1263, 0.0
        %vm1462 = vcmp.gt.f32.partialorder %v1266, 0.0
        %vm1463 = vcmp.gt.f32.partialorder %v1271, 0.0
        %vm1464 = vcmp.gt.f32.partialorder %v1274, 0.0
        %vm1465 = vcmp.gt.f32.partialorder %v1279, 0.0
        %vm1466 = vcmp.gt.f32.partialorder %v1282, 0.0
        %vm1467 = vcmp.gt.f32.partialorder %v1287, 0.0
        %vm1468 = vcmp.gt.f32.partialorder %v1290, 0.0
        %vm1469 = vcmp.gt.f32.partialorder %v1295, 0.0
        %vm1470 = vcmp.gt.f32.partialorder %v1298, 0.0
        %vm1471 = vcmp.gt.f32.partialorder %v1303, 0.0
        %vm1472 = vcmp.gt.f32.partialorder %v1306, 0.0
        %vm1473 = vcmp.gt.f32.partialorder %v1311, 0.0
        %vm1474 = vcmp.gt.f32.partialorder %v1314, 0.0
        %vm1475 = vcmp.gt.f32.partialorder %v1319, 0.0
        %vm1476 = vcmp.gt.f32.partialorder %v1322, 0.0
        %vm1477 = vcmp.gt.f32.partialorder %v1327, 0.0
        %vm1478 = vcmp.gt.f32.partialorder %v1330, 0.0
        %vm1479 = vcmp.gt.f32.partialorder %v1335, 0.0
        %vm1480 = vcmp.gt.f32.partialorder %v1338, 0.0
        %vm1481 = vcmp.gt.f32.partialorder %v1343, 0.0
        %vm1482 = vcmp.gt.f32.partialorder %v1346, 0.0
        %vm1483 = vcmp.gt.f32.partialorder %v1351, 0.0
        %vm1484 = vcmp.gt.f32.partialorder %v1354, 0.0
        %v1485 = vmul.f32 %v847, 0.2
        %v1486 = vmul.f32 %v850, 0.2
        %v1487 = vmul.f32 %v855, 0.2
        %v1488 = vmul.f32 %v858, 0.2
        %v1489 = vmul.f32 %v863, 0.2
        %v1490 = vmul.f32 %v866, 0.2
        %v1491 = vmul.f32 %v871, 0.2
        %v1492 = vmul.f32 %v874, 0.2
        %v1493 = vmul.f32 %v879, 0.2
        %v1494 = vmul.f32 %v882, 0.2
        %v1495 = vmul.f32 %v887, 0.2
        %v1496 = vmul.f32 %v890, 0.2
        %v1497 = vmul.f32 %v895, 0.2
        %v1498 = vmul.f32 %v898, 0.2
        %v1499 = vmul.f32 %v903, 0.2
        %v1500 = vmul.f32 %v906, 0.2
        %v1501 = vmul.f32 %v911, 0.2
        %v1502 = vmul.f32 %v914, 0.2
        %v1503 = vmul.f32 %v919, 0.2
        %v1504 = vmul.f32 %v922, 0.2
        %v1505 = vmul.f32 %v927, 0.2
        %v1506 = vmul.f32 %v930, 0.2
        %v1507 = vmul.f32 %v935, 0.2
        %v1508 = vmul.f32 %v938, 0.2
        %v1509 = vmul.f32 %v943, 0.2
        %v1510 = vmul.f32 %v946, 0.2
        %v1511 = vmul.f32 %v951, 0.2
        %v1512 = vmul.f32 %v954, 0.2
        %v1513 = vmul.f32 %v959, 0.2
        %v1514 = vmul.f32 %v962, 0.2
        %v1515 = vmul.f32 %v967, 0.2
        %v1516 = vmul.f32 %v970, 0.2
        %v1517 = vmul.f32 %v975, 0.2
        %v1518 = vmul.f32 %v978, 0.2
        %v1519 = vmul.f32 %v983, 0.2
        %v1520 = vmul.f32 %v986, 0.2
        %v1521 = vmul.f32 %v991, 0.2
        %v1522 = vmul.f32 %v994, 0.2
        %v1523 = vmul.f32 %v999, 0.2
        %v1524 = vmul.f32 %v1002, 0.2
        %v1525 = vmul.f32 %v1007, 0.2
        %v1526 = vmul.f32 %v1010, 0.2
        %v1527 = vmul.f32 %v1015, 0.2
        %v1528 = vmul.f32 %v1018, 0.2
        %v1529 = vmul.f32 %v1023, 0.2
        %v1530 = vmul.f32 %v1026, 0.2
        %v1531 = vmul.f32 %v1031, 0.2
        %v1532 = vmul.f32 %v1034, 0.2
        %v1533 = vmul.f32 %v1039, 0.2
        %v1534 = vmul.f32 %v1042, 0.2
        %v1535 = vmul.f32 %v1047, 0.2
        %v1536 = vmul.f32 %v1050, 0.2
        %v1537 = vmul.f32 %v1055, 0.2
        %v1538 = vmul.f32 %v1058, 0.2
        %v1539 = vmul.f32 %v1063, 0.2
        %v1540 = vmul.f32 %v1066, 0.2
        %v1541 = vmul.f32 %v1071, 0.2
        %v1542 = vmul.f32 %v1074, 0.2
        %v1543 = vmul.f32 %v1079, 0.2
        %v1544 = vmul.f32 %v1082, 0.2
        %v1545 = vmul.f32 %v1087, 0.2
        %v1546 = vmul.f32 %v1090, 0.2
        %v1547 = vmul.f32 %v1095, 0.2
        %v1548 = vmul.f32 %v1098, 0.2
        %v1549 = vmul.f32 %v1103, 0.2
        %v1550 = vmul.f32 %v1106, 0.2
        %v1551 = vmul.f32 %v1111, 0.2
        %v1552 = vmul.f32 %v1114, 0.2
        %v1553 = vmul.f32 %v1119, 0.2
        %v1554 = vmul.f32 %v1122, 0.2
        %v1555 = vmul.f32 %v1127, 0.2
        %v1556 = vmul.f32 %v1130, 0.2
        %v1557 = vmul.f32 %v1135, 0.2
        %v1558 = vmul.f32 %v1138, 0.2
        %v1559 = vmul.f32 %v1143, 0.2
        %v1560 = vmul.f32 %v1146, 0.2
        %v1561 = vmul.f32 %v1151, 0.2
        %v1562 = vmul.f32 %v1154, 0.2
        %v1563 = vmul.f32 %v1159, 0.2
        %v1564 = vmul.f32 %v1162, 0.2
        %v1565 = vmul.f32 %v1167, 0.2
        %v1566 = vmul.f32 %v1170, 0.2
        %v1567 = vmul.f32 %v1175, 0.2
        %v1568 = vmul.f32 %v1178, 0.2
        %v1569 = vmul.f32 %v1183, 0.2
        %v1570 = vmul.f32 %v1186, 0.2
        %v1571 = vmul.f32 %v1191, 0.2
        %v1572 = vmul.f32 %v1194, 0.2
        %v1573 = vmul.f32 %v1199, 0.2
        %v1574 = vmul.f32 %v1202, 0.2
        %v1575 = vmul.f32 %v1207, 0.2
        %v1576 = vmul.f32 %v1210, 0.2
        %v1577 = vmul.f32 %v1215, 0.2
        %v1578 = vmul.f32 %v1218, 0.2
        %v1579 = vmul.f32 %v1223, 0.2
        %v1580 = vmul.f32 %v1226, 0.2
        %v1581 = vmul.f32 %v1231, 0.2
        %v1582 = vmul.f32 %v1234, 0.2
        %v1583 = vmul.f32 %v1239, 0.2
        %v1584 = vmul.f32 %v1242, 0.2
        %v1585 = vmul.f32 %v1247, 0.2
        %v1586 = vmul.f32 %v1250, 0.2
        %v1587 = vmul.f32 %v1255, 0.2
        %v1588 = vmul.f32 %v1258, 0.2
        %v1589 = vmul.f32 %v1263, 0.2
        %v1590 = vmul.f32 %v1266, 0.2
        %v1591 = vmul.f32 %v1271, 0.2
        %v1592 = vmul.f32 %v1274, 0.2
        %v1593 = vmul.f32 %v1279, 0.2
        %v1594 = vmul.f32 %v1282, 0.2
        %v1595 = vmul.f32 %v1287, 0.2
        %v1596 = vmul.f32 %v1290, 0.2
        %v1597 = vmul.f32 %v1295, 0.2
        %v1598 = vmul.f32 %v1298, 0.2
        %v1599 = vmul.f32 %v1303, 0.2
        %v1600 = vmul.f32 %v1306, 0.2
        %v1601 = vmul.f32 %v1311, 0.2
        %v1602 = vmul.f32 %v1314, 0.2
        %v1603 = vmul.f32 %v1319, 0.2
        %v1604 = vmul.f32 %v1322, 0.2
        %v1605 = vmul.f32 %v1327, 0.2
        %v1606 = vmul.f32 %v1330, 0.2
        %v1607 = vmul.f32 %v1335, 0.2
        %v1608 = vmul.f32 %v1338, 0.2
        %v1609 = vmul.f32 %v1343, 0.2
        %v1610 = vmul.f32 %v1346, 0.2
        %v1611 = vmul.f32 %v1351, 0.2
        %v1612 = vmul.f32 %v1354, 0.2
        %v1613 = vsel %vm1357, %v847, %v1485
        %v1614 = vsel %vm1358, %v850, %v1486
        %v1615 = vsel %vm1359, %v855, %v1487
        %v1616 = vsel %vm1360, %v858, %v1488
        %v1617 = vsel %vm1361, %v863, %v1489
        %v1618 = vsel %vm1362, %v866, %v1490
        %v1619 = vsel %vm1363, %v871, %v1491
        %v1620 = vsel %vm1364, %v874, %v1492
        %v1621 = vsel %vm1365, %v879, %v1493
        %v1622 = vsel %vm1366, %v882, %v1494
        %v1623 = vsel %vm1367, %v887, %v1495
        %v1624 = vsel %vm1368, %v890, %v1496
        %v1625 = vsel %vm1369, %v895, %v1497
        %v1626 = vsel %vm1370, %v898, %v1498
        %v1627 = vsel %vm1371, %v903, %v1499
        %v1628 = vsel %vm1372, %v906, %v1500
        %v1629 = vsel %vm1373, %v911, %v1501
        %v1630 = vsel %vm1374, %v914, %v1502
        %v1631 = vsel %vm1375, %v919, %v1503
        %v1632 = vsel %vm1376, %v922, %v1504
        %v1633 = vsel %vm1377, %v927, %v1505
        %v1634 = vsel %vm1378, %v930, %v1506
        %v1635 = vsel %vm1379, %v935, %v1507
        %v1636 = vsel %vm1380, %v938, %v1508
        %v1637 = vsel %vm1381, %v943, %v1509
        %v1638 = vsel %vm1382, %v946, %v1510
        %v1639 = vsel %vm1383, %v951, %v1511
        %v1640 = vsel %vm1384, %v954, %v1512
        %v1641 = vsel %vm1385, %v959, %v1513
        %v1642 = vsel %vm1386, %v962, %v1514
        %v1643 = vsel %vm1387, %v967, %v1515
        %v1644 = vsel %vm1388, %v970, %v1516
        %v1645 = vsel %vm1389, %v975, %v1517
        %v1646 = vsel %vm1390, %v978, %v1518
        %v1647 = vsel %vm1391, %v983, %v1519
        %v1648 = vsel %vm1392, %v986, %v1520
        %v1649 = vsel %vm1393, %v991, %v1521
        %v1650 = vsel %vm1394, %v994, %v1522
        %v1651 = vsel %vm1395, %v999, %v1523
        %v1652 = vsel %vm1396, %v1002, %v1524
        %v1653 = vsel %vm1397, %v1007, %v1525
        %v1654 = vsel %vm1398, %v1010, %v1526
        %v1655 = vsel %vm1399, %v1015, %v1527
        %v1656 = vsel %vm1400, %v1018, %v1528
        %v1657 = vsel %vm1401, %v1023, %v1529
        %v1658 = vsel %vm1402, %v1026, %v1530
        %v1659 = vsel %vm1403, %v1031, %v1531
        %v1660 = vsel %vm1404, %v1034, %v1532
        %v1661 = vsel %vm1405, %v1039, %v1533
        %v1662 = vsel %vm1406, %v1042, %v1534
        %v1663 = vsel %vm1407, %v1047, %v1535
        %v1664 = vsel %vm1408, %v1050, %v1536
        %v1665 = vsel %vm1409, %v1055, %v1537
        %v1666 = vsel %vm1410, %v1058, %v1538
        %v1667 = vsel %vm1411, %v1063, %v1539
        %v1668 = vsel %vm1412, %v1066, %v1540
        %v1669 = vsel %vm1413, %v1071, %v1541
        %v1670 = vsel %vm1414, %v1074, %v1542
        %v1671 = vsel %vm1415, %v1079, %v1543
        %v1672 = vsel %vm1416, %v1082, %v1544
        %v1673 = vsel %vm1417, %v1087, %v1545
        %v1674 = vsel %vm1418, %v1090, %v1546
        %v1675 = vsel %vm1419, %v1095, %v1547
        %v1676 = vsel %vm1420, %v1098, %v1548
        %v1677 = vsel %vm1421, %v1103, %v1549
        %v1678 = vsel %vm1422, %v1106, %v1550
        %v1679 = vsel %vm1423, %v1111, %v1551
        %v1680 = vsel %vm1424, %v1114, %v1552
        %v1681 = vsel %vm1425, %v1119, %v1553
        %v1682 = vsel %vm1426, %v1122, %v1554
        %v1683 = vsel %vm1427, %v1127, %v1555
        %v1684 = vsel %vm1428, %v1130, %v1556
        %v1685 = vsel %vm1429, %v1135, %v1557
        %v1686 = vsel %vm1430, %v1138, %v1558
        %v1687 = vsel %vm1431, %v1143, %v1559
        %v1688 = vsel %vm1432, %v1146, %v1560
        %v1689 = vsel %vm1433, %v1151, %v1561
        %v1690 = vsel %vm1434, %v1154, %v1562
        %v1691 = vsel %vm1435, %v1159, %v1563
        %v1692 = vsel %vm1436, %v1162, %v1564
        %v1693 = vsel %vm1437, %v1167, %v1565
        %v1694 = vsel %vm1438, %v1170, %v1566
        %v1695 = vsel %vm1439, %v1175, %v1567
        %v1696 = vsel %vm1440, %v1178, %v1568
        %v1697 = vsel %vm1441, %v1183, %v1569
        %v1698 = vsel %vm1442, %v1186, %v1570
        %v1699 = vsel %vm1443, %v1191, %v1571
        %v1700 = vsel %vm1444, %v1194, %v1572
        %v1701 = vsel %vm1445, %v1199, %v1573
        %v1702 = vsel %vm1446, %v1202, %v1574
        %v1703 = vsel %vm1447, %v1207, %v1575
        %v1704 = vsel %vm1448, %v1210, %v1576
        %v1705 = vsel %vm1449, %v1215, %v1577
        %v1706 = vsel %vm1450, %v1218, %v1578
        %v1707 = vsel %vm1451, %v1223, %v1579
        %v1708 = vsel %vm1452, %v1226, %v1580
        %v1709 = vsel %vm1453, %v1231, %v1581
        %v1710 = vsel %vm1454, %v1234, %v1582
        %v1711 = vsel %vm1455, %v1239, %v1583
        %v1712 = vsel %vm1456, %v1242, %v1584
        %v1713 = vsel %vm1457, %v1247, %v1585
        %v1714 = vsel %vm1458, %v1250, %v1586
        %v1715 = vsel %vm1459, %v1255, %v1587
        %v1716 = vsel %vm1460, %v1258, %v1588
        %v1717 = vsel %vm1461, %v1263, %v1589
        %v1718 = vsel %vm1462, %v1266, %v1590
        %v1719 = vsel %vm1463, %v1271, %v1591
        %v1720 = vsel %vm1464, %v1274, %v1592
        %v1721 = vsel %vm1465, %v1279, %v1593
        %v1722 = vsel %vm1466, %v1282, %v1594
        %v1723 = vsel %vm1467, %v1287, %v1595
        %v1724 = vsel %vm1468, %v1290, %v1596
        %v1725 = vsel %vm1469, %v1295, %v1597
        %v1726 = vsel %vm1470, %v1298, %v1598
        %v1727 = vsel %vm1471, %v1303, %v1599
        %v1728 = vsel %vm1472, %v1306, %v1600
        %v1729 = vsel %vm1473, %v1311, %v1601
        %v1730 = vsel %vm1474, %v1314, %v1602
        %v1731 = vsel %vm1475, %v1319, %v1603
        %v1732 = vsel %vm1476, %v1322, %v1604
        %v1733 = vsel %vm1477, %v1327, %v1605
        %v1734 = vsel %vm1478, %v1330, %v1606
        %v1735 = vsel %vm1479, %v1335, %v1607
        %v1736 = vsel %vm1480, %v1338, %v1608
        %v1737 = vsel %vm1481, %v1343, %v1609
        %v1738 = vsel %vm1482, %v1346, %v1610
        %v1739 = vsel %vm1483, %v1351, %v1611
        %v1740 = vsel %vm1484, %v1354, %v1612
        %v1741 = vpack.c.bf16 %v1614, %v1613
        %v1742 = vpack.c.bf16 %v1616, %v1615
        %v1743 = vpack.c.bf16 %v1618, %v1617
        %v1744 = vpack.c.bf16 %v1620, %v1619
        %v1745 = vpack.c.bf16 %v1622, %v1621
        %v1746 = vpack.c.bf16 %v1624, %v1623
        %v1747 = vpack.c.bf16 %v1626, %v1625
        %v1748 = vpack.c.bf16 %v1628, %v1627
        %v1749 = vpack.c.bf16 %v1630, %v1629
        %v1750 = vpack.c.bf16 %v1632, %v1631
        %v1751 = vpack.c.bf16 %v1634, %v1633
        %v1752 = vpack.c.bf16 %v1636, %v1635
        %v1753 = vpack.c.bf16 %v1638, %v1637
        %v1754 = vpack.c.bf16 %v1640, %v1639
        %v1755 = vpack.c.bf16 %v1642, %v1641
        %v1756 = vpack.c.bf16 %v1644, %v1643
        %v1757 = vpack.c.bf16 %v1646, %v1645
        %v1758 = vpack.c.bf16 %v1648, %v1647
        %v1759 = vpack.c.bf16 %v1650, %v1649
        %v1760 = vpack.c.bf16 %v1652, %v1651
        %v1761 = vpack.c.bf16 %v1654, %v1653
        %v1762 = vpack.c.bf16 %v1656, %v1655
        %v1763 = vpack.c.bf16 %v1658, %v1657
        %v1764 = vpack.c.bf16 %v1660, %v1659
        %v1765 = vpack.c.bf16 %v1662, %v1661
        %v1766 = vpack.c.bf16 %v1664, %v1663
        %v1767 = vpack.c.bf16 %v1666, %v1665
        %v1768 = vpack.c.bf16 %v1668, %v1667
        %v1769 = vpack.c.bf16 %v1670, %v1669
        %v1770 = vpack.c.bf16 %v1672, %v1671
        %v1771 = vpack.c.bf16 %v1674, %v1673
        %v1772 = vpack.c.bf16 %v1676, %v1675
        %v1773 = vpack.c.bf16 %v1678, %v1677
        %v1774 = vpack.c.bf16 %v1680, %v1679
        %v1775 = vpack.c.bf16 %v1682, %v1681
        %v1776 = vpack.c.bf16 %v1684, %v1683
        %v1777 = vpack.c.bf16 %v1686, %v1685
        %v1778 = vpack.c.bf16 %v1688, %v1687
        %v1779 = vpack.c.bf16 %v1690, %v1689
        %v1780 = vpack.c.bf16 %v1692, %v1691
        %v1781 = vpack.c.bf16 %v1694, %v1693
        %v1782 = vpack.c.bf16 %v1696, %v1695
        %v1783 = vpack.c.bf16 %v1698, %v1697
        %v1784 = vpack.c.bf16 %v1700, %v1699
        %v1785 = vpack.c.bf16 %v1702, %v1701
        %v1786 = vpack.c.bf16 %v1704, %v1703
        %v1787 = vpack.c.bf16 %v1706, %v1705
        %v1788 = vpack.c.bf16 %v1708, %v1707
        %v1789 = vpack.c.bf16 %v1710, %v1709
        %v1790 = vpack.c.bf16 %v1712, %v1711
        %v1791 = vpack.c.bf16 %v1714, %v1713
        %v1792 = vpack.c.bf16 %v1716, %v1715
        %v1793 = vpack.c.bf16 %v1718, %v1717
        %v1794 = vpack.c.bf16 %v1720, %v1719
        %v1795 = vpack.c.bf16 %v1722, %v1721
        %v1796 = vpack.c.bf16 %v1724, %v1723
        %v1797 = vpack.c.bf16 %v1726, %v1725
        %v1798 = vpack.c.bf16 %v1728, %v1727
        %v1799 = vpack.c.bf16 %v1730, %v1729
        %v1800 = vpack.c.bf16 %v1732, %v1731
        %v1801 = vpack.c.bf16 %v1734, %v1733
        %v1802 = vpack.c.bf16 %v1736, %v1735
        %v1803 = vpack.c.bf16 %v1738, %v1737
        %v1804 = vpack.c.bf16 %v1740, %v1739
        %v1869 = vunpack.c.l.b16 %v1741
        %v1870 = vunpack.c.h.b16 %v1741
        %v1871 = vunpack.c.l.b16 %v1742
        %v1872 = vunpack.c.h.b16 %v1742
        %v1873 = vunpack.c.l.b16 %v1743
        %v1874 = vunpack.c.h.b16 %v1743
        %v1875 = vunpack.c.l.b16 %v1744
        %v1876 = vunpack.c.h.b16 %v1744
        %v1877 = vunpack.c.l.b16 %v1745
        %v1878 = vunpack.c.h.b16 %v1745
        %v1879 = vunpack.c.l.b16 %v1746
        %v1880 = vunpack.c.h.b16 %v1746
        %v1881 = vunpack.c.l.b16 %v1747
        %v1882 = vunpack.c.h.b16 %v1747
        %v1883 = vunpack.c.l.b16 %v1748
        %v1884 = vunpack.c.h.b16 %v1748
        %v1885 = vunpack.c.l.b16 %v1749
        %v1886 = vunpack.c.h.b16 %v1749
        %v1887 = vunpack.c.l.b16 %v1750
        %v1888 = vunpack.c.h.b16 %v1750
        %v1889 = vunpack.c.l.b16 %v1751
        %v1890 = vunpack.c.h.b16 %v1751
        %v1891 = vunpack.c.l.b16 %v1752
        %v1892 = vunpack.c.h.b16 %v1752
        %v1893 = vunpack.c.l.b16 %v1753
        %v1894 = vunpack.c.h.b16 %v1753
        %v1895 = vunpack.c.l.b16 %v1754
        %v1896 = vunpack.c.h.b16 %v1754
        %v1897 = vunpack.c.l.b16 %v1755
        %v1898 = vunpack.c.h.b16 %v1755
        %v1899 = vunpack.c.l.b16 %v1756
        %v1900 = vunpack.c.h.b16 %v1756
        %v1901 = vunpack.c.l.b16 %v1757
        %v1902 = vunpack.c.h.b16 %v1757
        %v1903 = vunpack.c.l.b16 %v1758
        %v1904 = vunpack.c.h.b16 %v1758
        %v1905 = vunpack.c.l.b16 %v1759
        %v1906 = vunpack.c.h.b16 %v1759
        %v1907 = vunpack.c.l.b16 %v1760
        %v1908 = vunpack.c.h.b16 %v1760
        %v1909 = vunpack.c.l.b16 %v1761
        %v1910 = vunpack.c.h.b16 %v1761
        %v1911 = vunpack.c.l.b16 %v1762
        %v1912 = vunpack.c.h.b16 %v1762
        %v1913 = vunpack.c.l.b16 %v1763
        %v1914 = vunpack.c.h.b16 %v1763
        %v1915 = vunpack.c.l.b16 %v1764
        %v1916 = vunpack.c.h.b16 %v1764
        %v1917 = vunpack.c.l.b16 %v1765
        %v1918 = vunpack.c.h.b16 %v1765
        %v1919 = vunpack.c.l.b16 %v1766
        %v1920 = vunpack.c.h.b16 %v1766
        %v1921 = vunpack.c.l.b16 %v1767
        %v1922 = vunpack.c.h.b16 %v1767
        %v1923 = vunpack.c.l.b16 %v1768
        %v1924 = vunpack.c.h.b16 %v1768
        %v1925 = vunpack.c.l.b16 %v1769
        %v1926 = vunpack.c.h.b16 %v1769
        %v1927 = vunpack.c.l.b16 %v1770
        %v1928 = vunpack.c.h.b16 %v1770
        %v1929 = vunpack.c.l.b16 %v1771
        %v1930 = vunpack.c.h.b16 %v1771
        %v1931 = vunpack.c.l.b16 %v1772
        %v1932 = vunpack.c.h.b16 %v1772
        %v1933 = vunpack.c.l.b16 %v1773
        %v1934 = vunpack.c.h.b16 %v1773
        %v1935 = vunpack.c.l.b16 %v1774
        %v1936 = vunpack.c.h.b16 %v1774
        %v1937 = vunpack.c.l.b16 %v1775
        %v1938 = vunpack.c.h.b16 %v1775
        %v1939 = vunpack.c.l.b16 %v1776
        %v1940 = vunpack.c.h.b16 %v1776
        %v1941 = vunpack.c.l.b16 %v1777
        %v1942 = vunpack.c.h.b16 %v1777
        %v1943 = vunpack.c.l.b16 %v1778
        %v1944 = vunpack.c.h.b16 %v1778
        %v1945 = vunpack.c.l.b16 %v1779
        %v1946 = vunpack.c.h.b16 %v1779
        %v1947 = vunpack.c.l.b16 %v1780
        %v1948 = vunpack.c.h.b16 %v1780
        %v1949 = vunpack.c.l.b16 %v1781
        %v1950 = vunpack.c.h.b16 %v1781
        %v1951 = vunpack.c.l.b16 %v1782
        %v1952 = vunpack.c.h.b16 %v1782
        %v1953 = vunpack.c.l.b16 %v1783
        %v1954 = vunpack.c.h.b16 %v1783
        %v1955 = vunpack.c.l.b16 %v1784
        %v1956 = vunpack.c.h.b16 %v1784
        %v1957 = vunpack.c.l.b16 %v1785
        %v1958 = vunpack.c.h.b16 %v1785
        %v1959 = vunpack.c.l.b16 %v1786
        %v1960 = vunpack.c.h.b16 %v1786
        %v1961 = vunpack.c.l.b16 %v1787
        %v1962 = vunpack.c.h.b16 %v1787
        %v1963 = vunpack.c.l.b16 %v1788
        %v1964 = vunpack.c.h.b16 %v1788
        %v1965 = vunpack.c.l.b16 %v1789
        %v1966 = vunpack.c.h.b16 %v1789
        %v1967 = vunpack.c.l.b16 %v1790
        %v1968 = vunpack.c.h.b16 %v1790
        %v1969 = vunpack.c.l.b16 %v1791
        %v1970 = vunpack.c.h.b16 %v1791
        %v1971 = vunpack.c.l.b16 %v1792
        %v1972 = vunpack.c.h.b16 %v1792
        %v1973 = vunpack.c.l.b16 %v1793
        %v1974 = vunpack.c.h.b16 %v1793
        %v1975 = vunpack.c.l.b16 %v1794
        %v1976 = vunpack.c.h.b16 %v1794
        %v1977 = vunpack.c.l.b16 %v1795
        %v1978 = vunpack.c.h.b16 %v1795
        %v1979 = vunpack.c.l.b16 %v1796
        %v1980 = vunpack.c.h.b16 %v1796
        %v1981 = vunpack.c.l.b16 %v1797
        %v1982 = vunpack.c.h.b16 %v1797
        %v1983 = vunpack.c.l.b16 %v1798
        %v1984 = vunpack.c.h.b16 %v1798
        %v1985 = vunpack.c.l.b16 %v1799
        %v1986 = vunpack.c.h.b16 %v1799
        %v1987 = vunpack.c.l.b16 %v1800
        %v1988 = vunpack.c.h.b16 %v1800
        %v1989 = vunpack.c.l.b16 %v1801
        %v1990 = vunpack.c.h.b16 %v1801
        %v1991 = vunpack.c.l.b16 %v1802
        %v1992 = vunpack.c.h.b16 %v1802
        %v1993 = vunpack.c.l.b16 %v1803
        %v1994 = vunpack.c.h.b16 %v1803
        %v1995 = vunpack.c.l.b16 %v1804
        %v1996 = vunpack.c.h.b16 %v1804
        %v1997 = vpack.c.b16 %v1869, %v1869
        %v1998 = vpack.c.b16 %v1870, %v1870
        %v1999 = vpack.c.b16 %v1871, %v1871
        %v2000 = vpack.c.b16 %v1872, %v1872
        %v2001 = vpack.c.b16 %v1873, %v1873
        %v2002 = vpack.c.b16 %v1874, %v1874
        %v2003 = vpack.c.b16 %v1875, %v1875
        %v2004 = vpack.c.b16 %v1876, %v1876
        %v2005 = vpack.c.b16 %v1877, %v1877
        %v2006 = vpack.c.b16 %v1878, %v1878
        %v2007 = vpack.c.b16 %v1879, %v1879
        %v2008 = vpack.c.b16 %v1880, %v1880
        %v2009 = vpack.c.b16 %v1881, %v1881
        %v2010 = vpack.c.b16 %v1882, %v1882
        %v2011 = vpack.c.b16 %v1883, %v1883
        %v2012 = vpack.c.b16 %v1884, %v1884
        %v2013 = vpack.c.b16 %v1885, %v1885
        %v2014 = vpack.c.b16 %v1886, %v1886
        %v2015 = vpack.c.b16 %v1887, %v1887
        %v2016 = vpack.c.b16 %v1888, %v1888
        %v2017 = vpack.c.b16 %v1889, %v1889
        %v2018 = vpack.c.b16 %v1890, %v1890
        %v2019 = vpack.c.b16 %v1891, %v1891
        %v2020 = vpack.c.b16 %v1892, %v1892
        %v2021 = vpack.c.b16 %v1893, %v1893
        %v2022 = vpack.c.b16 %v1894, %v1894
        %v2023 = vpack.c.b16 %v1895, %v1895
        %v2024 = vpack.c.b16 %v1896, %v1896
        %v2025 = vpack.c.b16 %v1897, %v1897
        %v2026 = vpack.c.b16 %v1898, %v1898
        %v2027 = vpack.c.b16 %v1899, %v1899
        %v2028 = vpack.c.b16 %v1900, %v1900
        %v2029 = vpack.c.b16 %v1901, %v1901
        %v2030 = vpack.c.b16 %v1902, %v1902
        %v2031 = vpack.c.b16 %v1903, %v1903
        %v2032 = vpack.c.b16 %v1904, %v1904
        %v2033 = vpack.c.b16 %v1905, %v1905
        %v2034 = vpack.c.b16 %v1906, %v1906
        %v2035 = vpack.c.b16 %v1907, %v1907
        %v2036 = vpack.c.b16 %v1908, %v1908
        %v2037 = vpack.c.b16 %v1909, %v1909
        %v2038 = vpack.c.b16 %v1910, %v1910
        %v2039 = vpack.c.b16 %v1911, %v1911
        %v2040 = vpack.c.b16 %v1912, %v1912
        %v2041 = vpack.c.b16 %v1913, %v1913
        %v2042 = vpack.c.b16 %v1914, %v1914
        %v2043 = vpack.c.b16 %v1915, %v1915
        %v2044 = vpack.c.b16 %v1916, %v1916
        %v2045 = vpack.c.b16 %v1917, %v1917
        %v2046 = vpack.c.b16 %v1918, %v1918
        %v2047 = vpack.c.b16 %v1919, %v1919
        %v2048 = vpack.c.b16 %v1920, %v1920
        %v2049 = vpack.c.b16 %v1921, %v1921
        %v2050 = vpack.c.b16 %v1922, %v1922
        %v2051 = vpack.c.b16 %v1923, %v1923
        %v2052 = vpack.c.b16 %v1924, %v1924
        %v2053 = vpack.c.b16 %v1925, %v1925
        %v2054 = vpack.c.b16 %v1926, %v1926
        %v2055 = vpack.c.b16 %v1927, %v1927
        %v2056 = vpack.c.b16 %v1928, %v1928
        %v2057 = vpack.c.b16 %v1929, %v1929
        %v2058 = vpack.c.b16 %v1930, %v1930
        %v2059 = vpack.c.b16 %v1931, %v1931
        %v2060 = vpack.c.b16 %v1932, %v1932
        %v2061 = vpack.c.b16 %v1933, %v1933
        %v2062 = vpack.c.b16 %v1934, %v1934
        %v2063 = vpack.c.b16 %v1935, %v1935
        %v2064 = vpack.c.b16 %v1936, %v1936
        %v2065 = vpack.c.b16 %v1937, %v1937
        %v2066 = vpack.c.b16 %v1938, %v1938
        %v2067 = vpack.c.b16 %v1939, %v1939
        %v2068 = vpack.c.b16 %v1940, %v1940
        %v2069 = vpack.c.b16 %v1941, %v1941
        %v2070 = vpack.c.b16 %v1942, %v1942
        %v2071 = vpack.c.b16 %v1943, %v1943
        %v2072 = vpack.c.b16 %v1944, %v1944
        %v2073 = vpack.c.b16 %v1945, %v1945
        %v2074 = vpack.c.b16 %v1946, %v1946
        %v2075 = vpack.c.b16 %v1947, %v1947
        %v2076 = vpack.c.b16 %v1948, %v1948
        %v2077 = vpack.c.b16 %v1949, %v1949
        %v2078 = vpack.c.b16 %v1950, %v1950
        %v2079 = vpack.c.b16 %v1951, %v1951
        %v2080 = vpack.c.b16 %v1952, %v1952
        %v2081 = vpack.c.b16 %v1953, %v1953
        %v2082 = vpack.c.b16 %v1954, %v1954
        %v2083 = vpack.c.b16 %v1955, %v1955
        %v2084 = vpack.c.b16 %v1956, %v1956
        %v2085 = vpack.c.b16 %v1957, %v1957
        %v2086 = vpack.c.b16 %v1958, %v1958
        %v2087 = vpack.c.b16 %v1959, %v1959
        %v2088 = vpack.c.b16 %v1960, %v1960
        %v2089 = vpack.c.b16 %v1961, %v1961
        %v2090 = vpack.c.b16 %v1962, %v1962
        %v2091 = vpack.c.b16 %v1963, %v1963
        %v2092 = vpack.c.b16 %v1964, %v1964
        %v2093 = vpack.c.b16 %v1965, %v1965
        %v2094 = vpack.c.b16 %v1966, %v1966
        %v2095 = vpack.c.b16 %v1967, %v1967
        %v2096 = vpack.c.b16 %v1968, %v1968
        %v2097 = vpack.c.b16 %v1969, %v1969
        %v2098 = vpack.c.b16 %v1970, %v1970
        %v2099 = vpack.c.b16 %v1971, %v1971
        %v2100 = vpack.c.b16 %v1972, %v1972
        %v2101 = vpack.c.b16 %v1973, %v1973
        %v2102 = vpack.c.b16 %v1974, %v1974
        %v2103 = vpack.c.b16 %v1975, %v1975
        %v2104 = vpack.c.b16 %v1976, %v1976
        %v2105 = vpack.c.b16 %v1977, %v1977
        %v2106 = vpack.c.b16 %v1978, %v1978
        %v2107 = vpack.c.b16 %v1979, %v1979
        %v2108 = vpack.c.b16 %v1980, %v1980
        %v2109 = vpack.c.b16 %v1981, %v1981
        %v2110 = vpack.c.b16 %v1982, %v1982
        %v2111 = vpack.c.b16 %v1983, %v1983
        %v2112 = vpack.c.b16 %v1984, %v1984
        %v2113 = vpack.c.b16 %v1985, %v1985
        %v2114 = vpack.c.b16 %v1986, %v1986
        %v2115 = vpack.c.b16 %v1987, %v1987
        %v2116 = vpack.c.b16 %v1988, %v1988
        %v2117 = vpack.c.b16 %v1989, %v1989
        %v2118 = vpack.c.b16 %v1990, %v1990
        %v2119 = vpack.c.b16 %v1991, %v1991
        %v2120 = vpack.c.b16 %v1992, %v1992
        %v2121 = vpack.c.b16 %v1993, %v1993
        %v2122 = vpack.c.b16 %v1994, %v1994
        %v2123 = vpack.c.b16 %v1995, %v1995
        %v2124 = vpack.c.b16 %v1996, %v1996
        %vm2253 = vcmask 125952
        %2254 = vst.msk [vmem:[%s160] sm:$0xf] %vm2253, %v1997
        %2255 = vst.msk [vmem:[%s160 + $0x4] sm:$0xf] %vm2253, %v1998
        %2256 = vst.msk [vmem:[%s160 + $0x8] sm:$0xf] %vm2253, %v1999
        %2257 = vst.msk [vmem:[%s160 + $0xc] sm:$0xf] %vm2253, %v2000
        %2258 = vst.msk [vmem:[%s160 + $0x10] sm:$0xf] %vm2253, %v2001
        %2259 = vst.msk [vmem:[%s160 + $0x14] sm:$0xf] %vm2253, %v2002
        %2260 = vst.msk [vmem:[%s160 + $0x18] sm:$0xf] %vm2253, %v2003
        %2261 = vst.msk [vmem:[%s160 + $0x1c] sm:$0xf] %vm2253, %v2004
        %2262 = vst.msk [vmem:[%s160 + $0x20] sm:$0xf] %vm2253, %v2005
        %2263 = vst.msk [vmem:[%s160 + $0x24] sm:$0xf] %vm2253, %v2006
        %2264 = vst.msk [vmem:[%s160 + $0x28] sm:$0xf] %vm2253, %v2007
        %2265 = vst.msk [vmem:[%s160 + $0x2c] sm:$0xf] %vm2253, %v2008
        %2266 = vst.msk [vmem:[%s160 + $0x30] sm:$0xf] %vm2253, %v2009
        %2267 = vst.msk [vmem:[%s160 + $0x34] sm:$0xf] %vm2253, %v2010
        %2268 = vst.msk [vmem:[%s160 + $0x38] sm:$0xf] %vm2253, %v2011
        %2269 = vst.msk [vmem:[%s160 + $0x3c] sm:$0xf] %vm2253, %v2012
        %2270 = vst.msk [vmem:[%s160 + $0x40] sm:$0xf] %vm2253, %v2013
        %2271 = vst.msk [vmem:[%s160 + $0x44] sm:$0xf] %vm2253, %v2014
        %2272 = vst.msk [vmem:[%s160 + $0x48] sm:$0xf] %vm2253, %v2015
        %2273 = vst.msk [vmem:[%s160 + $0x4c] sm:$0xf] %vm2253, %v2016
        %2274 = vst.msk [vmem:[%s160 + $0x50] sm:$0xf] %vm2253, %v2017
        %2275 = vst.msk [vmem:[%s160 + $0x54] sm:$0xf] %vm2253, %v2018
        %2276 = vst.msk [vmem:[%s160 + $0x58] sm:$0xf] %vm2253, %v2019
        %2277 = vst.msk [vmem:[%s160 + $0x5c] sm:$0xf] %vm2253, %v2020
        %2278 = vst.msk [vmem:[%s160 + $0x60] sm:$0xf] %vm2253, %v2021
        %2279 = vst.msk [vmem:[%s160 + $0x64] sm:$0xf] %vm2253, %v2022
        %2280 = vst.msk [vmem:[%s160 + $0x68] sm:$0xf] %vm2253, %v2023
        %2281 = vst.msk [vmem:[%s160 + $0x6c] sm:$0xf] %vm2253, %v2024
        %2282 = vst.msk [vmem:[%s160 + $0x70] sm:$0xf] %vm2253, %v2025
        %2283 = vst.msk [vmem:[%s160 + $0x74] sm:$0xf] %vm2253, %v2026
        %2284 = vst.msk [vmem:[%s160 + $0x78] sm:$0xf] %vm2253, %v2027
        %2285 = vst.msk [vmem:[%s160 + $0x7c] sm:$0xf] %vm2253, %v2028
        %2286 = vst.msk [vmem:[%s160 + $0x80] sm:$0xf] %vm2253, %v2029
        %2287 = vst.msk [vmem:[%s160 + $0x84] sm:$0xf] %vm2253, %v2030
        %2288 = vst.msk [vmem:[%s160 + $0x88] sm:$0xf] %vm2253, %v2031
        %2289 = vst.msk [vmem:[%s160 + $0x8c] sm:$0xf] %vm2253, %v2032
        %2290 = vst.msk [vmem:[%s160 + $0x90] sm:$0xf] %vm2253, %v2033
        %2291 = vst.msk [vmem:[%s160 + $0x94] sm:$0xf] %vm2253, %v2034
        %2292 = vst.msk [vmem:[%s160 + $0x98] sm:$0xf] %vm2253, %v2035
        %2293 = vst.msk [vmem:[%s160 + $0x9c] sm:$0xf] %vm2253, %v2036
        %2294 = vst.msk [vmem:[%s160 + $0xa0] sm:$0xf] %vm2253, %v2037
        %2295 = vst.msk [vmem:[%s160 + $0xa4] sm:$0xf] %vm2253, %v2038
        %2296 = vst.msk [vmem:[%s160 + $0xa8] sm:$0xf] %vm2253, %v2039
        %2297 = vst.msk [vmem:[%s160 + $0xac] sm:$0xf] %vm2253, %v2040
        %2298 = vst.msk [vmem:[%s160 + $0xb0] sm:$0xf] %vm2253, %v2041
        %2299 = vst.msk [vmem:[%s160 + $0xb4] sm:$0xf] %vm2253, %v2042
        %2300 = vst.msk [vmem:[%s160 + $0xb8] sm:$0xf] %vm2253, %v2043
        %2301 = vst.msk [vmem:[%s160 + $0xbc] sm:$0xf] %vm2253, %v2044
        %2302 = vst.msk [vmem:[%s160 + $0xc0] sm:$0xf] %vm2253, %v2045
        %2303 = vst.msk [vmem:[%s160 + $0xc4] sm:$0xf] %vm2253, %v2046
        %2304 = vst.msk [vmem:[%s160 + $0xc8] sm:$0xf] %vm2253, %v2047
        %2305 = vst.msk [vmem:[%s160 + $0xcc] sm:$0xf] %vm2253, %v2048
        %2306 = vst.msk [vmem:[%s160 + $0xd0] sm:$0xf] %vm2253, %v2049
        %2307 = vst.msk [vmem:[%s160 + $0xd4] sm:$0xf] %vm2253, %v2050
        %2308 = vst.msk [vmem:[%s160 + $0xd8] sm:$0xf] %vm2253, %v2051
        %2309 = vst.msk [vmem:[%s160 + $0xdc] sm:$0xf] %vm2253, %v2052
        %2310 = vst.msk [vmem:[%s160 + $0xe0] sm:$0xf] %vm2253, %v2053
        %2311 = vst.msk [vmem:[%s160 + $0xe4] sm:$0xf] %vm2253, %v2054
        %2312 = vst.msk [vmem:[%s160 + $0xe8] sm:$0xf] %vm2253, %v2055
        %2313 = vst.msk [vmem:[%s160 + $0xec] sm:$0xf] %vm2253, %v2056
        %2314 = vst.msk [vmem:[%s160 + $0xf0] sm:$0xf] %vm2253, %v2057
        %2315 = vst.msk [vmem:[%s160 + $0xf4] sm:$0xf] %vm2253, %v2058
        %2316 = vst.msk [vmem:[%s160 + $0xf8] sm:$0xf] %vm2253, %v2059
        %2317 = vst.msk [vmem:[%s160 + $0xfc] sm:$0xf] %vm2253, %v2060
        %2318 = vst.msk [vmem:[%s160 + $0x100] sm:$0xf] %vm2253, %v2061
        %2319 = vst.msk [vmem:[%s160 + $0x104] sm:$0xf] %vm2253, %v2062
        %2320 = vst.msk [vmem:[%s160 + $0x108] sm:$0xf] %vm2253, %v2063
        %2321 = vst.msk [vmem:[%s160 + $0x10c] sm:$0xf] %vm2253, %v2064
        %2322 = vst.msk [vmem:[%s160 + $0x110] sm:$0xf] %vm2253, %v2065
        %2323 = vst.msk [vmem:[%s160 + $0x114] sm:$0xf] %vm2253, %v2066
        %2324 = vst.msk [vmem:[%s160 + $0x118] sm:$0xf] %vm2253, %v2067
        %2325 = vst.msk [vmem:[%s160 + $0x11c] sm:$0xf] %vm2253, %v2068
        %2326 = vst.msk [vmem:[%s160 + $0x120] sm:$0xf] %vm2253, %v2069
        %2327 = vst.msk [vmem:[%s160 + $0x124] sm:$0xf] %vm2253, %v2070
        %2328 = vst.msk [vmem:[%s160 + $0x128] sm:$0xf] %vm2253, %v2071
        %2329 = vst.msk [vmem:[%s160 + $0x12c] sm:$0xf] %vm2253, %v2072
        %2330 = vst.msk [vmem:[%s160 + $0x130] sm:$0xf] %vm2253, %v2073
        %2331 = vst.msk [vmem:[%s160 + $0x134] sm:$0xf] %vm2253, %v2074
        %2332 = vst.msk [vmem:[%s160 + $0x138] sm:$0xf] %vm2253, %v2075
        %2333 = vst.msk [vmem:[%s160 + $0x13c] sm:$0xf] %vm2253, %v2076
        %2334 = vst.msk [vmem:[%s160 + $0x140] sm:$0xf] %vm2253, %v2077
        %2335 = vst.msk [vmem:[%s160 + $0x144] sm:$0xf] %vm2253, %v2078
        %2336 = vst.msk [vmem:[%s160 + $0x148] sm:$0xf] %vm2253, %v2079
        %2337 = vst.msk [vmem:[%s160 + $0x14c] sm:$0xf] %vm2253, %v2080
        %2338 = vst.msk [vmem:[%s160 + $0x150] sm:$0xf] %vm2253, %v2081
        %2339 = vst.msk [vmem:[%s160 + $0x154] sm:$0xf] %vm2253, %v2082
        %2340 = vst.msk [vmem:[%s160 + $0x158] sm:$0xf] %vm2253, %v2083
        %2341 = vst.msk [vmem:[%s160 + $0x15c] sm:$0xf] %vm2253, %v2084
        %2342 = vst.msk [vmem:[%s160 + $0x160] sm:$0xf] %vm2253, %v2085
        %2343 = vst.msk [vmem:[%s160 + $0x164] sm:$0xf] %vm2253, %v2086
        %2344 = vst.msk [vmem:[%s160 + $0x168] sm:$0xf] %vm2253, %v2087
        %2345 = vst.msk [vmem:[%s160 + $0x16c] sm:$0xf] %vm2253, %v2088
        %2346 = vst.msk [vmem:[%s160 + $0x170] sm:$0xf] %vm2253, %v2089
        %2347 = vst.msk [vmem:[%s160 + $0x174] sm:$0xf] %vm2253, %v2090
        %2348 = vst.msk [vmem:[%s160 + $0x178] sm:$0xf] %vm2253, %v2091
        %2349 = vst.msk [vmem:[%s160 + $0x17c] sm:$0xf] %vm2253, %v2092
        %2350 = vst.msk [vmem:[%s160 + $0x180] sm:$0xf] %vm2253, %v2093
        %2351 = vst.msk [vmem:[%s160 + $0x184] sm:$0xf] %vm2253, %v2094
        %2352 = vst.msk [vmem:[%s160 + $0x188] sm:$0xf] %vm2253, %v2095
        %2353 = vst.msk [vmem:[%s160 + $0x18c] sm:$0xf] %vm2253, %v2096
        %2354 = vst.msk [vmem:[%s160 + $0x190] sm:$0xf] %vm2253, %v2097
        %2355 = vst.msk [vmem:[%s160 + $0x194] sm:$0xf] %vm2253, %v2098
        %2356 = vst.msk [vmem:[%s160 + $0x198] sm:$0xf] %vm2253, %v2099
        %2357 = vst.msk [vmem:[%s160 + $0x19c] sm:$0xf] %vm2253, %v2100
        %2358 = vst.msk [vmem:[%s160 + $0x1a0] sm:$0xf] %vm2253, %v2101
        %2359 = vst.msk [vmem:[%s160 + $0x1a4] sm:$0xf] %vm2253, %v2102
        %2360 = vst.msk [vmem:[%s160 + $0x1a8] sm:$0xf] %vm2253, %v2103
        %2361 = vst.msk [vmem:[%s160 + $0x1ac] sm:$0xf] %vm2253, %v2104
        %2362 = vst.msk [vmem:[%s160 + $0x1b0] sm:$0xf] %vm2253, %v2105
        %2363 = vst.msk [vmem:[%s160 + $0x1b4] sm:$0xf] %vm2253, %v2106
        %2364 = vst.msk [vmem:[%s160 + $0x1b8] sm:$0xf] %vm2253, %v2107
        %2365 = vst.msk [vmem:[%s160 + $0x1bc] sm:$0xf] %vm2253, %v2108
        %2366 = vst.msk [vmem:[%s160 + $0x1c0] sm:$0xf] %vm2253, %v2109
        %2367 = vst.msk [vmem:[%s160 + $0x1c4] sm:$0xf] %vm2253, %v2110
        %2368 = vst.msk [vmem:[%s160 + $0x1c8] sm:$0xf] %vm2253, %v2111
        %2369 = vst.msk [vmem:[%s160 + $0x1cc] sm:$0xf] %vm2253, %v2112
        %2370 = vst.msk [vmem:[%s160 + $0x1d0] sm:$0xf] %vm2253, %v2113
        %2371 = vst.msk [vmem:[%s160 + $0x1d4] sm:$0xf] %vm2253, %v2114
        %2372 = vst.msk [vmem:[%s160 + $0x1d8] sm:$0xf] %vm2253, %v2115
        %2373 = vst.msk [vmem:[%s160 + $0x1dc] sm:$0xf] %vm2253, %v2116
        %2374 = vst.msk [vmem:[%s160 + $0x1e0] sm:$0xf] %vm2253, %v2117
        %2375 = vst.msk [vmem:[%s160 + $0x1e4] sm:$0xf] %vm2253, %v2118
        %2376 = vst.msk [vmem:[%s160 + $0x1e8] sm:$0xf] %vm2253, %v2119
        %2377 = vst.msk [vmem:[%s160 + $0x1ec] sm:$0xf] %vm2253, %v2120
        %2378 = vst.msk [vmem:[%s160 + $0x1f0] sm:$0xf] %vm2253, %v2121
        %2379 = vst.msk [vmem:[%s160 + $0x1f4] sm:$0xf] %vm2253, %v2122
        %2380 = vst.msk [vmem:[%s160 + $0x1f8] sm:$0xf] %vm2253, %v2123
        %2381 = vst.msk [vmem:[%s160 + $0x1fc] sm:$0xf] %vm2253, %v2124
        %s2382 = smul.u32 128, %s14
        %p2383 = scmp.lt.s32.totalorder %s2382, 255
        %s2384 = scalar_select %p2383, %s2382, 255
        %s2385 = smul.addr %s2384, 4
        %s2386 = scalar_lea.vmem %s2, %s2385
        // Predicated region
        $region33: #{discriminator_forward.4} parent=27 // pred_check
          %p2387 = pneg %p79
        $region34: #{discriminator_forward.4} parent=27 // pred_check_branch
          %2389 = sbr.rel (%p2387) target = $region36
        $region35: #{discriminator_forward.4} parent=27 // pred_region
          %s2390 = smul.u32 128, %s14
        $region36: #{discriminator_forward.4} parent=27 // pred_fallthru
          _
      $region28: #{discriminator_forward.4} parent=5 // pred_fallthru
        _
      %p2391 = scmp.le.s32.totalorder 2, %s9
      // Predicated region
      $region37: #{discriminator_forward.4} parent=5 // pred_check
        %p2392 = pneg %p2391
      $region38: #{discriminator_forward.4} parent=5 // pred_check_branch
        %2394 = sbr.rel (%p2392) target = $region40
      $region39: #{discriminator_forward.4} parent=5 // pred_region
        %s2395 = ssub.s32 %s9, 2
        // Predicated region
        $region41: #{discriminator_forward.4} parent=39 // pred_check
          %p2396 = pneg %p85
        $region42: #{discriminator_forward.4} parent=39 // pred_check_branch
          %2398 = sbr.rel (%p2396) target = $region44
        $region43: #{discriminator_forward.4} parent=39 // pred_region
          %s2399 = smul.u32 128, %s15
          %p2400 = scmp.lt.s32.totalorder %s2399, 255
          %s2401 = scalar_select %p2400, %s2399, 255
          %s2402 = smul.addr %s2401, 4
          %s2403 = scalar_lea.vmem %s2, %s2402
        $region44: #{discriminator_forward.4} parent=39 // pred_fallthru
          _
      $region40: #{discriminator_forward.4} parent=5 // pred_fallthru
        _
    $region6: #{discriminator_forward.4} parent=1 // loop_footer
      %s13 = sadd.s32 1, %s9
    $region7: #{discriminator_forward.4} parent=1 // loop_footer_branch
      %8 = sbr.rel target = $region3
    $region8: #{discriminator_forward.4} parent=1 // loop_exit
      _
    %2404 = vsyncpa [#allocation3], 1
    %s2405 = scalar_lea.sflag [#allocation3], 1
    %2406 = vsyncpa %s2405, 1

// kernel: discriminator_forward.5
$region0: #{discriminator_forward.5}
  #allocation0 [shape = 'u32[]', space=smem, size = 0x4, offset = 0x4, fixed_abs, tag = 'smem constant byte address 0x4 - core index']
  #allocation1 [shape = 'u32[144,128]{1,0:T(1,128)}', space=vmem, size = 0x12000, scoped, tag = 'internal scratch']
  %s0 = inlined_call_operand.vmem [shape: bf16[512,256], index: 0, kind: input, shape index: {}]
  %s1 = inlined_call_operand.vmem [shape: bf16[256,32], index: 1, kind: input, shape index: {}]
  %s2 = inlined_call_operand.vmem [shape: f32[1,32], index: 2, kind: input, shape index: {}]
  %s3 = inlined_call_operand.vmem [shape: f32[1,32], index: 3, kind: input, shape index: {}]
  %s4 = inlined_call_operand.vmem [shape: bf16[512,32], index: 4, kind: output, shape index: {}]
  %s5 = sld [smem:[#allocation0]]
  $region26: #{discriminator_forward.5} parent=0
    _
  %s7 = ssub.s32 1, %s5
  %s8 = scalar_select 0, %s7, %s5
  // Predicated region
  $region2: #{discriminator_forward.5} parent=0 // pred_check
    _
  $region3: #{discriminator_forward.5} parent=0 // pred_check_branch
    %10 = sbr.rel (0) target = $region5
  $region4: #{discriminator_forward.5} parent=0 // pred_region
    _
  $region5: #{discriminator_forward.5} parent=0 // pred_fallthru
    _
  // Predicated region
  $region6: #{discriminator_forward.5} parent=0 // pred_check
    _
  $region7: #{discriminator_forward.5} parent=0 // pred_check_branch
    %12 = sbr.rel (0) target = $region9
  $region8: #{discriminator_forward.5} parent=0 // pred_region
    _
  $region9: #{discriminator_forward.5} parent=0 // pred_fallthru
    _
  // Predicated region
  $region10: #{discriminator_forward.5} parent=0 // pred_check
    _
  $region11: #{discriminator_forward.5} parent=0 // pred_check_branch
    %14 = sbr.rel (0) target = $region13
  $region12: #{discriminator_forward.5} parent=0 // pred_region
    _
  $region13: #{discriminator_forward.5} parent=0 // pred_fallthru
    _
  // Predicated region
  $region14: #{discriminator_forward.5} parent=0 // pred_check
    _
  $region15: #{discriminator_forward.5} parent=0 // pred_check_branch
    %16 = sbr.rel (0) target = $region17
  $region16: #{discriminator_forward.5} parent=0 // pred_region
    _
  $region17: #{discriminator_forward.5} parent=0 // pred_fallthru
    _
  %v18 = vld [vmem:[%s0] sm:$0xff]
  %v19 = vld [vmem:[%s0 + $0x8] sm:$0xff]
  %v20 = vld [vmem:[%s0 + $0x10] sm:$0xff]
  %v21 = vld [vmem:[%s0 + $0x18] sm:$0xff]
  %v22 = vld [vmem:[%s0 + $0x20] sm:$0xff]
  %v23 = vld [vmem:[%s0 + $0x28] sm:$0xff]
  %v24 = vld [vmem:[%s0 + $0x30] sm:$0xff]
  %v25 = vld [vmem:[%s0 + $0x38] sm:$0xff]
  %v26 = vld [vmem:[%s0 + $0x40] sm:$0xff]
  %v27 = vld [vmem:[%s0 + $0x48] sm:$0xff]
  %v28 = vld [vmem:[%s0 + $0x50] sm:$0xff]
  %v29 = vld [vmem:[%s0 + $0x58] sm:$0xff]
  %v30 = vld [vmem:[%s0 + $0x60] sm:$0xff]
  %v31 = vld [vmem:[%s0 + $0x68] sm:$0xff]
  %v32 = vld [vmem:[%s0 + $0x70] sm:$0xff]
  %v33 = vld [vmem:[%s0 + $0x78] sm:$0xff]
  %v34 = vld [vmem:[%s0 + $0x80] sm:$0xff]
  %v35 = vld [vmem:[%s0 + $0x88] sm:$0xff]
  %v36 = vld [vmem:[%s0 + $0x90] sm:$0xff]
  %v37 = vld [vmem:[%s0 + $0x98] sm:$0xff]
  %v38 = vld [vmem:[%s0 + $0xa0] sm:$0xff]
  %v39 = vld [vmem:[%s0 + $0xa8] sm:$0xff]
  %v40 = vld [vmem:[%s0 + $0xb0] sm:$0xff]
  %v41 = vld [vmem:[%s0 + $0xb8] sm:$0xff]
  %v42 = vld [vmem:[%s0 + $0xc0] sm:$0xff]
  %v43 = vld [vmem:[%s0 + $0xc8] sm:$0xff]
  %v44 = vld [vmem:[%s0 + $0xd0] sm:$0xff]
  %v45 = vld [vmem:[%s0 + $0xd8] sm:$0xff]
  %v46 = vld [vmem:[%s0 + $0xe0] sm:$0xff]
  %v47 = vld [vmem:[%s0 + $0xe8] sm:$0xff]
  %v48 = vld [vmem:[%s0 + $0xf0] sm:$0xff]
  %v49 = vld [vmem:[%s0 + $0xf8] sm:$0xff]
  %v50 = vld [vmem:[%s0 + $0x100] sm:$0xff]
  %v51 = vld [vmem:[%s0 + $0x108] sm:$0xff]
  %v52 = vld [vmem:[%s0 + $0x110] sm:$0xff]
  %v53 = vld [vmem:[%s0 + $0x118] sm:$0xff]
  %v54 = vld [vmem:[%s0 + $0x120] sm:$0xff]
  %v55 = vld [vmem:[%s0 + $0x128] sm:$0xff]
  %v56 = vld [vmem:[%s0 + $0x130] sm:$0xff]
  %v57 = vld [vmem:[%s0 + $0x138] sm:$0xff]
  %v58 = vld [vmem:[%s0 + $0x140] sm:$0xff]
  %v59 = vld [vmem:[%s0 + $0x148] sm:$0xff]
  %v60 = vld [vmem:[%s0 + $0x150] sm:$0xff]
  %v61 = vld [vmem:[%s0 + $0x158] sm:$0xff]
  %v62 = vld [vmem:[%s0 + $0x160] sm:$0xff]
  %v63 = vld [vmem:[%s0 + $0x168] sm:$0xff]
  %v64 = vld [vmem:[%s0 + $0x170] sm:$0xff]
  %v65 = vld [vmem:[%s0 + $0x178] sm:$0xff]
  %v66 = vld [vmem:[%s0 + $0x180] sm:$0xff]
  %v67 = vld [vmem:[%s0 + $0x188] sm:$0xff]
  %v68 = vld [vmem:[%s0 + $0x190] sm:$0xff]
  %v69 = vld [vmem:[%s0 + $0x198] sm:$0xff]
  %v70 = vld [vmem:[%s0 + $0x1a0] sm:$0xff]
  %v71 = vld [vmem:[%s0 + $0x1a8] sm:$0xff]
  %v72 = vld [vmem:[%s0 + $0x1b0] sm:$0xff]
  %v73 = vld [vmem:[%s0 + $0x1b8] sm:$0xff]
  %v74 = vld [vmem:[%s0 + $0x1c0] sm:$0xff]
  %v75 = vld [vmem:[%s0 + $0x1c8] sm:$0xff]
  %v76 = vld [vmem:[%s0 + $0x1d0] sm:$0xff]
  %v77 = vld [vmem:[%s0 + $0x1d8] sm:$0xff]
  %v78 = vld [vmem:[%s0 + $0x1e0] sm:$0xff]
  %v79 = vld [vmem:[%s0 + $0x1e8] sm:$0xff]
  %v80 = vld [vmem:[%s0 + $0x1f0] sm:$0xff]
  %v81 = vld [vmem:[%s0 + $0x1f8] sm:$0xff]
  %v82 = vld [vmem:[%s1] sm:$0xf]
  %v83 = vld [vmem:[%s1 + $0x4] sm:$0xf]
  %v84 = vld [vmem:[%s1 + $0x8] sm:$0xf]
  %v85 = vld [vmem:[%s1 + $0xc] sm:$0xf]
  %v86 = vld [vmem:[%s1 + $0x10] sm:$0xf]
  %v87 = vld [vmem:[%s1 + $0x14] sm:$0xf]
  %v88 = vld [vmem:[%s1 + $0x18] sm:$0xf]
  %v89 = vld [vmem:[%s1 + $0x1c] sm:$0xf]
  %v90 = vld [vmem:[%s1 + $0x20] sm:$0xf]
  %v91 = vld [vmem:[%s1 + $0x24] sm:$0xf]
  %v92 = vld [vmem:[%s1 + $0x28] sm:$0xf]
  %v93 = vld [vmem:[%s1 + $0x2c] sm:$0xf]
  %v94 = vld [vmem:[%s1 + $0x30] sm:$0xf]
  %v95 = vld [vmem:[%s1 + $0x34] sm:$0xf]
  %v96 = vld [vmem:[%s1 + $0x38] sm:$0xf]
  %v97 = vld [vmem:[%s1 + $0x3c] sm:$0xf]
  %v98 = vld [vmem:[%s1 + $0x40] sm:$0xf]
  %v99 = vld [vmem:[%s1 + $0x44] sm:$0xf]
  %v100 = vld [vmem:[%s1 + $0x48] sm:$0xf]
  %v101 = vld [vmem:[%s1 + $0x4c] sm:$0xf]
  %v102 = vld [vmem:[%s1 + $0x50] sm:$0xf]
  %v103 = vld [vmem:[%s1 + $0x54] sm:$0xf]
  %v104 = vld [vmem:[%s1 + $0x58] sm:$0xf]
  %v105 = vld [vmem:[%s1 + $0x5c] sm:$0xf]
  %v106 = vld [vmem:[%s1 + $0x60] sm:$0xf]
  %v107 = vld [vmem:[%s1 + $0x64] sm:$0xf]
  %v108 = vld [vmem:[%s1 + $0x68] sm:$0xf]
  %v109 = vld [vmem:[%s1 + $0x6c] sm:$0xf]
  %v110 = vld [vmem:[%s1 + $0x70] sm:$0xf]
  %v111 = vld [vmem:[%s1 + $0x74] sm:$0xf]
  %v112 = vld [vmem:[%s1 + $0x78] sm:$0xf]
  %v113 = vld [vmem:[%s1 + $0x7c] sm:$0xf]
  %v178 = vunpack.c.l.b16 %v18
  %v179 = vunpack.c.h.b16 %v18
  %v180 = vunpack.c.l.b16 %v19
  %v181 = vunpack.c.h.b16 %v19
  %v182 = vunpack.c.l.b16 %v20
  %v183 = vunpack.c.h.b16 %v20
  %v184 = vunpack.c.l.b16 %v21
  %v185 = vunpack.c.h.b16 %v21
  %v186 = vunpack.c.l.b16 %v22
  %v187 = vunpack.c.h.b16 %v22
  %v188 = vunpack.c.l.b16 %v23
  %v189 = vunpack.c.h.b16 %v23
  %v190 = vunpack.c.l.b16 %v24
  %v191 = vunpack.c.h.b16 %v24
  %v192 = vunpack.c.l.b16 %v25
  %v193 = vunpack.c.h.b16 %v25
  %v194 = vunpack.c.l.b16 %v26
  %v195 = vunpack.c.h.b16 %v26
  %v196 = vunpack.c.l.b16 %v27
  %v197 = vunpack.c.h.b16 %v27
  %v198 = vunpack.c.l.b16 %v28
  %v199 = vunpack.c.h.b16 %v28
  %v200 = vunpack.c.l.b16 %v29
  %v201 = vunpack.c.h.b16 %v29
  %v202 = vunpack.c.l.b16 %v30
  %v203 = vunpack.c.h.b16 %v30
  %v204 = vunpack.c.l.b16 %v31
  %v205 = vunpack.c.h.b16 %v31
  %v206 = vunpack.c.l.b16 %v32
  %v207 = vunpack.c.h.b16 %v32
  %v208 = vunpack.c.l.b16 %v33
  %v209 = vunpack.c.h.b16 %v33
  %v210 = vunpack.c.l.b16 %v34
  %v211 = vunpack.c.h.b16 %v34
  %v212 = vunpack.c.l.b16 %v35
  %v213 = vunpack.c.h.b16 %v35
  %v214 = vunpack.c.l.b16 %v36
  %v215 = vunpack.c.h.b16 %v36
  %v216 = vunpack.c.l.b16 %v37
  %v217 = vunpack.c.h.b16 %v37
  %v218 = vunpack.c.l.b16 %v38
  %v219 = vunpack.c.h.b16 %v38
  %v220 = vunpack.c.l.b16 %v39
  %v221 = vunpack.c.h.b16 %v39
  %v222 = vunpack.c.l.b16 %v40
  %v223 = vunpack.c.h.b16 %v40
  %v224 = vunpack.c.l.b16 %v41
  %v225 = vunpack.c.h.b16 %v41
  %v226 = vunpack.c.l.b16 %v42
  %v227 = vunpack.c.h.b16 %v42
  %v228 = vunpack.c.l.b16 %v43
  %v229 = vunpack.c.h.b16 %v43
  %v230 = vunpack.c.l.b16 %v44
  %v231 = vunpack.c.h.b16 %v44
  %v232 = vunpack.c.l.b16 %v45
  %v233 = vunpack.c.h.b16 %v45
  %v234 = vunpack.c.l.b16 %v46
  %v235 = vunpack.c.h.b16 %v46
  %v236 = vunpack.c.l.b16 %v47
  %v237 = vunpack.c.h.b16 %v47
  %v238 = vunpack.c.l.b16 %v48
  %v239 = vunpack.c.h.b16 %v48
  %v240 = vunpack.c.l.b16 %v49
  %v241 = vunpack.c.h.b16 %v49
  %v242 = vunpack.c.l.b16 %v50
  %v243 = vunpack.c.h.b16 %v50
  %v244 = vunpack.c.l.b16 %v51
  %v245 = vunpack.c.h.b16 %v51
  %v246 = vunpack.c.l.b16 %v52
  %v247 = vunpack.c.h.b16 %v52
  %v248 = vunpack.c.l.b16 %v53
  %v249 = vunpack.c.h.b16 %v53
  %v250 = vunpack.c.l.b16 %v54
  %v251 = vunpack.c.h.b16 %v54
  %v252 = vunpack.c.l.b16 %v55
  %v253 = vunpack.c.h.b16 %v55
  %v254 = vunpack.c.l.b16 %v56
  %v255 = vunpack.c.h.b16 %v56
  %v256 = vunpack.c.l.b16 %v57
  %v257 = vunpack.c.h.b16 %v57
  %v258 = vunpack.c.l.b16 %v58
  %v259 = vunpack.c.h.b16 %v58
  %v260 = vunpack.c.l.b16 %v59
  %v261 = vunpack.c.h.b16 %v59
  %v262 = vunpack.c.l.b16 %v60
  %v263 = vunpack.c.h.b16 %v60
  %v264 = vunpack.c.l.b16 %v61
  %v265 = vunpack.c.h.b16 %v61
  %v266 = vunpack.c.l.b16 %v62
  %v267 = vunpack.c.h.b16 %v62
  %v268 = vunpack.c.l.b16 %v63
  %v269 = vunpack.c.h.b16 %v63
  %v270 = vunpack.c.l.b16 %v64
  %v271 = vunpack.c.h.b16 %v64
  %v272 = vunpack.c.l.b16 %v65
  %v273 = vunpack.c.h.b16 %v65
  %v274 = vunpack.c.l.b16 %v66
  %v275 = vunpack.c.h.b16 %v66
  %v276 = vunpack.c.l.b16 %v67
  %v277 = vunpack.c.h.b16 %v67
  %v278 = vunpack.c.l.b16 %v68
  %v279 = vunpack.c.h.b16 %v68
  %v280 = vunpack.c.l.b16 %v69
  %v281 = vunpack.c.h.b16 %v69
  %v282 = vunpack.c.l.b16 %v70
  %v283 = vunpack.c.h.b16 %v70
  %v284 = vunpack.c.l.b16 %v71
  %v285 = vunpack.c.h.b16 %v71
  %v286 = vunpack.c.l.b16 %v72
  %v287 = vunpack.c.h.b16 %v72
  %v288 = vunpack.c.l.b16 %v73
  %v289 = vunpack.c.h.b16 %v73
  %v290 = vunpack.c.l.b16 %v74
  %v291 = vunpack.c.h.b16 %v74
  %v292 = vunpack.c.l.b16 %v75
  %v293 = vunpack.c.h.b16 %v75
  %v294 = vunpack.c.l.b16 %v76
  %v295 = vunpack.c.h.b16 %v76
  %v296 = vunpack.c.l.b16 %v77
  %v297 = vunpack.c.h.b16 %v77
  %v298 = vunpack.c.l.b16 %v78
  %v299 = vunpack.c.h.b16 %v78
  %v300 = vunpack.c.l.b16 %v79
  %v301 = vunpack.c.h.b16 %v79
  %v302 = vunpack.c.l.b16 %v80
  %v303 = vunpack.c.h.b16 %v80
  %v304 = vunpack.c.l.b16 %v81
  %v305 = vunpack.c.h.b16 %v81
  %v306 = vpack.c.b16 %v180, %v178
  %v307 = vpack.c.b16 %v181, %v179
  %v308 = vpack.c.b16 %v184, %v182
  %v309 = vpack.c.b16 %v185, %v183
  %v310 = vpack.c.b16 %v188, %v186
  %v311 = vpack.c.b16 %v189, %v187
  %v312 = vpack.c.b16 %v192, %v190
  %v313 = vpack.c.b16 %v193, %v191
  %v314 = vpack.c.b16 %v196, %v194
  %v315 = vpack.c.b16 %v197, %v195
  %v316 = vpack.c.b16 %v200, %v198
  %v317 = vpack.c.b16 %v201, %v199
  %v318 = vpack.c.b16 %v204, %v202
  %v319 = vpack.c.b16 %v205, %v203
  %v320 = vpack.c.b16 %v208, %v206
  %v321 = vpack.c.b16 %v209, %v207
  %v322 = vpack.c.b16 %v212, %v210
  %v323 = vpack.c.b16 %v213, %v211
  %v324 = vpack.c.b16 %v216, %v214
  %v325 = vpack.c.b16 %v217, %v215
  %v326 = vpack.c.b16 %v220, %v218
  %v327 = vpack.c.b16 %v221, %v219
  %v328 = vpack.c.b16 %v224, %v222
  %v329 = vpack.c.b16 %v225, %v223
  %v330 = vpack.c.b16 %v228, %v226
  %v331 = vpack.c.b16 %v229, %v227
  %v332 = vpack.c.b16 %v232, %v230
  %v333 = vpack.c.b16 %v233, %v231
  %v334 = vpack.c.b16 %v236, %v234
  %v335 = vpack.c.b16 %v237, %v235
  %v336 = vpack.c.b16 %v240, %v238
  %v337 = vpack.c.b16 %v241, %v239
  %v338 = vpack.c.b16 %v244, %v242
  %v339 = vpack.c.b16 %v245, %v243
  %v340 = vpack.c.b16 %v248, %v246
  %v341 = vpack.c.b16 %v249, %v247
  %v342 = vpack.c.b16 %v252, %v250
  %v343 = vpack.c.b16 %v253, %v251
  %v344 = vpack.c.b16 %v256, %v254
  %v345 = vpack.c.b16 %v257, %v255
  %v346 = vpack.c.b16 %v260, %v258
  %v347 = vpack.c.b16 %v261, %v259
  %v348 = vpack.c.b16 %v264, %v262
  %v349 = vpack.c.b16 %v265, %v263
  %v350 = vpack.c.b16 %v268, %v266
  %v351 = vpack.c.b16 %v269, %v267
  %v352 = vpack.c.b16 %v272, %v270
  %v353 = vpack.c.b16 %v273, %v271
  %v354 = vpack.c.b16 %v276, %v274
  %v355 = vpack.c.b16 %v277, %v275
  %v356 = vpack.c.b16 %v280, %v278
  %v357 = vpack.c.b16 %v281, %v279
  %v358 = vpack.c.b16 %v284, %v282
  %v359 = vpack.c.b16 %v285, %v283
  %v360 = vpack.c.b16 %v288, %v286
  %v361 = vpack.c.b16 %v289, %v287
  %v362 = vpack.c.b16 %v292, %v290
  %v363 = vpack.c.b16 %v293, %v291
  %v364 = vpack.c.b16 %v296, %v294
  %v365 = vpack.c.b16 %v297, %v295
  %v366 = vpack.c.b16 %v300, %v298
  %v367 = vpack.c.b16 %v301, %v299
  %v368 = vpack.c.b16 %v304, %v302
  %v369 = vpack.c.b16 %v305, %v303
  %v466 = vunpack.c.l.b16 %v82
  %v467 = vunpack.c.l.b16 %v83
  %v468 = vunpack.c.l.b16 %v84
  %v469 = vunpack.c.l.b16 %v85
  %v470 = vunpack.c.l.b16 %v86
  %v471 = vunpack.c.l.b16 %v87
  %v472 = vunpack.c.l.b16 %v88
  %v473 = vunpack.c.l.b16 %v89
  %v474 = vunpack.c.l.b16 %v90
  %v475 = vunpack.c.l.b16 %v91
  %v476 = vunpack.c.l.b16 %v92
  %v477 = vunpack.c.l.b16 %v93
  %v478 = vunpack.c.l.b16 %v94
  %v479 = vunpack.c.l.b16 %v95
  %v480 = vunpack.c.l.b16 %v96
  %v481 = vunpack.c.l.b16 %v97
  %v482 = vunpack.c.l.b16 %v98
  %v483 = vunpack.c.l.b16 %v99
  %v484 = vunpack.c.l.b16 %v100
  %v485 = vunpack.c.l.b16 %v101
  %v486 = vunpack.c.l.b16 %v102
  %v487 = vunpack.c.l.b16 %v103
  %v488 = vunpack.c.l.b16 %v104
  %v489 = vunpack.c.l.b16 %v105
  %v490 = vunpack.c.l.b16 %v106
  %v491 = vunpack.c.l.b16 %v107
  %v492 = vunpack.c.l.b16 %v108
  %v493 = vunpack.c.l.b16 %v109
  %v494 = vunpack.c.l.b16 %v110
  %v495 = vunpack.c.l.b16 %v111
  %v496 = vunpack.c.l.b16 %v112
  %v497 = vunpack.c.l.b16 %v113
  %v498 = vpack.c.b16 %v467, %v466
  %v499 = vpack.c.b16 %v469, %v468
  %v500 = vpack.c.b16 %v471, %v470
  %v501 = vpack.c.b16 %v473, %v472
  %v502 = vpack.c.b16 %v475, %v474
  %v503 = vpack.c.b16 %v477, %v476
  %v504 = vpack.c.b16 %v479, %v478
  %v505 = vpack.c.b16 %v481, %v480
  %v506 = vpack.c.b16 %v483, %v482
  %v507 = vpack.c.b16 %v485, %v484
  %v508 = vpack.c.b16 %v487, %v486
  %v509 = vpack.c.b16 %v489, %v488
  %v510 = vpack.c.b16 %v491, %v490
  %v511 = vpack.c.b16 %v493, %v492
  %v512 = vpack.c.b16 %v495, %v494
  %v513 = vpack.c.b16 %v497, %v496
  %530 = vmatprep.subr.bf16.mxu0 0
  %531 = vmatpush1.bf16.msra.mxu0 %v505
  %532 = vmatprep.subr.bf16.mxu0 0
  %533 = vmatpush1.bf16.msra.mxu0 %v504
  %534 = vmatprep.subr.bf16.mxu0 0
  %535 = vmatpush1.bf16.msra.mxu0 %v503
  %536 = vmatprep.subr.bf16.mxu0 0
  %537 = vmatpush1.bf16.msra.mxu0 %v502
  %538 = vmatprep.subr.bf16.mxu0 0
  %539 = vmatpush1.bf16.msra.mxu0 %v501
  %540 = vmatprep.subr.bf16.mxu0 0
  %541 = vmatpush1.bf16.msra.mxu0 %v500
  %542 = vmatprep.subr.bf16.mxu0 0
  %543 = vmatpush1.bf16.msra.mxu0 %v499
  %544 = vmatprep.subr.bf16.mxu0 0
  %545 = vmatpush1.bf16.msra.mxu0 %v498
  %546 = vmatprep.subr.bf16.mxu0 0
  %547 = vmatpush2.bf16.msra.mxu0 %v513
  %548 = vmatprep.subr.bf16.mxu0 0
  %549 = vmatpush2.bf16.msra.mxu0 %v512
  %550 = vmatprep.subr.bf16.mxu0 0
  %551 = vmatpush2.bf16.msra.mxu0 %v511
  %552 = vmatprep.subr.bf16.mxu0 0
  %553 = vmatpush2.bf16.msra.mxu0 %v510
  %554 = vmatprep.subr.bf16.mxu0 0
  %555 = vmatpush2.bf16.msra.mxu0 %v509
  %556 = vmatprep.subr.bf16.mxu0 0
  %557 = vmatpush2.bf16.msra.mxu0 %v508
  %558 = vmatprep.subr.bf16.mxu0 0
  %559 = vmatpush2.bf16.msra.mxu0 %v507
  %560 = vmatprep.subr.bf16.mxu0 0
  %561 = vmatpush2.bf16.msra.mxu0 %v506
  %562 = vmatprep.mubr.bf16.mxu0 %v307
  %563 = vmatmul.mubr.bf16.gmra.mxu0 %v306
  %v564 = vpop.f32.mrf.mxu0
  %v565 = vadd.f32 0.0, %v564
  %v566 = vpop.f32.mrf.mxu0
  %v567 = vpop.f32.mrf.mxu0
  %v568 = vadd.f32 0.0, %v567
  %v569 = vpop.f32.mrf.mxu0
  %570 = vmatprep.mubr.bf16.mxu0 %v309
  %571 = vmatmul.mubr.bf16.gmra.mxu0 %v308
  %v572 = vpop.f32.mrf.mxu0
  %v573 = vadd.f32 0.0, %v572
  %v574 = vpop.f32.mrf.mxu0
  %v575 = vpop.f32.mrf.mxu0
  %v576 = vadd.f32 0.0, %v575
  %v577 = vpop.f32.mrf.mxu0
  %578 = vmatprep.mubr.bf16.mxu0 %v311
  %579 = vmatmul.mubr.bf16.gmra.mxu0 %v310
  %v580 = vpop.f32.mrf.mxu0
  %v581 = vadd.f32 0.0, %v580
  %v582 = vpop.f32.mrf.mxu0
  %v583 = vpop.f32.mrf.mxu0
  %v584 = vadd.f32 0.0, %v583
  %v585 = vpop.f32.mrf.mxu0
  %586 = vmatprep.mubr.bf16.mxu0 %v313
  %587 = vmatmul.mubr.bf16.gmra.mxu0 %v312
  %v588 = vpop.f32.mrf.mxu0
  %v589 = vadd.f32 0.0, %v588
  %v590 = vpop.f32.mrf.mxu0
  %v591 = vpop.f32.mrf.mxu0
  %v592 = vadd.f32 0.0, %v591
  %v593 = vpop.f32.mrf.mxu0
  %594 = vmatprep.mubr.bf16.mxu0 %v315
  %595 = vmatmul.mubr.bf16.gmra.mxu0 %v314
  %v596 = vpop.f32.mrf.mxu0
  %v597 = vadd.f32 0.0, %v596
  %v598 = vpop.f32.mrf.mxu0
  %v599 = vpop.f32.mrf.mxu0
  %v600 = vadd.f32 0.0, %v599
  %v601 = vpop.f32.mrf.mxu0
  %602 = vmatprep.mubr.bf16.mxu0 %v317
  %603 = vmatmul.mubr.bf16.gmra.mxu0 %v316
  %v604 = vpop.f32.mrf.mxu0
  %v605 = vadd.f32 0.0, %v604
  %v606 = vpop.f32.mrf.mxu0
  %v607 = vpop.f32.mrf.mxu0
  %v608 = vadd.f32 0.0, %v607
  %v609 = vpop.f32.mrf.mxu0
  %610 = vmatprep.mubr.bf16.mxu0 %v319
  %611 = vmatmul.mubr.bf16.gmra.mxu0 %v318
  %v612 = vpop.f32.mrf.mxu0
  %v613 = vadd.f32 0.0, %v612
  %v614 = vpop.f32.mrf.mxu0
  %v615 = vpop.f32.mrf.mxu0
  %v616 = vadd.f32 0.0, %v615
  %v617 = vpop.f32.mrf.mxu0
  %618 = vmatprep.mubr.bf16.mxu0 %v321
  %619 = vmatmul.mubr.bf16.gmra.mxu0 %v320
  %v620 = vpop.f32.mrf.mxu0
  %v621 = vadd.f32 0.0, %v620
  %v622 = vpop.f32.mrf.mxu0
  %v623 = vpop.f32.mrf.mxu0
  %v624 = vadd.f32 0.0, %v623
  %v625 = vpop.f32.mrf.mxu0
  %626 = vmatprep.mubr.bf16.mxu0 %v323
  %627 = vmatmul.mubr.bf16.gmra.mxu0 %v322
  %v628 = vpop.f32.mrf.mxu0
  %v629 = vadd.f32 0.0, %v628
  %v630 = vpop.f32.mrf.mxu0
  %v631 = vpop.f32.mrf.mxu0
  %v632 = vadd.f32 0.0, %v631
  %v633 = vpop.f32.mrf.mxu0
  %634 = vmatprep.mubr.bf16.mxu0 %v325
  %635 = vmatmul.mubr.bf16.gmra.mxu0 %v324
  %v636 = vpop.f32.mrf.mxu0
  %v637 = vadd.f32 0.0, %v636
  %v638 = vpop.f32.mrf.mxu0
  %v639 = vpop.f32.mrf.mxu0
  %v640 = vadd.f32 0.0, %v639
  %v641 = vpop.f32.mrf.mxu0
  %642 = vmatprep.mubr.bf16.mxu0 %v327
  %643 = vmatmul.mubr.bf16.gmra.mxu0 %v326
  %v644 = vpop.f32.mrf.mxu0
  %v645 = vadd.f32 0.0, %v644
  %v646 = vpop.f32.mrf.mxu0
  %v647 = vpop.f32.mrf.mxu0
  %v648 = vadd.f32 0.0, %v647
  %v649 = vpop.f32.mrf.mxu0
  %650 = vmatprep.mubr.bf16.mxu0 %v329
  %651 = vmatmul.mubr.bf16.gmra.mxu0 %v328
  %v652 = vpop.f32.mrf.mxu0
  %v653 = vadd.f32 0.0, %v652
  %v654 = vpop.f32.mrf.mxu0
  %v655 = vpop.f32.mrf.mxu0
  %v656 = vadd.f32 0.0, %v655
  %v657 = vpop.f32.mrf.mxu0
  %658 = vmatprep.mubr.bf16.mxu0 %v331
  %659 = vmatmul.mubr.bf16.gmra.mxu0 %v330
  %v660 = vpop.f32.mrf.mxu0
  %v661 = vadd.f32 0.0, %v660
  %v662 = vpop.f32.mrf.mxu0
  %v663 = vpop.f32.mrf.mxu0
  %v664 = vadd.f32 0.0, %v663
  %v665 = vpop.f32.mrf.mxu0
  %666 = vmatprep.mubr.bf16.mxu0 %v333
  %667 = vmatmul.mubr.bf16.gmra.mxu0 %v332
  %v668 = vpop.f32.mrf.mxu0
  %v669 = vadd.f32 0.0, %v668
  %v670 = vpop.f32.mrf.mxu0
  %v671 = vpop.f32.mrf.mxu0
  %v672 = vadd.f32 0.0, %v671
  %v673 = vpop.f32.mrf.mxu0
  %674 = vmatprep.mubr.bf16.mxu0 %v335
  %675 = vmatmul.mubr.bf16.gmra.mxu0 %v334
  %v676 = vpop.f32.mrf.mxu0
  %v677 = vadd.f32 0.0, %v676
  %v678 = vpop.f32.mrf.mxu0
  %v679 = vpop.f32.mrf.mxu0
  %v680 = vadd.f32 0.0, %v679
  %v681 = vpop.f32.mrf.mxu0
  %682 = vmatprep.mubr.bf16.mxu0 %v337
  %683 = vmatmul.mubr.bf16.gmra.mxu0 %v336
  %v684 = vpop.f32.mrf.mxu0
  %v685 = vadd.f32 0.0, %v684
  %v686 = vpop.f32.mrf.mxu0
  %v687 = vpop.f32.mrf.mxu0
  %v688 = vadd.f32 0.0, %v687
  %v689 = vpop.f32.mrf.mxu0
  %690 = vmatprep.mubr.bf16.mxu0 %v339
  %691 = vmatmul.mubr.bf16.gmra.mxu0 %v338
  %v692 = vpop.f32.mrf.mxu0
  %v693 = vadd.f32 0.0, %v692
  %v694 = vpop.f32.mrf.mxu0
  %v695 = vpop.f32.mrf.mxu0
  %v696 = vadd.f32 0.0, %v695
  %v697 = vpop.f32.mrf.mxu0
  %698 = vmatprep.mubr.bf16.mxu0 %v341
  %699 = vmatmul.mubr.bf16.gmra.mxu0 %v340
  %v700 = vpop.f32.mrf.mxu0
  %v701 = vadd.f32 0.0, %v700
  %v702 = vpop.f32.mrf.mxu0
  %v703 = vpop.f32.mrf.mxu0
  %v704 = vadd.f32 0.0, %v703
  %v705 = vpop.f32.mrf.mxu0
  %706 = vmatprep.mubr.bf16.mxu0 %v343
  %707 = vmatmul.mubr.bf16.gmra.mxu0 %v342
  %v708 = vpop.f32.mrf.mxu0
  %v709 = vadd.f32 0.0, %v708
  %v710 = vpop.f32.mrf.mxu0
  %v711 = vpop.f32.mrf.mxu0
  %v712 = vadd.f32 0.0, %v711
  %v713 = vpop.f32.mrf.mxu0
  %714 = vmatprep.mubr.bf16.mxu0 %v345
  %715 = vmatmul.mubr.bf16.gmra.mxu0 %v344
  %v716 = vpop.f32.mrf.mxu0
  %v717 = vadd.f32 0.0, %v716
  %v718 = vpop.f32.mrf.mxu0
  %v719 = vpop.f32.mrf.mxu0
  %v720 = vadd.f32 0.0, %v719
  %v721 = vpop.f32.mrf.mxu0
  %722 = vmatprep.mubr.bf16.mxu0 %v347
  %723 = vmatmul.mubr.bf16.gmra.mxu0 %v346
  %v724 = vpop.f32.mrf.mxu0
  %v725 = vadd.f32 0.0, %v724
  %v726 = vpop.f32.mrf.mxu0
  %v727 = vpop.f32.mrf.mxu0
  %v728 = vadd.f32 0.0, %v727
  %v729 = vpop.f32.mrf.mxu0
  %730 = vmatprep.mubr.bf16.mxu0 %v349
  %731 = vmatmul.mubr.bf16.gmra.mxu0 %v348
  %v732 = vpop.f32.mrf.mxu0
  %v733 = vadd.f32 0.0, %v732
  %v734 = vpop.f32.mrf.mxu0
  %v735 = vpop.f32.mrf.mxu0
  %v736 = vadd.f32 0.0, %v735
  %v737 = vpop.f32.mrf.mxu0
  %738 = vmatprep.mubr.bf16.mxu0 %v351
  %739 = vmatmul.mubr.bf16.gmra.mxu0 %v350
  %v740 = vpop.f32.mrf.mxu0
  %v741 = vadd.f32 0.0, %v740
  %v742 = vpop.f32.mrf.mxu0
  %v743 = vpop.f32.mrf.mxu0
  %v744 = vadd.f32 0.0, %v743
  %v745 = vpop.f32.mrf.mxu0
  %746 = vmatprep.mubr.bf16.mxu0 %v353
  %747 = vmatmul.mubr.bf16.gmra.mxu0 %v352
  %v748 = vpop.f32.mrf.mxu0
  %v749 = vadd.f32 0.0, %v748
  %v750 = vpop.f32.mrf.mxu0
  %v751 = vpop.f32.mrf.mxu0
  %v752 = vadd.f32 0.0, %v751
  %v753 = vpop.f32.mrf.mxu0
  %754 = vmatprep.mubr.bf16.mxu0 %v355
  %755 = vmatmul.mubr.bf16.gmra.mxu0 %v354
  %v756 = vpop.f32.mrf.mxu0
  %v757 = vadd.f32 0.0, %v756
  %v758 = vpop.f32.mrf.mxu0
  %v759 = vpop.f32.mrf.mxu0
  %v760 = vadd.f32 0.0, %v759
  %v761 = vpop.f32.mrf.mxu0
  %762 = vmatprep.mubr.bf16.mxu0 %v357
  %763 = vmatmul.mubr.bf16.gmra.mxu0 %v356
  %v764 = vpop.f32.mrf.mxu0
  %v765 = vadd.f32 0.0, %v764
  %v766 = vpop.f32.mrf.mxu0
  %v767 = vpop.f32.mrf.mxu0
  %v768 = vadd.f32 0.0, %v767
  %v769 = vpop.f32.mrf.mxu0
  %770 = vmatprep.mubr.bf16.mxu0 %v359
  %771 = vmatmul.mubr.bf16.gmra.mxu0 %v358
  %v772 = vpop.f32.mrf.mxu0
  %v773 = vadd.f32 0.0, %v772
  %v774 = vpop.f32.mrf.mxu0
  %v775 = vpop.f32.mrf.mxu0
  %v776 = vadd.f32 0.0, %v775
  %v777 = vpop.f32.mrf.mxu0
  %778 = vmatprep.mubr.bf16.mxu0 %v361
  %779 = vmatmul.mubr.bf16.gmra.mxu0 %v360
  %v780 = vpop.f32.mrf.mxu0
  %v781 = vadd.f32 0.0, %v780
  %v782 = vpop.f32.mrf.mxu0
  %v783 = vpop.f32.mrf.mxu0
  %v784 = vadd.f32 0.0, %v783
  %v785 = vpop.f32.mrf.mxu0
  %786 = vmatprep.mubr.bf16.mxu0 %v363
  %787 = vmatmul.mubr.bf16.gmra.mxu0 %v362
  %v788 = vpop.f32.mrf.mxu0
  %v789 = vadd.f32 0.0, %v788
  %v790 = vpop.f32.mrf.mxu0
  %v791 = vpop.f32.mrf.mxu0
  %v792 = vadd.f32 0.0, %v791
  %v793 = vpop.f32.mrf.mxu0
  %794 = vmatprep.mubr.bf16.mxu0 %v365
  %795 = vmatmul.mubr.bf16.gmra.mxu0 %v364
  %v796 = vpop.f32.mrf.mxu0
  %v797 = vadd.f32 0.0, %v796
  %v798 = vpop.f32.mrf.mxu0
  %v799 = vpop.f32.mrf.mxu0
  %v800 = vadd.f32 0.0, %v799
  %v801 = vpop.f32.mrf.mxu0
  %802 = vmatprep.mubr.bf16.mxu0 %v367
  %803 = vmatmul.mubr.bf16.gmra.mxu0 %v366
  %v804 = vpop.f32.mrf.mxu0
  %v805 = vadd.f32 0.0, %v804
  %v806 = vpop.f32.mrf.mxu0
  %v807 = vpop.f32.mrf.mxu0
  %v808 = vadd.f32 0.0, %v807
  %v809 = vpop.f32.mrf.mxu0
  %810 = vmatprep.mubr.bf16.mxu0 %v369
  %811 = vmatmul.mubr.bf16.gmra.mxu0 %v368
  %v812 = vpop.f32.mrf.mxu0
  %v813 = vadd.f32 0.0, %v812
  %v814 = vpop.f32.mrf.mxu0
  %v815 = vpop.f32.mrf.mxu0
  %v816 = vadd.f32 0.0, %v815
  %v817 = vpop.f32.mrf.mxu0
  %818 = vdwg.mxu0
  %vm819 = vcmask 261120
  %v820 = vsel %vm819, %v565, 0.0
  %v821 = vsel %vm819, %v568, 0.0
  %v822 = vadd.f32 %v820, %v821
  %v823 = vsel %vm819, %v573, 0.0
  %v824 = vadd.f32 %v822, %v823
  %v825 = vsel %vm819, %v576, 0.0
  %v826 = vadd.f32 %v824, %v825
  %v827 = vsel %vm819, %v581, 0.0
  %v828 = vadd.f32 %v826, %v827
  %v829 = vsel %vm819, %v584, 0.0
  %v830 = vadd.f32 %v828, %v829
  %v831 = vsel %vm819, %v589, 0.0
  %v832 = vadd.f32 %v830, %v831
  %v833 = vsel %vm819, %v592, 0.0
  %v834 = vadd.f32 %v832, %v833
  %v835 = vsel %vm819, %v597, 0.0
  %v836 = vadd.f32 %v834, %v835
  %v837 = vsel %vm819, %v600, 0.0
  %v838 = vadd.f32 %v836, %v837
  %v839 = vsel %vm819, %v605, 0.0
  %v840 = vadd.f32 %v838, %v839
  %v841 = vsel %vm819, %v608, 0.0
  %v842 = vadd.f32 %v840, %v841
  %v843 = vsel %vm819, %v613, 0.0
  %v844 = vadd.f32 %v842, %v843
  %v845 = vsel %vm819, %v616, 0.0
  %v846 = vadd.f32 %v844, %v845
  %v847 = vsel %vm819, %v621, 0.0
  %v848 = vadd.f32 %v846, %v847
  %v849 = vsel %vm819, %v624, 0.0
  %v850 = vadd.f32 %v848, %v849
  %v851 = vsel %vm819, %v629, 0.0
  %v852 = vadd.f32 %v850, %v851
  %v853 = vsel %vm819, %v632, 0.0
  %v854 = vadd.f32 %v852, %v853
  %v855 = vsel %vm819, %v637, 0.0
  %v856 = vadd.f32 %v854, %v855
  %v857 = vsel %vm819, %v640, 0.0
  %v858 = vadd.f32 %v856, %v857
  %v859 = vsel %vm819, %v645, 0.0
  %v860 = vadd.f32 %v858, %v859
  %v861 = vsel %vm819, %v648, 0.0
  %v862 = vadd.f32 %v860, %v861
  %v863 = vsel %vm819, %v653, 0.0
  %v864 = vadd.f32 %v862, %v863
  %v865 = vsel %vm819, %v656, 0.0
  %v866 = vadd.f32 %v864, %v865
  %v867 = vsel %vm819, %v661, 0.0
  %v868 = vadd.f32 %v866, %v867
  %v869 = vsel %vm819, %v664, 0.0
  %v870 = vadd.f32 %v868, %v869
  %v871 = vsel %vm819, %v669, 0.0
  %v872 = vadd.f32 %v870, %v871
  %v873 = vsel %vm819, %v672, 0.0
  %v874 = vadd.f32 %v872, %v873
  %v875 = vsel %vm819, %v677, 0.0
  %v876 = vadd.f32 %v874, %v875
  %v877 = vsel %vm819, %v680, 0.0
  %v878 = vadd.f32 %v876, %v877
  %v879 = vsel %vm819, %v685, 0.0
  %v880 = vadd.f32 %v878, %v879
  %v881 = vsel %vm819, %v688, 0.0
  %v882 = vadd.f32 %v880, %v881
  %v883 = vsel %vm819, %v693, 0.0
  %v884 = vadd.f32 %v882, %v883
  %v885 = vsel %vm819, %v696, 0.0
  %v886 = vadd.f32 %v884, %v885
  %v887 = vsel %vm819, %v701, 0.0
  %v888 = vadd.f32 %v886, %v887
  %v889 = vsel %vm819, %v704, 0.0
  %v890 = vadd.f32 %v888, %v889
  %v891 = vsel %vm819, %v709, 0.0
  %v892 = vadd.f32 %v890, %v891
  %v893 = vsel %vm819, %v712, 0.0
  %v894 = vadd.f32 %v892, %v893
  %v895 = vsel %vm819, %v717, 0.0
  %v896 = vadd.f32 %v894, %v895
  %v897 = vsel %vm819, %v720, 0.0
  %v898 = vadd.f32 %v896, %v897
  %v899 = vsel %vm819, %v725, 0.0
  %v900 = vadd.f32 %v898, %v899
  %v901 = vsel %vm819, %v728, 0.0
  %v902 = vadd.f32 %v900, %v901
  %v903 = vsel %vm819, %v733, 0.0
  %v904 = vadd.f32 %v902, %v903
  %v905 = vsel %vm819, %v736, 0.0
  %v906 = vadd.f32 %v904, %v905
  %v907 = vsel %vm819, %v741, 0.0
  %v908 = vadd.f32 %v906, %v907
  %v909 = vsel %vm819, %v744, 0.0
  %v910 = vadd.f32 %v908, %v909
  %v911 = vsel %vm819, %v749, 0.0
  %v912 = vadd.f32 %v910, %v911
  %v913 = vsel %vm819, %v752, 0.0
  %v914 = vadd.f32 %v912, %v913
  %v915 = vsel %vm819, %v757, 0.0
  %v916 = vadd.f32 %v914, %v915
  %v917 = vsel %vm819, %v760, 0.0
  %v918 = vadd.f32 %v916, %v917
  %v919 = vsel %vm819, %v765, 0.0
  %v920 = vadd.f32 %v918, %v919
  %v921 = vsel %vm819, %v768, 0.0
  %v922 = vadd.f32 %v920, %v921
  %v923 = vsel %vm819, %v773, 0.0
  %v924 = vadd.f32 %v922, %v923
  %v925 = vsel %vm819, %v776, 0.0
  %v926 = vadd.f32 %v924, %v925
  %v927 = vsel %vm819, %v781, 0.0
  %v928 = vadd.f32 %v926, %v927
  %v929 = vsel %vm819, %v784, 0.0
  %v930 = vadd.f32 %v928, %v929
  %v931 = vsel %vm819, %v789, 0.0
  %v932 = vadd.f32 %v930, %v931
  %v933 = vsel %vm819, %v792, 0.0
  %v934 = vadd.f32 %v932, %v933
  %v935 = vsel %vm819, %v797, 0.0
  %v936 = vadd.f32 %v934, %v935
  %v937 = vsel %vm819, %v800, 0.0
  %v938 = vadd.f32 %v936, %v937
  %v939 = vsel %vm819, %v805, 0.0
  %v940 = vadd.f32 %v938, %v939
  %v941 = vsel %vm819, %v808, 0.0
  %v942 = vadd.f32 %v940, %v941
  %v943 = vsel %vm819, %v813, 0.0
  %v944 = vadd.f32 %v942, %v943
  %v945 = vsel %vm819, %v816, 0.0
  %v946 = vadd.f32 %v944, %v945
  %v947 = vrot.slane %v946, 4
  %v948 = vadd.f32 %v946, %v947
  %v949 = vrot.slane %v948, 2
  %v950 = vadd.f32 %v948, %v949
  %v951 = vrot.slane %v950, 1
  %v952 = vadd.f32 %v950, %v951
  %v953 = vrcp.pop 512.0
  %v954 = vmul.f32 %v952, %v953
  %v955 = vmul.f32 %v565, %v565
  %v956 = vmul.f32 %v568, %v568
  %v957 = vmul.f32 %v573, %v573
  %v958 = vmul.f32 %v576, %v576
  %v959 = vmul.f32 %v581, %v581
  %v960 = vmul.f32 %v584, %v584
  %v961 = vmul.f32 %v589, %v589
  %v962 = vmul.f32 %v592, %v592
  %v963 = vmul.f32 %v597, %v597
  %v964 = vmul.f32 %v600, %v600
  %v965 = vmul.f32 %v605, %v605
  %v966 = vmul.f32 %v608, %v608
  %v967 = vmul.f32 %v613, %v613
  %v968 = vmul.f32 %v616, %v616
  %v969 = vmul.f32 %v621, %v621
  %v970 = vmul.f32 %v624, %v624
  %v971 = vmul.f32 %v629, %v629
  %v972 = vmul.f32 %v632, %v632
  %v973 = vmul.f32 %v637, %v637
  %v974 = vmul.f32 %v640, %v640
  %v975 = vmul.f32 %v645, %v645
  %v976 = vmul.f32 %v648, %v648
  %v977 = vmul.f32 %v653, %v653
  %v978 = vmul.f32 %v656, %v656
  %v979 = vmul.f32 %v661, %v661
  %v980 = vmul.f32 %v664, %v664
  %v981 = vmul.f32 %v669, %v669
  %v982 = vmul.f32 %v672, %v672
  %v983 = vmul.f32 %v677, %v677
  %v984 = vmul.f32 %v680, %v680
  %v985 = vmul.f32 %v685, %v685
  %v986 = vmul.f32 %v688, %v688
  %v987 = vmul.f32 %v693, %v693
  %v988 = vmul.f32 %v696, %v696
  %v989 = vmul.f32 %v701, %v701
  %v990 = vmul.f32 %v704, %v704
  %v991 = vmul.f32 %v709, %v709
  %v992 = vmul.f32 %v712, %v712
  %v993 = vmul.f32 %v717, %v717
  %v994 = vmul.f32 %v720, %v720
  %v995 = vmul.f32 %v725, %v725
  %v996 = vmul.f32 %v728, %v728
  %v997 = vmul.f32 %v733, %v733
  %v998 = vmul.f32 %v736, %v736
  %v999 = vmul.f32 %v741, %v741
  %v1000 = vmul.f32 %v744, %v744
  %v1001 = vmul.f32 %v749, %v749
  %v1002 = vmul.f32 %v752, %v752
  %v1003 = vmul.f32 %v757, %v757
  %v1004 = vmul.f32 %v760, %v760
  %v1005 = vmul.f32 %v765, %v765
  %v1006 = vmul.f32 %v768, %v768
  %v1007 = vmul.f32 %v773, %v773
  %v1008 = vmul.f32 %v776, %v776
  %v1009 = vmul.f32 %v781, %v781
  %v1010 = vmul.f32 %v784, %v784
  %v1011 = vmul.f32 %v789, %v789
  %v1012 = vmul.f32 %v792, %v792
  %v1013 = vmul.f32 %v797, %v797
  %v1014 = vmul.f32 %v800, %v800
  %v1015 = vmul.f32 %v805, %v805
  %v1016 = vmul.f32 %v808, %v808
  %v1017 = vmul.f32 %v813, %v813
  %v1018 = vmul.f32 %v816, %v816
  %v1019 = vsel %vm819, %v955, 0.0
  %v1020 = vsel %vm819, %v956, 0.0
  %v1021 = vadd.f32 %v1019, %v1020
  %v1022 = vsel %vm819, %v957, 0.0
  %v1023 = vadd.f32 %v1021, %v1022
  %v1024 = vsel %vm819, %v958, 0.0
  %v1025 = vadd.f32 %v1023, %v1024
  %v1026 = vsel %vm819, %v959, 0.0
  %v1027 = vadd.f32 %v1025, %v1026
  %v1028 = vsel %vm819, %v960, 0.0
  %v1029 = vadd.f32 %v1027, %v1028
  %v1030 = vsel %vm819, %v961, 0.0
  %v1031 = vadd.f32 %v1029, %v1030
  %v1032 = vsel %vm819, %v962, 0.0
  %v1033 = vadd.f32 %v1031, %v1032
  %v1034 = vsel %vm819, %v963, 0.0
  %v1035 = vadd.f32 %v1033, %v1034
  %v1036 = vsel %vm819, %v964, 0.0
  %v1037 = vadd.f32 %v1035, %v1036
  %v1038 = vsel %vm819, %v965, 0.0
  %v1039 = vadd.f32 %v1037, %v1038
  %v1040 = vsel %vm819, %v966, 0.0
  %v1041 = vadd.f32 %v1039, %v1040
  %v1042 = vsel %vm819, %v967, 0.0
  %v1043 = vadd.f32 %v1041, %v1042
  %v1044 = vsel %vm819, %v968, 0.0
  %v1045 = vadd.f32 %v1043, %v1044
  %v1046 = vsel %vm819, %v969, 0.0
  %v1047 = vadd.f32 %v1045, %v1046
  %v1048 = vsel %vm819, %v970, 0.0
  %v1049 = vadd.f32 %v1047, %v1048
  %v1050 = vsel %vm819, %v971, 0.0
  %v1051 = vadd.f32 %v1049, %v1050
  %v1052 = vsel %vm819, %v972, 0.0
  %v1053 = vadd.f32 %v1051, %v1052
  %v1054 = vsel %vm819, %v973, 0.0
  %v1055 = vadd.f32 %v1053, %v1054
  %v1056 = vsel %vm819, %v974, 0.0
  %v1057 = vadd.f32 %v1055, %v1056
  %v1058 = vsel %vm819, %v975, 0.0
  %v1059 = vadd.f32 %v1057, %v1058
  %v1060 = vsel %vm819, %v976, 0.0
  %v1061 = vadd.f32 %v1059, %v1060
  %v1062 = vsel %vm819, %v977, 0.0
  %v1063 = vadd.f32 %v1061, %v1062
  %v1064 = vsel %vm819, %v978, 0.0
  %v1065 = vadd.f32 %v1063, %v1064
  %v1066 = vsel %vm819, %v979, 0.0
  %v1067 = vadd.f32 %v1065, %v1066
  %v1068 = vsel %vm819, %v980, 0.0
  %v1069 = vadd.f32 %v1067, %v1068
  %v1070 = vsel %vm819, %v981, 0.0
  %v1071 = vadd.f32 %v1069, %v1070
  %v1072 = vsel %vm819, %v982, 0.0
  %v1073 = vadd.f32 %v1071, %v1072
  %v1074 = vsel %vm819, %v983, 0.0
  %v1075 = vadd.f32 %v1073, %v1074
  %v1076 = vsel %vm819, %v984, 0.0
  %v1077 = vadd.f32 %v1075, %v1076
  %v1078 = vsel %vm819, %v985, 0.0
  %v1079 = vadd.f32 %v1077, %v1078
  %v1080 = vsel %vm819, %v986, 0.0
  %v1081 = vadd.f32 %v1079, %v1080
  %v1082 = vsel %vm819, %v987, 0.0
  %v1083 = vadd.f32 %v1081, %v1082
  %v1084 = vsel %vm819, %v988, 0.0
  %v1085 = vadd.f32 %v1083, %v1084
  %v1086 = vsel %vm819, %v989, 0.0
  %v1087 = vadd.f32 %v1085, %v1086
  %v1088 = vsel %vm819, %v990, 0.0
  %v1089 = vadd.f32 %v1087, %v1088
  %v1090 = vsel %vm819, %v991, 0.0
  %v1091 = vadd.f32 %v1089, %v1090
  %v1092 = vsel %vm819, %v992, 0.0
  %v1093 = vadd.f32 %v1091, %v1092
  %v1094 = vsel %vm819, %v993, 0.0
  %v1095 = vadd.f32 %v1093, %v1094
  %v1096 = vsel %vm819, %v994, 0.0
  %v1097 = vadd.f32 %v1095, %v1096
  %v1098 = vsel %vm819, %v995, 0.0
  %v1099 = vadd.f32 %v1097, %v1098
  %v1100 = vsel %vm819, %v996, 0.0
  %v1101 = vadd.f32 %v1099, %v1100
  %v1102 = vsel %vm819, %v997, 0.0
  %v1103 = vadd.f32 %v1101, %v1102
  %v1104 = vsel %vm819, %v998, 0.0
  %v1105 = vadd.f32 %v1103, %v1104
  %v1106 = vsel %vm819, %v999, 0.0
  %v1107 = vadd.f32 %v1105, %v1106
  %v1108 = vsel %vm819, %v1000, 0.0
  %v1109 = vadd.f32 %v1107, %v1108
  %v1110 = vsel %vm819, %v1001, 0.0
  %v1111 = vadd.f32 %v1109, %v1110
  %v1112 = vsel %vm819, %v1002, 0.0
  %v1113 = vadd.f32 %v1111, %v1112
  %v1114 = vsel %vm819, %v1003, 0.0
  %v1115 = vadd.f32 %v1113, %v1114
  %v1116 = vsel %vm819, %v1004, 0.0
  %v1117 = vadd.f32 %v1115, %v1116
  %v1118 = vsel %vm819, %v1005, 0.0
  %v1119 = vadd.f32 %v1117, %v1118
  %v1120 = vsel %vm819, %v1006, 0.0
  %v1121 = vadd.f32 %v1119, %v1120
  %v1122 = vsel %vm819, %v1007, 0.0
  %v1123 = vadd.f32 %v1121, %v1122
  %v1124 = vsel %vm819, %v1008, 0.0
  %v1125 = vadd.f32 %v1123, %v1124
  %v1126 = vsel %vm819, %v1009, 0.0
  %v1127 = vadd.f32 %v1125, %v1126
  %v1128 = vsel %vm819, %v1010, 0.0
  %v1129 = vadd.f32 %v1127, %v1128
  %v1130 = vsel %vm819, %v1011, 0.0
  %v1131 = vadd.f32 %v1129, %v1130
  %v1132 = vsel %vm819, %v1012, 0.0
  %v1133 = vadd.f32 %v1131, %v1132
  %v1134 = vsel %vm819, %v1013, 0.0
  %v1135 = vadd.f32 %v1133, %v1134
  %v1136 = vsel %vm819, %v1014, 0.0
  %v1137 = vadd.f32 %v1135, %v1136
  %v1138 = vsel %vm819, %v1015, 0.0
  %v1139 = vadd.f32 %v1137, %v1138
  %v1140 = vsel %vm819, %v1016, 0.0
  %v1141 = vadd.f32 %v1139, %v1140
  %v1142 = vsel %vm819, %v1017, 0.0
  %v1143 = vadd.f32 %v1141, %v1142
  %v1144 = vsel %vm819, %v1018, 0.0
  %v1145 = vadd.f32 %v1143, %v1144
  %v1146 = vrot.slane %v1145, 4
  %v1147 = vadd.f32 %v1145, %v1146
  %v1148 = vrot.slane %v1147, 2
  %v1149 = vadd.f32 %v1147, %v1148
  %v1150 = vrot.slane %v1149, 1
  %v1151 = vadd.f32 %v1149, %v1150
  %v1152 = vmul.f32 %v1151, %v953
  %v1153 = vmul.f32 %v954, %v954
  %v1154 = vsub.f32 %v1152, %v1153
  %v1155 = vmax.f32 %v1154, 0.0
  %v1156 = vsub.f32 %v565, %v954
  %v1157 = vsub.f32 %v568, %v954
  %v1158 = vsub.f32 %v573, %v954
  %v1159 = vsub.f32 %v576, %v954
  %v1160 = vsub.f32 %v581, %v954
  %v1161 = vsub.f32 %v584, %v954
  %v1162 = vsub.f32 %v589, %v954
  %v1163 = vsub.f32 %v592, %v954
  %v1164 = vsub.f32 %v597, %v954
  %v1165 = vsub.f32 %v600, %v954
  %v1166 = vsub.f32 %v605, %v954
  %v1167 = vsub.f32 %v608, %v954
  %v1168 = vsub.f32 %v613, %v954
  %v1169 = vsub.f32 %v616, %v954
  %v1170 = vsub.f32 %v621, %v954
  %v1171 = vsub.f32 %v624, %v954
  %v1172 = vsub.f32 %v629, %v954
  %v1173 = vsub.f32 %v632, %v954
  %v1174 = vsub.f32 %v637, %v954
  %v1175 = vsub.f32 %v640, %v954
  %v1176 = vsub.f32 %v645, %v954
  %v1177 = vsub.f32 %v648, %v954
  %v1178 = vsub.f32 %v653, %v954
  %v1179 = vsub.f32 %v656, %v954
  %v1180 = vsub.f32 %v661, %v954
  %v1181 = vsub.f32 %v664, %v954
  %v1182 = vsub.f32 %v669, %v954
  %v1183 = vsub.f32 %v672, %v954
  %v1184 = vsub.f32 %v677, %v954
  %v1185 = vsub.f32 %v680, %v954
  %v1186 = vsub.f32 %v685, %v954
  %v1187 = vsub.f32 %v688, %v954
  %v1188 = vsub.f32 %v693, %v954
  %v1189 = vsub.f32 %v696, %v954
  %v1190 = vsub.f32 %v701, %v954
  %v1191 = vsub.f32 %v704, %v954
  %v1192 = vsub.f32 %v709, %v954
  %v1193 = vsub.f32 %v712, %v954
  %v1194 = vsub.f32 %v717, %v954
  %v1195 = vsub.f32 %v720, %v954
  %v1196 = vsub.f32 %v725, %v954
  %v1197 = vsub.f32 %v728, %v954
  %v1198 = vsub.f32 %v733, %v954
  %v1199 = vsub.f32 %v736, %v954
  %v1200 = vsub.f32 %v741, %v954
  %v1201 = vsub.f32 %v744, %v954
  %v1202 = vsub.f32 %v749, %v954
  %v1203 = vsub.f32 %v752, %v954
  %v1204 = vsub.f32 %v757, %v954
  %v1205 = vsub.f32 %v760, %v954
  %v1206 = vsub.f32 %v765, %v954
  %v1207 = vsub.f32 %v768, %v954
  %v1208 = vsub.f32 %v773, %v954
  %v1209 = vsub.f32 %v776, %v954
  %v1210 = vsub.f32 %v781, %v954
  %v1211 = vsub.f32 %v784, %v954
  %v1212 = vsub.f32 %v789, %v954
  %v1213 = vsub.f32 %v792, %v954
  %v1214 = vsub.f32 %v797, %v954
  %v1215 = vsub.f32 %v800, %v954
  %v1216 = vsub.f32 %v805, %v954
  %v1217 = vsub.f32 %v808, %v954
  %v1218 = vsub.f32 %v813, %v954
  %v1219 = vsub.f32 %v816, %v954
  %v1220 = vadd.f32 %v1155, 1e-05
  %v1221 = vrsqrt.pop %v1220
  %v1222 = vmul.f32 %v1156, %v1221
  %v1223 = vmul.f32 %v1157, %v1221
  %v1224 = vmul.f32 %v1158, %v1221
  %v1225 = vmul.f32 %v1159, %v1221
  %v1226 = vmul.f32 %v1160, %v1221
  %v1227 = vmul.f32 %v1161, %v1221
  %v1228 = vmul.f32 %v1162, %v1221
  %v1229 = vmul.f32 %v1163, %v1221
  %v1230 = vmul.f32 %v1164, %v1221
  %v1231 = vmul.f32 %v1165, %v1221
  %v1232 = vmul.f32 %v1166, %v1221
  %v1233 = vmul.f32 %v1167, %v1221
  %v1234 = vmul.f32 %v1168, %v1221
  %v1235 = vmul.f32 %v1169, %v1221
  %v1236 = vmul.f32 %v1170, %v1221
  %v1237 = vmul.f32 %v1171, %v1221
  %v1238 = vmul.f32 %v1172, %v1221
  %v1239 = vmul.f32 %v1173, %v1221
  %v1240 = vmul.f32 %v1174, %v1221
  %v1241 = vmul.f32 %v1175, %v1221
  %v1242 = vmul.f32 %v1176, %v1221
  %v1243 = vmul.f32 %v1177, %v1221
  %v1244 = vmul.f32 %v1178, %v1221
  %v1245 = vmul.f32 %v1179, %v1221
  %v1246 = vmul.f32 %v1180, %v1221
  %v1247 = vmul.f32 %v1181, %v1221
  %v1248 = vmul.f32 %v1182, %v1221
  %v1249 = vmul.f32 %v1183, %v1221
  %v1250 = vmul.f32 %v1184, %v1221
  %v1251 = vmul.f32 %v1185, %v1221
  %v1252 = vmul.f32 %v1186, %v1221
  %v1253 = vmul.f32 %v1187, %v1221
  %v1254 = vmul.f32 %v1188, %v1221
  %v1255 = vmul.f32 %v1189, %v1221
  %v1256 = vmul.f32 %v1190, %v1221
  %v1257 = vmul.f32 %v1191, %v1221
  %v1258 = vmul.f32 %v1192, %v1221
  %v1259 = vmul.f32 %v1193, %v1221
  %v1260 = vmul.f32 %v1194, %v1221
  %v1261 = vmul.f32 %v1195, %v1221
  %v1262 = vmul.f32 %v1196, %v1221
  %v1263 = vmul.f32 %v1197, %v1221
  %v1264 = vmul.f32 %v1198, %v1221
  %v1265 = vmul.f32 %v1199, %v1221
  %v1266 = vmul.f32 %v1200, %v1221
  %v1267 = vmul.f32 %v1201, %v1221
  %v1268 = vmul.f32 %v1202, %v1221
  %v1269 = vmul.f32 %v1203, %v1221
  %v1270 = vmul.f32 %v1204, %v1221
  %v1271 = vmul.f32 %v1205, %v1221
  %v1272 = vmul.f32 %v1206, %v1221
  %v1273 = vmul.f32 %v1207, %v1221
  %v1274 = vmul.f32 %v1208, %v1221
  %v1275 = vmul.f32 %v1209, %v1221
  %v1276 = vmul.f32 %v1210, %v1221
  %v1277 = vmul.f32 %v1211, %v1221
  %v1278 = vmul.f32 %v1212, %v1221
  %v1279 = vmul.f32 %v1213, %v1221
  %v1280 = vmul.f32 %v1214, %v1221
  %v1281 = vmul.f32 %v1215, %v1221
  %v1282 = vmul.f32 %v1216, %v1221
  %v1283 = vmul.f32 %v1217, %v1221
  %v1284 = vmul.f32 %v1218, %v1221
  %v1285 = vmul.f32 %v1219, %v1221
  %v1286 = vld [vmem:[%s2] sm:$0x1]
  %v1288 = vlaneseq
  %v1289 = vshrl.u32 %v1288, 7
  %v1290 = vsub.s32 0, %v1289
  %v1291 = vrot.slane %v1286, %v1290
  %v1293 = vmul.f32 %v1222, %v1291
  %v1294 = vmul.f32 %v1223, %v1291
  %v1295 = vmul.f32 %v1224, %v1291
  %v1296 = vmul.f32 %v1225, %v1291
  %v1297 = vmul.f32 %v1226, %v1291
  %v1298 = vmul.f32 %v1227, %v1291
  %v1299 = vmul.f32 %v1228, %v1291
  %v1300 = vmul.f32 %v1229, %v1291
  %v1301 = vmul.f32 %v1230, %v1291
  %v1302 = vmul.f32 %v1231, %v1291
  %v1303 = vmul.f32 %v1232, %v1291
  %v1304 = vmul.f32 %v1233, %v1291
  %v1305 = vmul.f32 %v1234, %v1291
  %v1306 = vmul.f32 %v1235, %v1291
  %v1307 = vmul.f32 %v1236, %v1291
  %v1308 = vmul.f32 %v1237, %v1291
  %v1309 = vmul.f32 %v1238, %v1291
  %v1310 = vmul.f32 %v1239, %v1291
  %v1311 = vmul.f32 %v1240, %v1291
  %v1312 = vmul.f32 %v1241, %v1291
  %v1313 = vmul.f32 %v1242, %v1291
  %v1314 = vmul.f32 %v1243, %v1291
  %v1315 = vmul.f32 %v1244, %v1291
  %v1316 = vmul.f32 %v1245, %v1291
  %v1317 = vmul.f32 %v1246, %v1291
  %v1318 = vmul.f32 %v1247, %v1291
  %v1319 = vmul.f32 %v1248, %v1291
  %v1320 = vmul.f32 %v1249, %v1291
  %v1321 = vmul.f32 %v1250, %v1291
  %v1322 = vmul.f32 %v1251, %v1291
  %v1323 = vmul.f32 %v1252, %v1291
  %v1324 = vmul.f32 %v1253, %v1291
  %v1325 = vmul.f32 %v1254, %v1291
  %v1326 = vmul.f32 %v1255, %v1291
  %v1327 = vmul.f32 %v1256, %v1291
  %v1328 = vmul.f32 %v1257, %v1291
  %v1329 = vmul.f32 %v1258, %v1291
  %v1330 = vmul.f32 %v1259, %v1291
  %v1331 = vmul.f32 %v1260, %v1291
  %v1332 = vmul.f32 %v1261, %v1291
  %v1333 = vmul.f32 %v1262, %v1291
  %v1334 = vmul.f32 %v1263, %v1291
  %v1335 = vmul.f32 %v1264, %v1291
  %v1336 = vmul.f32 %v1265, %v1291
  %v1337 = vmul.f32 %v1266, %v1291
  %v1338 = vmul.f32 %v1267, %v1291
  %v1339 = vmul.f32 %v1268, %v1291
  %v1340 = vmul.f32 %v1269, %v1291
  %v1341 = vmul.f32 %v1270, %v1291
  %v1342 = vmul.f32 %v1271, %v1291
  %v1343 = vmul.f32 %v1272, %v1291
  %v1344 = vmul.f32 %v1273, %v1291
  %v1345 = vmul.f32 %v1274, %v1291
  %v1346 = vmul.f32 %v1275, %v1291
  %v1347 = vmul.f32 %v1276, %v1291
  %v1348 = vmul.f32 %v1277, %v1291
  %v1349 = vmul.f32 %v1278, %v1291
  %v1350 = vmul.f32 %v1279, %v1291
  %v1351 = vmul.f32 %v1280, %v1291
  %v1352 = vmul.f32 %v1281, %v1291
  %v1353 = vmul.f32 %v1282, %v1291
  %v1354 = vmul.f32 %v1283, %v1291
  %v1355 = vmul.f32 %v1284, %v1291
  %v1356 = vmul.f32 %v1285, %v1291
  %v1357 = vld [vmem:[%s3] sm:$0x1]
  %v1359 = vlaneseq
  %v1360 = vshrl.u32 %v1359, 7
  %v1361 = vsub.s32 0, %v1360
  %v1362 = vrot.slane %v1357, %v1361
  %v1364 = vadd.f32 %v1293, %v1362
  %v1365 = vadd.f32 %v1294, %v1362
  %v1366 = vadd.f32 %v1295, %v1362
  %v1367 = vadd.f32 %v1296, %v1362
  %v1368 = vadd.f32 %v1297, %v1362
  %v1369 = vadd.f32 %v1298, %v1362
  %v1370 = vadd.f32 %v1299, %v1362
  %v1371 = vadd.f32 %v1300, %v1362
  %v1372 = vadd.f32 %v1301, %v1362
  %v1373 = vadd.f32 %v1302, %v1362
  %v1374 = vadd.f32 %v1303, %v1362
  %v1375 = vadd.f32 %v1304, %v1362
  %v1376 = vadd.f32 %v1305, %v1362
  %v1377 = vadd.f32 %v1306, %v1362
  %v1378 = vadd.f32 %v1307, %v1362
  %v1379 = vadd.f32 %v1308, %v1362
  %v1380 = vadd.f32 %v1309, %v1362
  %v1381 = vadd.f32 %v1310, %v1362
  %v1382 = vadd.f32 %v1311, %v1362
  %v1383 = vadd.f32 %v1312, %v1362
  %v1384 = vadd.f32 %v1313, %v1362
  %v1385 = vadd.f32 %v1314, %v1362
  %v1386 = vadd.f32 %v1315, %v1362
  %v1387 = vadd.f32 %v1316, %v1362
  %v1388 = vadd.f32 %v1317, %v1362
  %v1389 = vadd.f32 %v1318, %v1362
  %v1390 = vadd.f32 %v1319, %v1362
  %v1391 = vadd.f32 %v1320, %v1362
  %v1392 = vadd.f32 %v1321, %v1362
  %v1393 = vadd.f32 %v1322, %v1362
  %v1394 = vadd.f32 %v1323, %v1362
  %v1395 = vadd.f32 %v1324, %v1362
  %v1396 = vadd.f32 %v1325, %v1362
  %v1397 = vadd.f32 %v1326, %v1362
  %v1398 = vadd.f32 %v1327, %v1362
  %v1399 = vadd.f32 %v1328, %v1362
  %v1400 = vadd.f32 %v1329, %v1362
  %v1401 = vadd.f32 %v1330, %v1362
  %v1402 = vadd.f32 %v1331, %v1362
  %v1403 = vadd.f32 %v1332, %v1362
  %v1404 = vadd.f32 %v1333, %v1362
  %v1405 = vadd.f32 %v1334, %v1362
  %v1406 = vadd.f32 %v1335, %v1362
  %v1407 = vadd.f32 %v1336, %v1362
  %v1408 = vadd.f32 %v1337, %v1362
  %v1409 = vadd.f32 %v1338, %v1362
  %v1410 = vadd.f32 %v1339, %v1362
  %v1411 = vadd.f32 %v1340, %v1362
  %v1412 = vadd.f32 %v1341, %v1362
  %v1413 = vadd.f32 %v1342, %v1362
  %v1414 = vadd.f32 %v1343, %v1362
  %v1415 = vadd.f32 %v1344, %v1362
  %v1416 = vadd.f32 %v1345, %v1362
  %v1417 = vadd.f32 %v1346, %v1362
  %v1418 = vadd.f32 %v1347, %v1362
  %v1419 = vadd.f32 %v1348, %v1362
  %v1420 = vadd.f32 %v1349, %v1362
  %v1421 = vadd.f32 %v1350, %v1362
  %v1422 = vadd.f32 %v1351, %v1362
  %v1423 = vadd.f32 %v1352, %v1362
  %v1424 = vadd.f32 %v1353, %v1362
  %v1425 = vadd.f32 %v1354, %v1362
  %v1426 = vadd.f32 %v1355, %v1362
  %v1427 = vadd.f32 %v1356, %v1362
  %vm1428 = vcmp.gt.f32.partialorder %v1364, 0.0
  %vm1429 = vcmp.gt.f32.partialorder %v1365, 0.0
  %vm1430 = vcmp.gt.f32.partialorder %v1366, 0.0
  %vm1431 = vcmp.gt.f32.partialorder %v1367, 0.0
  %vm1432 = vcmp.gt.f32.partialorder %v1368, 0.0
  %vm1433 = vcmp.gt.f32.partialorder %v1369, 0.0
  %vm1434 = vcmp.gt.f32.partialorder %v1370, 0.0
  %vm1435 = vcmp.gt.f32.partialorder %v1371, 0.0
  %vm1436 = vcmp.gt.f32.partialorder %v1372, 0.0
  %vm1437 = vcmp.gt.f32.partialorder %v1373, 0.0
  %vm1438 = vcmp.gt.f32.partialorder %v1374, 0.0
  %vm1439 = vcmp.gt.f32.partialorder %v1375, 0.0
  %vm1440 = vcmp.gt.f32.partialorder %v1376, 0.0
  %vm1441 = vcmp.gt.f32.partialorder %v1377, 0.0
  %vm1442 = vcmp.gt.f32.partialorder %v1378, 0.0
  %vm1443 = vcmp.gt.f32.partialorder %v1379, 0.0
  %vm1444 = vcmp.gt.f32.partialorder %v1380, 0.0
  %vm1445 = vcmp.gt.f32.partialorder %v1381, 0.0
  %vm1446 = vcmp.gt.f32.partialorder %v1382, 0.0
  %vm1447 = vcmp.gt.f32.partialorder %v1383, 0.0
  %vm1448 = vcmp.gt.f32.partialorder %v1384, 0.0
  %vm1449 = vcmp.gt.f32.partialorder %v1385, 0.0
  %vm1450 = vcmp.gt.f32.partialorder %v1386, 0.0
  %vm1451 = vcmp.gt.f32.partialorder %v1387, 0.0
  %vm1452 = vcmp.gt.f32.partialorder %v1388, 0.0
  %vm1453 = vcmp.gt.f32.partialorder %v1389, 0.0
  %vm1454 = vcmp.gt.f32.partialorder %v1390, 0.0
  %vm1455 = vcmp.gt.f32.partialorder %v1391, 0.0
  %vm1456 = vcmp.gt.f32.partialorder %v1392, 0.0
  %vm1457 = vcmp.gt.f32.partialorder %v1393, 0.0
  %vm1458 = vcmp.gt.f32.partialorder %v1394, 0.0
  %vm1459 = vcmp.gt.f32.partialorder %v1395, 0.0
  %vm1460 = vcmp.gt.f32.partialorder %v1396, 0.0
  %vm1461 = vcmp.gt.f32.partialorder %v1397, 0.0
  %vm1462 = vcmp.gt.f32.partialorder %v1398, 0.0
  %vm1463 = vcmp.gt.f32.partialorder %v1399, 0.0
  %vm1464 = vcmp.gt.f32.partialorder %v1400, 0.0
  %vm1465 = vcmp.gt.f32.partialorder %v1401, 0.0
  %vm1466 = vcmp.gt.f32.partialorder %v1402, 0.0
  %vm1467 = vcmp.gt.f32.partialorder %v1403, 0.0
  %vm1468 = vcmp.gt.f32.partialorder %v1404, 0.0
  %vm1469 = vcmp.gt.f32.partialorder %v1405, 0.0
  %vm1470 = vcmp.gt.f32.partialorder %v1406, 0.0
  %vm1471 = vcmp.gt.f32.partialorder %v1407, 0.0
  %vm1472 = vcmp.gt.f32.partialorder %v1408, 0.0
  %vm1473 = vcmp.gt.f32.partialorder %v1409, 0.0
  %vm1474 = vcmp.gt.f32.partialorder %v1410, 0.0
  %vm1475 = vcmp.gt.f32.partialorder %v1411, 0.0
  %vm1476 = vcmp.gt.f32.partialorder %v1412, 0.0
  %vm1477 = vcmp.gt.f32.partialorder %v1413, 0.0
  %vm1478 = vcmp.gt.f32.partialorder %v1414, 0.0
  %vm1479 = vcmp.gt.f32.partialorder %v1415, 0.0
  %vm1480 = vcmp.gt.f32.partialorder %v1416, 0.0
  %vm1481 = vcmp.gt.f32.partialorder %v1417, 0.0
  %vm1482 = vcmp.gt.f32.partialorder %v1418, 0.0
  %vm1483 = vcmp.gt.f32.partialorder %v1419, 0.0
  %vm1484 = vcmp.gt.f32.partialorder %v1420, 0.0
  %vm1485 = vcmp.gt.f32.partialorder %v1421, 0.0
  %vm1486 = vcmp.gt.f32.partialorder %v1422, 0.0
  %vm1487 = vcmp.gt.f32.partialorder %v1423, 0.0
  %vm1488 = vcmp.gt.f32.partialorder %v1424, 0.0
  %vm1489 = vcmp.gt.f32.partialorder %v1425, 0.0
  %vm1490 = vcmp.gt.f32.partialorder %v1426, 0.0
  %vm1491 = vcmp.gt.f32.partialorder %v1427, 0.0
  %v1492 = vmul.f32 %v1364, 0.2
  %v1493 = vmul.f32 %v1365, 0.2
  %v1494 = vmul.f32 %v1366, 0.2
  %v1495 = vmul.f32 %v1367, 0.2
  %v1496 = vmul.f32 %v1368, 0.2
  %v1497 = vmul.f32 %v1369, 0.2
  %v1498 = vmul.f32 %v1370, 0.2
  %v1499 = vmul.f32 %v1371, 0.2
  %v1500 = vmul.f32 %v1372, 0.2
  %v1501 = vmul.f32 %v1373, 0.2
  %v1502 = vmul.f32 %v1374, 0.2
  %v1503 = vmul.f32 %v1375, 0.2
  %v1504 = vmul.f32 %v1376, 0.2
  %v1505 = vmul.f32 %v1377, 0.2
  %v1506 = vmul.f32 %v1378, 0.2
  %v1507 = vmul.f32 %v1379, 0.2
  %v1508 = vmul.f32 %v1380, 0.2
  %v1509 = vmul.f32 %v1381, 0.2
  %v1510 = vmul.f32 %v1382, 0.2
  %v1511 = vmul.f32 %v1383, 0.2
  %v1512 = vmul.f32 %v1384, 0.2
  %v1513 = vmul.f32 %v1385, 0.2
  %v1514 = vmul.f32 %v1386, 0.2
  %v1515 = vmul.f32 %v1387, 0.2
  %v1516 = vmul.f32 %v1388, 0.2
  %v1517 = vmul.f32 %v1389, 0.2
  %v1518 = vmul.f32 %v1390, 0.2
  %v1519 = vmul.f32 %v1391, 0.2
  %v1520 = vmul.f32 %v1392, 0.2
  %v1521 = vmul.f32 %v1393, 0.2
  %v1522 = vmul.f32 %v1394, 0.2
  %v1523 = vmul.f32 %v1395, 0.2
  %v1524 = vmul.f32 %v1396, 0.2
  %v1525 = vmul.f32 %v1397, 0.2
  %v1526 = vmul.f32 %v1398, 0.2
  %v1527 = vmul.f32 %v1399, 0.2
  %v1528 = vmul.f32 %v1400, 0.2
  %v1529 = vmul.f32 %v1401, 0.2
  %v1530 = vmul.f32 %v1402, 0.2
  %v1531 = vmul.f32 %v1403, 0.2
  %v1532 = vmul.f32 %v1404, 0.2
  %v1533 = vmul.f32 %v1405, 0.2
  %v1534 = vmul.f32 %v1406, 0.2
  %v1535 = vmul.f32 %v1407, 0.2
  %v1536 = vmul.f32 %v1408, 0.2
  %v1537 = vmul.f32 %v1409, 0.2
  %v1538 = vmul.f32 %v1410, 0.2
  %v1539 = vmul.f32 %v1411, 0.2
  %v1540 = vmul.f32 %v1412, 0.2
  %v1541 = vmul.f32 %v1413, 0.2
  %v1542 = vmul.f32 %v1414, 0.2
  %v1543 = vmul.f32 %v1415, 0.2
  %v1544 = vmul.f32 %v1416, 0.2
  %v1545 = vmul.f32 %v1417, 0.2
  %v1546 = vmul.f32 %v1418, 0.2
  %v1547 = vmul.f32 %v1419, 0.2
  %v1548 = vmul.f32 %v1420, 0.2
  %v1549 = vmul.f32 %v1421, 0.2
  %v1550 = vmul.f32 %v1422, 0.2
  %v1551 = vmul.f32 %v1423, 0.2
  %v1552 = vmul.f32 %v1424, 0.2
  %v1553 = vmul.f32 %v1425, 0.2
  %v1554 = vmul.f32 %v1426, 0.2
  %v1555 = vmul.f32 %v1427, 0.2
  %v1556 = vsel %vm1428, %v1364, %v1492
  %v1557 = vsel %vm1429, %v1365, %v1493
  %v1558 = vsel %vm1430, %v1366, %v1494
  %v1559 = vsel %vm1431, %v1367, %v1495
  %v1560 = vsel %vm1432, %v1368, %v1496
  %v1561 = vsel %vm1433, %v1369, %v1497
  %v1562 = vsel %vm1434, %v1370, %v1498
  %v1563 = vsel %vm1435, %v1371, %v1499
  %v1564 = vsel %vm1436, %v1372, %v1500
  %v1565 = vsel %vm1437, %v1373, %v1501
  %v1566 = vsel %vm1438, %v1374, %v1502
  %v1567 = vsel %vm1439, %v1375, %v1503
  %v1568 = vsel %vm1440, %v1376, %v1504
  %v1569 = vsel %vm1441, %v1377, %v1505
  %v1570 = vsel %vm1442, %v1378, %v1506
  %v1571 = vsel %vm1443, %v1379, %v1507
  %v1572 = vsel %vm1444, %v1380, %v1508
  %v1573 = vsel %vm1445, %v1381, %v1509
  %v1574 = vsel %vm1446, %v1382, %v1510
  %v1575 = vsel %vm1447, %v1383, %v1511
  %v1576 = vsel %vm1448, %v1384, %v1512
  %v1577 = vsel %vm1449, %v1385, %v1513
  %v1578 = vsel %vm1450, %v1386, %v1514
  %v1579 = vsel %vm1451, %v1387, %v1515
  %v1580 = vsel %vm1452, %v1388, %v1516
  %v1581 = vsel %vm1453, %v1389, %v1517
  %v1582 = vsel %vm1454, %v1390, %v1518
  %v1583 = vsel %vm1455, %v1391, %v1519
  %v1584 = vsel %vm1456, %v1392, %v1520
  %v1585 = vsel %vm1457, %v1393, %v1521
  %v1586 = vsel %vm1458, %v1394, %v1522
  %v1587 = vsel %vm1459, %v1395, %v1523
  %v1588 = vsel %vm1460, %v1396, %v1524
  %v1589 = vsel %vm1461, %v1397, %v1525
  %v1590 = vsel %vm1462, %v1398, %v1526
  %v1591 = vsel %vm1463, %v1399, %v1527
  %v1592 = vsel %vm1464, %v1400, %v1528
  %v1593 = vsel %vm1465, %v1401, %v1529
  %v1594 = vsel %vm1466, %v1402, %v1530
  %v1595 = vsel %vm1467, %v1403, %v1531
  %v1596 = vsel %vm1468, %v1404, %v1532
  %v1597 = vsel %vm1469, %v1405, %v1533
  %v1598 = vsel %vm1470, %v1406, %v1534
  %v1599 = vsel %vm1471, %v1407, %v1535
  %v1600 = vsel %vm1472, %v1408, %v1536
  %v1601 = vsel %vm1473, %v1409, %v1537
  %v1602 = vsel %vm1474, %v1410, %v1538
  %v1603 = vsel %vm1475, %v1411, %v1539
  %v1604 = vsel %vm1476, %v1412, %v1540
  %v1605 = vsel %vm1477, %v1413, %v1541
  %v1606 = vsel %vm1478, %v1414, %v1542
  %v1607 = vsel %vm1479, %v1415, %v1543
  %v1608 = vsel %vm1480, %v1416, %v1544
  %v1609 = vsel %vm1481, %v1417, %v1545
  %v1610 = vsel %vm1482, %v1418, %v1546
  %v1611 = vsel %vm1483, %v1419, %v1547
  %v1612 = vsel %vm1484, %v1420, %v1548
  %v1613 = vsel %vm1485, %v1421, %v1549
  %v1614 = vsel %vm1486, %v1422, %v1550
  %v1615 = vsel %vm1487, %v1423, %v1551
  %v1616 = vsel %vm1488, %v1424, %v1552
  %v1617 = vsel %vm1489, %v1425, %v1553
  %v1618 = vsel %vm1490, %v1426, %v1554
  %v1619 = vsel %vm1491, %v1427, %v1555
  %v1620 = vpack.c.bf16 %v1557, %v1556
  %v1621 = vpack.c.bf16 %v1559, %v1558
  %v1622 = vpack.c.bf16 %v1561, %v1560
  %v1623 = vpack.c.bf16 %v1563, %v1562
  %v1624 = vpack.c.bf16 %v1565, %v1564
  %v1625 = vpack.c.bf16 %v1567, %v1566
  %v1626 = vpack.c.bf16 %v1569, %v1568
  %v1627 = vpack.c.bf16 %v1571, %v1570
  %v1628 = vpack.c.bf16 %v1573, %v1572
  %v1629 = vpack.c.bf16 %v1575, %v1574
  %v1630 = vpack.c.bf16 %v1577, %v1576
  %v1631 = vpack.c.bf16 %v1579, %v1578
  %v1632 = vpack.c.bf16 %v1581, %v1580
  %v1633 = vpack.c.bf16 %v1583, %v1582
  %v1634 = vpack.c.bf16 %v1585, %v1584
  %v1635 = vpack.c.bf16 %v1587, %v1586
  %v1636 = vpack.c.bf16 %v1589, %v1588
  %v1637 = vpack.c.bf16 %v1591, %v1590
  %v1638 = vpack.c.bf16 %v1593, %v1592
  %v1639 = vpack.c.bf16 %v1595, %v1594
  %v1640 = vpack.c.bf16 %v1597, %v1596
  %v1641 = vpack.c.bf16 %v1599, %v1598
  %v1642 = vpack.c.bf16 %v1601, %v1600
  %v1643 = vpack.c.bf16 %v1603, %v1602
  %v1644 = vpack.c.bf16 %v1605, %v1604
  %v1645 = vpack.c.bf16 %v1607, %v1606
  %v1646 = vpack.c.bf16 %v1609, %v1608
  %v1647 = vpack.c.bf16 %v1611, %v1610
  %v1648 = vpack.c.bf16 %v1613, %v1612
  %v1649 = vpack.c.bf16 %v1615, %v1614
  %v1650 = vpack.c.bf16 %v1617, %v1616
  %v1651 = vpack.c.bf16 %v1619, %v1618
  %v1684 = vunpack.c.l.b16 %v1620
  %v1685 = vunpack.c.h.b16 %v1620
  %v1686 = vunpack.c.l.b16 %v1621
  %v1687 = vunpack.c.h.b16 %v1621
  %v1688 = vunpack.c.l.b16 %v1622
  %v1689 = vunpack.c.h.b16 %v1622
  %v1690 = vunpack.c.l.b16 %v1623
  %v1691 = vunpack.c.h.b16 %v1623
  %v1692 = vunpack.c.l.b16 %v1624
  %v1693 = vunpack.c.h.b16 %v1624
  %v1694 = vunpack.c.l.b16 %v1625
  %v1695 = vunpack.c.h.b16 %v1625
  %v1696 = vunpack.c.l.b16 %v1626
  %v1697 = vunpack.c.h.b16 %v1626
  %v1698 = vunpack.c.l.b16 %v1627
  %v1699 = vunpack.c.h.b16 %v1627
  %v1700 = vunpack.c.l.b16 %v1628
  %v1701 = vunpack.c.h.b16 %v1628
  %v1702 = vunpack.c.l.b16 %v1629
  %v1703 = vunpack.c.h.b16 %v1629
  %v1704 = vunpack.c.l.b16 %v1630
  %v1705 = vunpack.c.h.b16 %v1630
  %v1706 = vunpack.c.l.b16 %v1631
  %v1707 = vunpack.c.h.b16 %v1631
  %v1708 = vunpack.c.l.b16 %v1632
  %v1709 = vunpack.c.h.b16 %v1632
  %v1710 = vunpack.c.l.b16 %v1633
  %v1711 = vunpack.c.h.b16 %v1633
  %v1712 = vunpack.c.l.b16 %v1634
  %v1713 = vunpack.c.h.b16 %v1634
  %v1714 = vunpack.c.l.b16 %v1635
  %v1715 = vunpack.c.h.b16 %v1635
  %v1716 = vunpack.c.l.b16 %v1636
  %v1717 = vunpack.c.h.b16 %v1636
  %v1718 = vunpack.c.l.b16 %v1637
  %v1719 = vunpack.c.h.b16 %v1637
  %v1720 = vunpack.c.l.b16 %v1638
  %v1721 = vunpack.c.h.b16 %v1638
  %v1722 = vunpack.c.l.b16 %v1639
  %v1723 = vunpack.c.h.b16 %v1639
  %v1724 = vunpack.c.l.b16 %v1640
  %v1725 = vunpack.c.h.b16 %v1640
  %v1726 = vunpack.c.l.b16 %v1641
  %v1727 = vunpack.c.h.b16 %v1641
  %v1728 = vunpack.c.l.b16 %v1642
  %v1729 = vunpack.c.h.b16 %v1642
  %v1730 = vunpack.c.l.b16 %v1643
  %v1731 = vunpack.c.h.b16 %v1643
  %v1732 = vunpack.c.l.b16 %v1644
  %v1733 = vunpack.c.h.b16 %v1644
  %v1734 = vunpack.c.l.b16 %v1645
  %v1735 = vunpack.c.h.b16 %v1645
  %v1736 = vunpack.c.l.b16 %v1646
  %v1737 = vunpack.c.h.b16 %v1646
  %v1738 = vunpack.c.l.b16 %v1647
  %v1739 = vunpack.c.h.b16 %v1647
  %v1740 = vunpack.c.l.b16 %v1648
  %v1741 = vunpack.c.h.b16 %v1648
  %v1742 = vunpack.c.l.b16 %v1649
  %v1743 = vunpack.c.h.b16 %v1649
  %v1744 = vunpack.c.l.b16 %v1650
  %v1745 = vunpack.c.h.b16 %v1650
  %v1746 = vunpack.c.l.b16 %v1651
  %v1747 = vunpack.c.h.b16 %v1651
  %v1748 = vpack.c.b16 %v1684, %v1684
  %v1749 = vpack.c.b16 %v1685, %v1685
  %v1750 = vpack.c.b16 %v1686, %v1686
  %v1751 = vpack.c.b16 %v1687, %v1687
  %v1752 = vpack.c.b16 %v1688, %v1688
  %v1753 = vpack.c.b16 %v1689, %v1689
  %v1754 = vpack.c.b16 %v1690, %v1690
  %v1755 = vpack.c.b16 %v1691, %v1691
  %v1756 = vpack.c.b16 %v1692, %v1692
  %v1757 = vpack.c.b16 %v1693, %v1693
  %v1758 = vpack.c.b16 %v1694, %v1694
  %v1759 = vpack.c.b16 %v1695, %v1695
  %v1760 = vpack.c.b16 %v1696, %v1696
  %v1761 = vpack.c.b16 %v1697, %v1697
  %v1762 = vpack.c.b16 %v1698, %v1698
  %v1763 = vpack.c.b16 %v1699, %v1699
  %v1764 = vpack.c.b16 %v1700, %v1700
  %v1765 = vpack.c.b16 %v1701, %v1701
  %v1766 = vpack.c.b16 %v1702, %v1702
  %v1767 = vpack.c.b16 %v1703, %v1703
  %v1768 = vpack.c.b16 %v1704, %v1704
  %v1769 = vpack.c.b16 %v1705, %v1705
  %v1770 = vpack.c.b16 %v1706, %v1706
  %v1771 = vpack.c.b16 %v1707, %v1707
  %v1772 = vpack.c.b16 %v1708, %v1708
  %v1773 = vpack.c.b16 %v1709, %v1709
  %v1774 = vpack.c.b16 %v1710, %v1710
  %v1775 = vpack.c.b16 %v1711, %v1711
  %v1776 = vpack.c.b16 %v1712, %v1712
  %v1777 = vpack.c.b16 %v1713, %v1713
  %v1778 = vpack.c.b16 %v1714, %v1714
  %v1779 = vpack.c.b16 %v1715, %v1715
  %v1780 = vpack.c.b16 %v1716, %v1716
  %v1781 = vpack.c.b16 %v1717, %v1717
  %v1782 = vpack.c.b16 %v1718, %v1718
  %v1783 = vpack.c.b16 %v1719, %v1719
  %v1784 = vpack.c.b16 %v1720, %v1720
  %v1785 = vpack.c.b16 %v1721, %v1721
  %v1786 = vpack.c.b16 %v1722, %v1722
  %v1787 = vpack.c.b16 %v1723, %v1723
  %v1788 = vpack.c.b16 %v1724, %v1724
  %v1789 = vpack.c.b16 %v1725, %v1725
  %v1790 = vpack.c.b16 %v1726, %v1726
  %v1791 = vpack.c.b16 %v1727, %v1727
  %v1792 = vpack.c.b16 %v1728, %v1728
  %v1793 = vpack.c.b16 %v1729, %v1729
  %v1794 = vpack.c.b16 %v1730, %v1730
  %v1795 = vpack.c.b16 %v1731, %v1731
  %v1796 = vpack.c.b16 %v1732, %v1732
  %v1797 = vpack.c.b16 %v1733, %v1733
  %v1798 = vpack.c.b16 %v1734, %v1734
  %v1799 = vpack.c.b16 %v1735, %v1735
  %v1800 = vpack.c.b16 %v1736, %v1736
  %v1801 = vpack.c.b16 %v1737, %v1737
  %v1802 = vpack.c.b16 %v1738, %v1738
  %v1803 = vpack.c.b16 %v1739, %v1739
  %v1804 = vpack.c.b16 %v1740, %v1740
  %v1805 = vpack.c.b16 %v1741, %v1741
  %v1806 = vpack.c.b16 %v1742, %v1742
  %v1807 = vpack.c.b16 %v1743, %v1743
  %v1808 = vpack.c.b16 %v1744, %v1744
  %v1809 = vpack.c.b16 %v1745, %v1745
  %v1810 = vpack.c.b16 %v1746, %v1746
  %v1811 = vpack.c.b16 %v1747, %v1747
  %vm1876 = vcmask 257024
  %1877 = vst.msk [vmem:[%s4] sm:$0xf] %vm1876, %v1748
  %1878 = vst.msk [vmem:[%s4 + $0x4] sm:$0xf] %vm1876, %v1749
  %1879 = vst.msk [vmem:[%s4 + $0x8] sm:$0xf] %vm1876, %v1750
  %1880 = vst.msk [vmem:[%s4 + $0xc] sm:$0xf] %vm1876, %v1751
  %1881 = vst.msk [vmem:[%s4 + $0x10] sm:$0xf] %vm1876, %v1752
  %1882 = vst.msk [vmem:[%s4 + $0x14] sm:$0xf] %vm1876, %v1753
  %1883 = vst.msk [vmem:[%s4 + $0x18] sm:$0xf] %vm1876, %v1754
  %1884 = vst.msk [vmem:[%s4 + $0x1c] sm:$0xf] %vm1876, %v1755
  %1885 = vst.msk [vmem:[%s4 + $0x20] sm:$0xf] %vm1876, %v1756
  %1886 = vst.msk [vmem:[%s4 + $0x24] sm:$0xf] %vm1876, %v1757
  %1887 = vst.msk [vmem:[%s4 + $0x28] sm:$0xf] %vm1876, %v1758
  %1888 = vst.msk [vmem:[%s4 + $0x2c] sm:$0xf] %vm1876, %v1759
  %1889 = vst.msk [vmem:[%s4 + $0x30] sm:$0xf] %vm1876, %v1760
  %1890 = vst.msk [vmem:[%s4 + $0x34] sm:$0xf] %vm1876, %v1761
  %1891 = vst.msk [vmem:[%s4 + $0x38] sm:$0xf] %vm1876, %v1762
  %1892 = vst.msk [vmem:[%s4 + $0x3c] sm:$0xf] %vm1876, %v1763
  %1893 = vst.msk [vmem:[%s4 + $0x40] sm:$0xf] %vm1876, %v1764
  %1894 = vst.msk [vmem:[%s4 + $0x44] sm:$0xf] %vm1876, %v1765
  %1895 = vst.msk [vmem:[%s4 + $0x48] sm:$0xf] %vm1876, %v1766
  %1896 = vst.msk [vmem:[%s4 + $0x4c] sm:$0xf] %vm1876, %v1767
  %1897 = vst.msk [vmem:[%s4 + $0x50] sm:$0xf] %vm1876, %v1768
  %1898 = vst.msk [vmem:[%s4 + $0x54] sm:$0xf] %vm1876, %v1769
  %1899 = vst.msk [vmem:[%s4 + $0x58] sm:$0xf] %vm1876, %v1770
  %1900 = vst.msk [vmem:[%s4 + $0x5c] sm:$0xf] %vm1876, %v1771
  %1901 = vst.msk [vmem:[%s4 + $0x60] sm:$0xf] %vm1876, %v1772
  %1902 = vst.msk [vmem:[%s4 + $0x64] sm:$0xf] %vm1876, %v1773
  %1903 = vst.msk [vmem:[%s4 + $0x68] sm:$0xf] %vm1876, %v1774
  %1904 = vst.msk [vmem:[%s4 + $0x6c] sm:$0xf] %vm1876, %v1775
  %1905 = vst.msk [vmem:[%s4 + $0x70] sm:$0xf] %vm1876, %v1776
  %1906 = vst.msk [vmem:[%s4 + $0x74] sm:$0xf] %vm1876, %v1777
  %1907 = vst.msk [vmem:[%s4 + $0x78] sm:$0xf] %vm1876, %v1778
  %1908 = vst.msk [vmem:[%s4 + $0x7c] sm:$0xf] %vm1876, %v1779
  %1909 = vst.msk [vmem:[%s4 + $0x80] sm:$0xf] %vm1876, %v1780
  %1910 = vst.msk [vmem:[%s4 + $0x84] sm:$0xf] %vm1876, %v1781
  %1911 = vst.msk [vmem:[%s4 + $0x88] sm:$0xf] %vm1876, %v1782
  %1912 = vst.msk [vmem:[%s4 + $0x8c] sm:$0xf] %vm1876, %v1783
  %1913 = vst.msk [vmem:[%s4 + $0x90] sm:$0xf] %vm1876, %v1784
  %1914 = vst.msk [vmem:[%s4 + $0x94] sm:$0xf] %vm1876, %v1785
  %1915 = vst.msk [vmem:[%s4 + $0x98] sm:$0xf] %vm1876, %v1786
  %1916 = vst.msk [vmem:[%s4 + $0x9c] sm:$0xf] %vm1876, %v1787
  %1917 = vst.msk [vmem:[%s4 + $0xa0] sm:$0xf] %vm1876, %v1788
  %1918 = vst.msk [vmem:[%s4 + $0xa4] sm:$0xf] %vm1876, %v1789
  %1919 = vst.msk [vmem:[%s4 + $0xa8] sm:$0xf] %vm1876, %v1790
  %1920 = vst.msk [vmem:[%s4 + $0xac] sm:$0xf] %vm1876, %v1791
  %1921 = vst.msk [vmem:[%s4 + $0xb0] sm:$0xf] %vm1876, %v1792
  %1922 = vst.msk [vmem:[%s4 + $0xb4] sm:$0xf] %vm1876, %v1793
  %1923 = vst.msk [vmem:[%s4 + $0xb8] sm:$0xf] %vm1876, %v1794
  %1924 = vst.msk [vmem:[%s4 + $0xbc] sm:$0xf] %vm1876, %v1795
  %1925 = vst.msk [vmem:[%s4 + $0xc0] sm:$0xf] %vm1876, %v1796
  %1926 = vst.msk [vmem:[%s4 + $0xc4] sm:$0xf] %vm1876, %v1797
  %1927 = vst.msk [vmem:[%s4 + $0xc8] sm:$0xf] %vm1876, %v1798
  %1928 = vst.msk [vmem:[%s4 + $0xcc] sm:$0xf] %vm1876, %v1799
  %1929 = vst.msk [vmem:[%s4 + $0xd0] sm:$0xf] %vm1876, %v1800
  %1930 = vst.msk [vmem:[%s4 + $0xd4] sm:$0xf] %vm1876, %v1801
  %1931 = vst.msk [vmem:[%s4 + $0xd8] sm:$0xf] %vm1876, %v1802
  %1932 = vst.msk [vmem:[%s4 + $0xdc] sm:$0xf] %vm1876, %v1803
  %1933 = vst.msk [vmem:[%s4 + $0xe0] sm:$0xf] %vm1876, %v1804
  %1934 = vst.msk [vmem:[%s4 + $0xe4] sm:$0xf] %vm1876, %v1805
  %1935 = vst.msk [vmem:[%s4 + $0xe8] sm:$0xf] %vm1876, %v1806
  %1936 = vst.msk [vmem:[%s4 + $0xec] sm:$0xf] %vm1876, %v1807
  %1937 = vst.msk [vmem:[%s4 + $0xf0] sm:$0xf] %vm1876, %v1808
  %1938 = vst.msk [vmem:[%s4 + $0xf4] sm:$0xf] %vm1876, %v1809
  %1939 = vst.msk [vmem:[%s4 + $0xf8] sm:$0xf] %vm1876, %v1810
  %1940 = vst.msk [vmem:[%s4 + $0xfc] sm:$0xf] %vm1876, %v1811
  // Predicated region
  $region18: #{discriminator_forward.5} parent=0 // pred_check
    _
  $region19: #{discriminator_forward.5} parent=0 // pred_check_branch
    %1942 = sbr.rel (0) target = $region21
  $region20: #{discriminator_forward.5} parent=0 // pred_region
    _
  $region21: #{discriminator_forward.5} parent=0 // pred_fallthru
    _
  // Predicated region
  $region22: #{discriminator_forward.5} parent=0 // pred_check
    _
  $region23: #{discriminator_forward.5} parent=0 // pred_check_branch
    %1944 = sbr.rel (0) target = $region25
  $region24: #{discriminator_forward.5} parent=0 // pred_region
    _
  $region25: #{discriminator_forward.5} parent=0 // pred_fallthru
    _

// kernel: discriminator_forward.6
$region0: #{discriminator_forward.6}
  #allocation0 [shape = 'u32[]', space=smem, size = 0x4, offset = 0x4, fixed_abs, tag = 'smem constant byte address 0x4 - core index']
  #allocation1 [shape = 'u32[144,128]{1,0:T(1,128)}', space=vmem, size = 0x12000, scoped, tag = 'internal scratch']
  %s0 = inlined_call_operand.vmem [shape: bf16[128,512], index: 0, kind: input, shape index: {}]
  %s1 = inlined_call_operand.vmem [shape: bf16[512,64], index: 1, kind: input, shape index: {}]
  %s2 = inlined_call_operand.vmem [shape: f32[1,64], index: 2, kind: input, shape index: {}]
  %s3 = inlined_call_operand.vmem [shape: f32[1,64], index: 3, kind: input, shape index: {}]
  %s4 = inlined_call_operand.vmem [shape: bf16[128,64], index: 4, kind: output, shape index: {}]
  %s5 = sld [smem:[#allocation0]]
  $region26: #{discriminator_forward.6} parent=0
    _
  %s7 = ssub.s32 1, %s5
  %s8 = scalar_select 0, %s7, %s5
  // Predicated region
  $region2: #{discriminator_forward.6} parent=0 // pred_check
    _
  $region3: #{discriminator_forward.6} parent=0 // pred_check_branch
    %10 = sbr.rel (0) target = $region5
  $region4: #{discriminator_forward.6} parent=0 // pred_region
    _
  $region5: #{discriminator_forward.6} parent=0 // pred_fallthru
    _
  // Predicated region
  $region6: #{discriminator_forward.6} parent=0 // pred_check
    _
  $region7: #{discriminator_forward.6} parent=0 // pred_check_branch
    %12 = sbr.rel (0) target = $region9
  $region8: #{discriminator_forward.6} parent=0 // pred_region
    _
  $region9: #{discriminator_forward.6} parent=0 // pred_fallthru
    _
  // Predicated region
  $region10: #{discriminator_forward.6} parent=0 // pred_check
    _
  $region11: #{discriminator_forward.6} parent=0 // pred_check_branch
    %14 = sbr.rel (0) target = $region13
  $region12: #{discriminator_forward.6} parent=0 // pred_region
    _
  $region13: #{discriminator_forward.6} parent=0 // pred_fallthru
    _
  // Predicated region
  $region14: #{discriminator_forward.6} parent=0 // pred_check
    _
  $region15: #{discriminator_forward.6} parent=0 // pred_check_branch
    %16 = sbr.rel (0) target = $region17
  $region16: #{discriminator_forward.6} parent=0 // pred_region
    _
  $region17: #{discriminator_forward.6} parent=0 // pred_fallthru
    _
  %v18 = vld [vmem:[%s0] sm:$0xff]
  %v19 = vld [vmem:[%s0 + $0x8] sm:$0xff]
  %v20 = vld [vmem:[%s0 + $0x10] sm:$0xff]
  %v21 = vld [vmem:[%s0 + $0x18] sm:$0xff]
  %v22 = vld [vmem:[%s0 + $0x20] sm:$0xff]
  %v23 = vld [vmem:[%s0 + $0x28] sm:$0xff]
  %v24 = vld [vmem:[%s0 + $0x30] sm:$0xff]
  %v25 = vld [vmem:[%s0 + $0x38] sm:$0xff]
  %v26 = vld [vmem:[%s0 + $0x40] sm:$0xff]
  %v27 = vld [vmem:[%s0 + $0x48] sm:$0xff]
  %v28 = vld [vmem:[%s0 + $0x50] sm:$0xff]
  %v29 = vld [vmem:[%s0 + $0x58] sm:$0xff]
  %v30 = vld [vmem:[%s0 + $0x60] sm:$0xff]
  %v31 = vld [vmem:[%s0 + $0x68] sm:$0xff]
  %v32 = vld [vmem:[%s0 + $0x70] sm:$0xff]
  %v33 = vld [vmem:[%s0 + $0x78] sm:$0xff]
  %v34 = vld [vmem:[%s0 + $0x80] sm:$0xff]
  %v35 = vld [vmem:[%s0 + $0x88] sm:$0xff]
  %v36 = vld [vmem:[%s0 + $0x90] sm:$0xff]
  %v37 = vld [vmem:[%s0 + $0x98] sm:$0xff]
  %v38 = vld [vmem:[%s0 + $0xa0] sm:$0xff]
  %v39 = vld [vmem:[%s0 + $0xa8] sm:$0xff]
  %v40 = vld [vmem:[%s0 + $0xb0] sm:$0xff]
  %v41 = vld [vmem:[%s0 + $0xb8] sm:$0xff]
  %v42 = vld [vmem:[%s0 + $0xc0] sm:$0xff]
  %v43 = vld [vmem:[%s0 + $0xc8] sm:$0xff]
  %v44 = vld [vmem:[%s0 + $0xd0] sm:$0xff]
  %v45 = vld [vmem:[%s0 + $0xd8] sm:$0xff]
  %v46 = vld [vmem:[%s0 + $0xe0] sm:$0xff]
  %v47 = vld [vmem:[%s0 + $0xe8] sm:$0xff]
  %v48 = vld [vmem:[%s0 + $0xf0] sm:$0xff]
  %v49 = vld [vmem:[%s0 + $0xf8] sm:$0xff]
  %v50 = vld [vmem:[%s1] sm:$0xf]
  %v51 = vld [vmem:[%s1 + $0x4] sm:$0xf]
  %v52 = vld [vmem:[%s1 + $0x8] sm:$0xf]
  %v53 = vld [vmem:[%s1 + $0xc] sm:$0xf]
  %v54 = vld [vmem:[%s1 + $0x10] sm:$0xf]
  %v55 = vld [vmem:[%s1 + $0x14] sm:$0xf]
  %v56 = vld [vmem:[%s1 + $0x18] sm:$0xf]
  %v57 = vld [vmem:[%s1 + $0x1c] sm:$0xf]
  %v58 = vld [vmem:[%s1 + $0x20] sm:$0xf]
  %v59 = vld [vmem:[%s1 + $0x24] sm:$0xf]
  %v60 = vld [vmem:[%s1 + $0x28] sm:$0xf]
  %v61 = vld [vmem:[%s1 + $0x2c] sm:$0xf]
  %v62 = vld [vmem:[%s1 + $0x30] sm:$0xf]
  %v63 = vld [vmem:[%s1 + $0x34] sm:$0xf]
  %v64 = vld [vmem:[%s1 + $0x38] sm:$0xf]
  %v65 = vld [vmem:[%s1 + $0x3c] sm:$0xf]
  %v66 = vld [vmem:[%s1 + $0x40] sm:$0xf]
  %v67 = vld [vmem:[%s1 + $0x44] sm:$0xf]
  %v68 = vld [vmem:[%s1 + $0x48] sm:$0xf]
  %v69 = vld [vmem:[%s1 + $0x4c] sm:$0xf]
  %v70 = vld [vmem:[%s1 + $0x50] sm:$0xf]
  %v71 = vld [vmem:[%s1 + $0x54] sm:$0xf]
  %v72 = vld [vmem:[%s1 + $0x58] sm:$0xf]
  %v73 = vld [vmem:[%s1 + $0x5c] sm:$0xf]
  %v74 = vld [vmem:[%s1 + $0x60] sm:$0xf]
  %v75 = vld [vmem:[%s1 + $0x64] sm:$0xf]
  %v76 = vld [vmem:[%s1 + $0x68] sm:$0xf]
  %v77 = vld [vmem:[%s1 + $0x6c] sm:$0xf]
  %v78 = vld [vmem:[%s1 + $0x70] sm:$0xf]
  %v79 = vld [vmem:[%s1 + $0x74] sm:$0xf]
  %v80 = vld [vmem:[%s1 + $0x78] sm:$0xf]
  %v81 = vld [vmem:[%s1 + $0x7c] sm:$0xf]
  %v82 = vld [vmem:[%s1 + $0x80] sm:$0xf]
  %v83 = vld [vmem:[%s1 + $0x84] sm:$0xf]
  %v84 = vld [vmem:[%s1 + $0x88] sm:$0xf]
  %v85 = vld [vmem:[%s1 + $0x8c] sm:$0xf]
  %v86 = vld [vmem:[%s1 + $0x90] sm:$0xf]
  %v87 = vld [vmem:[%s1 + $0x94] sm:$0xf]
  %v88 = vld [vmem:[%s1 + $0x98] sm:$0xf]
  %v89 = vld [vmem:[%s1 + $0x9c] sm:$0xf]
  %v90 = vld [vmem:[%s1 + $0xa0] sm:$0xf]
  %v91 = vld [vmem:[%s1 + $0xa4] sm:$0xf]
  %v92 = vld [vmem:[%s1 + $0xa8] sm:$0xf]
  %v93 = vld [vmem:[%s1 + $0xac] sm:$0xf]
  %v94 = vld [vmem:[%s1 + $0xb0] sm:$0xf]
  %v95 = vld [vmem:[%s1 + $0xb4] sm:$0xf]
  %v96 = vld [vmem:[%s1 + $0xb8] sm:$0xf]
  %v97 = vld [vmem:[%s1 + $0xbc] sm:$0xf]
  %v98 = vld [vmem:[%s1 + $0xc0] sm:$0xf]
  %v99 = vld [vmem:[%s1 + $0xc4] sm:$0xf]
  %v100 = vld [vmem:[%s1 + $0xc8] sm:$0xf]
  %v101 = vld [vmem:[%s1 + $0xcc] sm:$0xf]
  %v102 = vld [vmem:[%s1 + $0xd0] sm:$0xf]
  %v103 = vld [vmem:[%s1 + $0xd4] sm:$0xf]
  %v104 = vld [vmem:[%s1 + $0xd8] sm:$0xf]
  %v105 = vld [vmem:[%s1 + $0xdc] sm:$0xf]
  %v106 = vld [vmem:[%s1 + $0xe0] sm:$0xf]
  %v107 = vld [vmem:[%s1 + $0xe4] sm:$0xf]
  %v108 = vld [vmem:[%s1 + $0xe8] sm:$0xf]
  %v109 = vld [vmem:[%s1 + $0xec] sm:$0xf]
  %v110 = vld [vmem:[%s1 + $0xf0] sm:$0xf]
  %v111 = vld [vmem:[%s1 + $0xf4] sm:$0xf]
  %v112 = vld [vmem:[%s1 + $0xf8] sm:$0xf]
  %v113 = vld [vmem:[%s1 + $0xfc] sm:$0xf]
  %v146 = vunpack.c.l.b16 %v18
  %v147 = vunpack.c.h.b16 %v18
  %v148 = vunpack.c.l.b16 %v19
  %v149 = vunpack.c.h.b16 %v19
  %v150 = vunpack.c.l.b16 %v20
  %v151 = vunpack.c.h.b16 %v20
  %v152 = vunpack.c.l.b16 %v21
  %v153 = vunpack.c.h.b16 %v21
  %v154 = vunpack.c.l.b16 %v22
  %v155 = vunpack.c.h.b16 %v22
  %v156 = vunpack.c.l.b16 %v23
  %v157 = vunpack.c.h.b16 %v23
  %v158 = vunpack.c.l.b16 %v24
  %v159 = vunpack.c.h.b16 %v24
  %v160 = vunpack.c.l.b16 %v25
  %v161 = vunpack.c.h.b16 %v25
  %v162 = vunpack.c.l.b16 %v26
  %v163 = vunpack.c.h.b16 %v26
  %v164 = vunpack.c.l.b16 %v27
  %v165 = vunpack.c.h.b16 %v27
  %v166 = vunpack.c.l.b16 %v28
  %v167 = vunpack.c.h.b16 %v28
  %v168 = vunpack.c.l.b16 %v29
  %v169 = vunpack.c.h.b16 %v29
  %v170 = vunpack.c.l.b16 %v30
  %v171 = vunpack.c.h.b16 %v30
  %v172 = vunpack.c.l.b16 %v31
  %v173 = vunpack.c.h.b16 %v31
  %v174 = vunpack.c.l.b16 %v32
  %v175 = vunpack.c.h.b16 %v32
  %v176 = vunpack.c.l.b16 %v33
  %v177 = vunpack.c.h.b16 %v33
  %v178 = vunpack.c.l.b16 %v34
  %v179 = vunpack.c.h.b16 %v34
  %v180 = vunpack.c.l.b16 %v35
  %v181 = vunpack.c.h.b16 %v35
  %v182 = vunpack.c.l.b16 %v36
  %v183 = vunpack.c.h.b16 %v36
  %v184 = vunpack.c.l.b16 %v37
  %v185 = vunpack.c.h.b16 %v37
  %v186 = vunpack.c.l.b16 %v38
  %v187 = vunpack.c.h.b16 %v38
  %v188 = vunpack.c.l.b16 %v39
  %v189 = vunpack.c.h.b16 %v39
  %v190 = vunpack.c.l.b16 %v40
  %v191 = vunpack.c.h.b16 %v40
  %v192 = vunpack.c.l.b16 %v41
  %v193 = vunpack.c.h.b16 %v41
  %v194 = vunpack.c.l.b16 %v42
  %v195 = vunpack.c.h.b16 %v42
  %v196 = vunpack.c.l.b16 %v43
  %v197 = vunpack.c.h.b16 %v43
  %v198 = vunpack.c.l.b16 %v44
  %v199 = vunpack.c.h.b16 %v44
  %v200 = vunpack.c.l.b16 %v45
  %v201 = vunpack.c.h.b16 %v45
  %v202 = vunpack.c.l.b16 %v46
  %v203 = vunpack.c.h.b16 %v46
  %v204 = vunpack.c.l.b16 %v47
  %v205 = vunpack.c.h.b16 %v47
  %v206 = vunpack.c.l.b16 %v48
  %v207 = vunpack.c.h.b16 %v48
  %v208 = vunpack.c.l.b16 %v49
  %v209 = vunpack.c.h.b16 %v49
  %v210 = vpack.c.b16 %v150, %v146
  %v211 = vpack.c.b16 %v151, %v147
  %v212 = vpack.c.b16 %v152, %v148
  %v213 = vpack.c.b16 %v153, %v149
  %v214 = vpack.c.b16 %v158, %v154
  %v215 = vpack.c.b16 %v159, %v155
  %v216 = vpack.c.b16 %v160, %v156
  %v217 = vpack.c.b16 %v161, %v157
  %v218 = vpack.c.b16 %v166, %v162
  %v219 = vpack.c.b16 %v167, %v163
  %v220 = vpack.c.b16 %v168, %v164
  %v221 = vpack.c.b16 %v169, %v165
  %v222 = vpack.c.b16 %v174, %v170
  %v223 = vpack.c.b16 %v175, %v171
  %v224 = vpack.c.b16 %v176, %v172
  %v225 = vpack.c.b16 %v177, %v173
  %v226 = vpack.c.b16 %v182, %v178
  %v227 = vpack.c.b16 %v183, %v179
  %v228 = vpack.c.b16 %v184, %v180
  %v229 = vpack.c.b16 %v185, %v181
  %v230 = vpack.c.b16 %v190, %v186
  %v231 = vpack.c.b16 %v191, %v187
  %v232 = vpack.c.b16 %v192, %v188
  %v233 = vpack.c.b16 %v193, %v189
  %v234 = vpack.c.b16 %v198, %v194
  %v235 = vpack.c.b16 %v199, %v195
  %v236 = vpack.c.b16 %v200, %v196
  %v237 = vpack.c.b16 %v201, %v197
  %v238 = vpack.c.b16 %v206, %v202
  %v239 = vpack.c.b16 %v207, %v203
  %v240 = vpack.c.b16 %v208, %v204
  %v241 = vpack.c.b16 %v209, %v205
  %v338 = vunpack.c.l.b16 %v50
  %v339 = vunpack.c.l.b16 %v51
  %v340 = vunpack.c.l.b16 %v52
  %v341 = vunpack.c.l.b16 %v53
  %v342 = vunpack.c.l.b16 %v54
  %v343 = vunpack.c.l.b16 %v55
  %v344 = vunpack.c.l.b16 %v56
  %v345 = vunpack.c.l.b16 %v57
  %v346 = vunpack.c.l.b16 %v58
  %v347 = vunpack.c.l.b16 %v59
  %v348 = vunpack.c.l.b16 %v60
  %v349 = vunpack.c.l.b16 %v61
  %v350 = vunpack.c.l.b16 %v62
  %v351 = vunpack.c.l.b16 %v63
  %v352 = vunpack.c.l.b16 %v64
  %v353 = vunpack.c.l.b16 %v65
  %v354 = vunpack.c.l.b16 %v66
  %v355 = vunpack.c.l.b16 %v67
  %v356 = vunpack.c.l.b16 %v68
  %v357 = vunpack.c.l.b16 %v69
  %v358 = vunpack.c.l.b16 %v70
  %v359 = vunpack.c.l.b16 %v71
  %v360 = vunpack.c.l.b16 %v72
  %v361 = vunpack.c.l.b16 %v73
  %v362 = vunpack.c.l.b16 %v74
  %v363 = vunpack.c.l.b16 %v75
  %v364 = vunpack.c.l.b16 %v76
  %v365 = vunpack.c.l.b16 %v77
  %v366 = vunpack.c.l.b16 %v78
  %v367 = vunpack.c.l.b16 %v79
  %v368 = vunpack.c.l.b16 %v80
  %v369 = vunpack.c.l.b16 %v81
  %v370 = vunpack.c.l.b16 %v82
  %v371 = vunpack.c.l.b16 %v83
  %v372 = vunpack.c.l.b16 %v84
  %v373 = vunpack.c.l.b16 %v85
  %v374 = vunpack.c.l.b16 %v86
  %v375 = vunpack.c.l.b16 %v87
  %v376 = vunpack.c.l.b16 %v88
  %v377 = vunpack.c.l.b16 %v89
  %v378 = vunpack.c.l.b16 %v90
  %v379 = vunpack.c.l.b16 %v91
  %v380 = vunpack.c.l.b16 %v92
  %v381 = vunpack.c.l.b16 %v93
  %v382 = vunpack.c.l.b16 %v94
  %v383 = vunpack.c.l.b16 %v95
  %v384 = vunpack.c.l.b16 %v96
  %v385 = vunpack.c.l.b16 %v97
  %v386 = vunpack.c.l.b16 %v98
  %v387 = vunpack.c.l.b16 %v99
  %v388 = vunpack.c.l.b16 %v100
  %v389 = vunpack.c.l.b16 %v101
  %v390 = vunpack.c.l.b16 %v102
  %v391 = vunpack.c.l.b16 %v103
  %v392 = vunpack.c.l.b16 %v104
  %v393 = vunpack.c.l.b16 %v105
  %v394 = vunpack.c.l.b16 %v106
  %v395 = vunpack.c.l.b16 %v107
  %v396 = vunpack.c.l.b16 %v108
  %v397 = vunpack.c.l.b16 %v109
  %v398 = vunpack.c.l.b16 %v110
  %v399 = vunpack.c.l.b16 %v111
  %v400 = vunpack.c.l.b16 %v112
  %v401 = vunpack.c.l.b16 %v113
  %v402 = vpack.c.b16 %v339, %v338
  %v403 = vpack.c.b16 %v341, %v340
  %v404 = vpack.c.b16 %v343, %v342
  %v405 = vpack.c.b16 %v345, %v344
  %v406 = vpack.c.b16 %v347, %v346
  %v407 = vpack.c.b16 %v349, %v348
  %v408 = vpack.c.b16 %v351, %v350
  %v409 = vpack.c.b16 %v353, %v352
  %v410 = vpack.c.b16 %v355, %v354
  %v411 = vpack.c.b16 %v357, %v356
  %v412 = vpack.c.b16 %v359, %v358
  %v413 = vpack.c.b16 %v361, %v360
  %v414 = vpack.c.b16 %v363, %v362
  %v415 = vpack.c.b16 %v365, %v364
  %v416 = vpack.c.b16 %v367, %v366
  %v417 = vpack.c.b16 %v369, %v368
  %v418 = vpack.c.b16 %v371, %v370
  %v419 = vpack.c.b16 %v373, %v372
  %v420 = vpack.c.b16 %v375, %v374
  %v421 = vpack.c.b16 %v377, %v376
  %v422 = vpack.c.b16 %v379, %v378
  %v423 = vpack.c.b16 %v381, %v380
  %v424 = vpack.c.b16 %v383, %v382
  %v425 = vpack.c.b16 %v385, %v384
  %v426 = vpack.c.b16 %v387, %v386
  %v427 = vpack.c.b16 %v389, %v388
  %v428 = vpack.c.b16 %v391, %v390
  %v429 = vpack.c.b16 %v393, %v392
  %v430 = vpack.c.b16 %v395, %v394
  %v431 = vpack.c.b16 %v397, %v396
  %v432 = vpack.c.b16 %v399, %v398
  %v433 = vpack.c.b16 %v401, %v400
  %466 = vmatprep.subr.bf16.mxu0 0
  %467 = vmatpush1.bf16.msra.mxu0 %v409
  %468 = vmatprep.subr.bf16.mxu0 0
  %469 = vmatpush1.bf16.msra.mxu0 %v408
  %470 = vmatprep.subr.bf16.mxu0 0
  %471 = vmatpush1.bf16.msra.mxu0 %v407
  %472 = vmatprep.subr.bf16.mxu0 0
  %473 = vmatpush1.bf16.msra.mxu0 %v406
  %474 = vmatprep.subr.bf16.mxu0 0
  %475 = vmatpush1.bf16.msra.mxu0 %v405
  %476 = vmatprep.subr.bf16.mxu0 0
  %477 = vmatpush1.bf16.msra.mxu0 %v404
  %478 = vmatprep.subr.bf16.mxu0 0
  %479 = vmatpush1.bf16.msra.mxu0 %v403
  %480 = vmatprep.subr.bf16.mxu0 0
  %481 = vmatpush1.bf16.msra.mxu0 %v402
  %482 = vmatprep.subr.bf16.mxu0 0
  %483 = vmatpush2.bf16.msra.mxu0 %v417
  %484 = vmatprep.subr.bf16.mxu0 0
  %485 = vmatpush2.bf16.msra.mxu0 %v416
  %486 = vmatprep.subr.bf16.mxu0 0
  %487 = vmatpush2.bf16.msra.mxu0 %v415
  %488 = vmatprep.subr.bf16.mxu0 0
  %489 = vmatpush2.bf16.msra.mxu0 %v414
  %490 = vmatprep.subr.bf16.mxu0 0
  %491 = vmatpush2.bf16.msra.mxu0 %v413
  %492 = vmatprep.subr.bf16.mxu0 0
  %493 = vmatpush2.bf16.msra.mxu0 %v412
  %494 = vmatprep.subr.bf16.mxu0 0
  %495 = vmatpush2.bf16.msra.mxu0 %v411
  %496 = vmatprep.subr.bf16.mxu0 0
  %497 = vmatpush2.bf16.msra.mxu0 %v410
  %498 = vmatprep.mubr.bf16.mxu0 %v211
  %499 = vmatmul.mubr.bf16.gmra.mxu0 %v210
  %v500 = vpop.f32.mrf.mxu0
  %v501 = vadd.f32 0.0, %v500
  %v502 = vpop.f32.mrf.mxu0
  %v503 = vpop.f32.mrf.mxu0
  %v504 = vadd.f32 0.0, %v503
  %v505 = vpop.f32.mrf.mxu0
  %506 = vmatprep.mubr.bf16.mxu0 %v215
  %507 = vmatmul.mubr.bf16.gmra.mxu0 %v214
  %v508 = vpop.f32.mrf.mxu0
  %v509 = vadd.f32 0.0, %v508
  %v510 = vpop.f32.mrf.mxu0
  %v511 = vpop.f32.mrf.mxu0
  %v512 = vadd.f32 0.0, %v511
  %v513 = vpop.f32.mrf.mxu0
  %514 = vmatprep.mubr.bf16.mxu0 %v219
  %515 = vmatmul.mubr.bf16.gmra.mxu0 %v218
  %v516 = vpop.f32.mrf.mxu0
  %v517 = vadd.f32 0.0, %v516
  %v518 = vpop.f32.mrf.mxu0
  %v519 = vpop.f32.mrf.mxu0
  %v520 = vadd.f32 0.0, %v519
  %v521 = vpop.f32.mrf.mxu0
  %522 = vmatprep.mubr.bf16.mxu0 %v223
  %523 = vmatmul.mubr.bf16.gmra.mxu0 %v222
  %v524 = vpop.f32.mrf.mxu0
  %v525 = vadd.f32 0.0, %v524
  %v526 = vpop.f32.mrf.mxu0
  %v527 = vpop.f32.mrf.mxu0
  %v528 = vadd.f32 0.0, %v527
  %v529 = vpop.f32.mrf.mxu0
  %530 = vmatprep.mubr.bf16.mxu0 %v227
  %531 = vmatmul.mubr.bf16.gmra.mxu0 %v226
  %v532 = vpop.f32.mrf.mxu0
  %v533 = vadd.f32 0.0, %v532
  %v534 = vpop.f32.mrf.mxu0
  %v535 = vpop.f32.mrf.mxu0
  %v536 = vadd.f32 0.0, %v535
  %v537 = vpop.f32.mrf.mxu0
  %538 = vmatprep.mubr.bf16.mxu0 %v231
  %539 = vmatmul.mubr.bf16.gmra.mxu0 %v230
  %v540 = vpop.f32.mrf.mxu0
  %v541 = vadd.f32 0.0, %v540
  %v542 = vpop.f32.mrf.mxu0
  %v543 = vpop.f32.mrf.mxu0
  %v544 = vadd.f32 0.0, %v543
  %v545 = vpop.f32.mrf.mxu0
  %546 = vmatprep.mubr.bf16.mxu0 %v235
  %547 = vmatmul.mubr.bf16.gmra.mxu0 %v234
  %v548 = vpop.f32.mrf.mxu0
  %v549 = vadd.f32 0.0, %v548
  %v550 = vpop.f32.mrf.mxu0
  %v551 = vpop.f32.mrf.mxu0
  %v552 = vadd.f32 0.0, %v551
  %v553 = vpop.f32.mrf.mxu0
  %554 = vmatprep.mubr.bf16.mxu0 %v239
  %555 = vmatmul.mubr.bf16.gmra.mxu0 %v238
  %v556 = vpop.f32.mrf.mxu0
  %v557 = vadd.f32 0.0, %v556
  %v558 = vpop.f32.mrf.mxu0
  %v559 = vpop.f32.mrf.mxu0
  %v560 = vadd.f32 0.0, %v559
  %v561 = vpop.f32.mrf.mxu0
  %562 = vdwg.mxu0
  %563 = vmatprep.subr.bf16.mxu0 0
  %564 = vmatpush1.bf16.msra.mxu0 %v425
  %565 = vmatprep.subr.bf16.mxu0 0
  %566 = vmatpush1.bf16.msra.mxu0 %v424
  %567 = vmatprep.subr.bf16.mxu0 0
  %568 = vmatpush1.bf16.msra.mxu0 %v423
  %569 = vmatprep.subr.bf16.mxu0 0
  %570 = vmatpush1.bf16.msra.mxu0 %v422
  %571 = vmatprep.subr.bf16.mxu0 0
  %572 = vmatpush1.bf16.msra.mxu0 %v421
  %573 = vmatprep.subr.bf16.mxu0 0
  %574 = vmatpush1.bf16.msra.mxu0 %v420
  %575 = vmatprep.subr.bf16.mxu0 0
  %576 = vmatpush1.bf16.msra.mxu0 %v419
  %577 = vmatprep.subr.bf16.mxu0 0
  %578 = vmatpush1.bf16.msra.mxu0 %v418
  %579 = vmatprep.subr.bf16.mxu0 0
  %580 = vmatpush2.bf16.msra.mxu0 %v433
  %581 = vmatprep.subr.bf16.mxu0 0
  %582 = vmatpush2.bf16.msra.mxu0 %v432
  %583 = vmatprep.subr.bf16.mxu0 0
  %584 = vmatpush2.bf16.msra.mxu0 %v431
  %585 = vmatprep.subr.bf16.mxu0 0
  %586 = vmatpush2.bf16.msra.mxu0 %v430
  %587 = vmatprep.subr.bf16.mxu0 0
  %588 = vmatpush2.bf16.msra.mxu0 %v429
  %589 = vmatprep.subr.bf16.mxu0 0
  %590 = vmatpush2.bf16.msra.mxu0 %v428
  %591 = vmatprep.subr.bf16.mxu0 0
  %592 = vmatpush2.bf16.msra.mxu0 %v427
  %593 = vmatprep.subr.bf16.mxu0 0
  %594 = vmatpush2.bf16.msra.mxu0 %v426
  %595 = vmatprep.mubr.bf16.mxu0 %v213
  %596 = vmatmul.mubr.bf16.gmra.mxu0 %v212
  %v597 = vpop.f32.mrf.mxu0
  %v598 = vadd.f32 %v501, %v597
  %v599 = vpop.f32.mrf.mxu0
  %v600 = vpop.f32.mrf.mxu0
  %v601 = vadd.f32 %v504, %v600
  %v602 = vpop.f32.mrf.mxu0
  %603 = vmatprep.mubr.bf16.mxu0 %v217
  %604 = vmatmul.mubr.bf16.gmra.mxu0 %v216
  %v605 = vpop.f32.mrf.mxu0
  %v606 = vadd.f32 %v509, %v605
  %v607 = vpop.f32.mrf.mxu0
  %v608 = vpop.f32.mrf.mxu0
  %v609 = vadd.f32 %v512, %v608
  %v610 = vpop.f32.mrf.mxu0
  %611 = vmatprep.mubr.bf16.mxu0 %v221
  %612 = vmatmul.mubr.bf16.gmra.mxu0 %v220
  %v613 = vpop.f32.mrf.mxu0
  %v614 = vadd.f32 %v517, %v613
  %v615 = vpop.f32.mrf.mxu0
  %v616 = vpop.f32.mrf.mxu0
  %v617 = vadd.f32 %v520, %v616
  %v618 = vpop.f32.mrf.mxu0
  %619 = vmatprep.mubr.bf16.mxu0 %v225
  %620 = vmatmul.mubr.bf16.gmra.mxu0 %v224
  %v621 = vpop.f32.mrf.mxu0
  %v622 = vadd.f32 %v525, %v621
  %v623 = vpop.f32.mrf.mxu0
  %v624 = vpop.f32.mrf.mxu0
  %v625 = vadd.f32 %v528, %v624
  %v626 = vpop.f32.mrf.mxu0
  %627 = vmatprep.mubr.bf16.mxu0 %v229
  %628 = vmatmul.mubr.bf16.gmra.mxu0 %v228
  %v629 = vpop.f32.mrf.mxu0
  %v630 = vadd.f32 %v533, %v629
  %v631 = vpop.f32.mrf.mxu0
  %v632 = vpop.f32.mrf.mxu0
  %v633 = vadd.f32 %v536, %v632
  %v634 = vpop.f32.mrf.mxu0
  %635 = vmatprep.mubr.bf16.mxu0 %v233
  %636 = vmatmul.mubr.bf16.gmra.mxu0 %v232
  %v637 = vpop.f32.mrf.mxu0
  %v638 = vadd.f32 %v541, %v637
  %v639 = vpop.f32.mrf.mxu0
  %v640 = vpop.f32.mrf.mxu0
  %v641 = vadd.f32 %v544, %v640
  %v642 = vpop.f32.mrf.mxu0
  %643 = vmatprep.mubr.bf16.mxu0 %v237
  %644 = vmatmul.mubr.bf16.gmra.mxu0 %v236
  %v645 = vpop.f32.mrf.mxu0
  %v646 = vadd.f32 %v549, %v645
  %v647 = vpop.f32.mrf.mxu0
  %v648 = vpop.f32.mrf.mxu0
  %v649 = vadd.f32 %v552, %v648
  %v650 = vpop.f32.mrf.mxu0
  %651 = vmatprep.mubr.bf16.mxu0 %v241
  %652 = vmatmul.mubr.bf16.gmra.mxu0 %v240
  %v653 = vpop.f32.mrf.mxu0
  %v654 = vadd.f32 %v557, %v653
  %v655 = vpop.f32.mrf.mxu0
  %v656 = vpop.f32.mrf.mxu0
  %v657 = vadd.f32 %v560, %v656
  %v658 = vpop.f32.mrf.mxu0
  %659 = vdwg.mxu0
  %vm660 = vcmask 523264
  %v661 = vsel %vm660, %v598, 0.0
  %v662 = vsel %vm660, %v601, 0.0
  %v663 = vadd.f32 %v661, %v662
  %v664 = vsel %vm660, %v606, 0.0
  %v665 = vadd.f32 %v663, %v664
  %v666 = vsel %vm660, %v609, 0.0
  %v667 = vadd.f32 %v665, %v666
  %v668 = vsel %vm660, %v614, 0.0
  %v669 = vadd.f32 %v667, %v668
  %v670 = vsel %vm660, %v617, 0.0
  %v671 = vadd.f32 %v669, %v670
  %v672 = vsel %vm660, %v622, 0.0
  %v673 = vadd.f32 %v671, %v672
  %v674 = vsel %vm660, %v625, 0.0
  %v675 = vadd.f32 %v673, %v674
  %v676 = vsel %vm660, %v630, 0.0
  %v677 = vadd.f32 %v675, %v676
  %v678 = vsel %vm660, %v633, 0.0
  %v679 = vadd.f32 %v677, %v678
  %v680 = vsel %vm660, %v638, 0.0
  %v681 = vadd.f32 %v679, %v680
  %v682 = vsel %vm660, %v641, 0.0
  %v683 = vadd.f32 %v681, %v682
  %v684 = vsel %vm660, %v646, 0.0
  %v685 = vadd.f32 %v683, %v684
  %v686 = vsel %vm660, %v649, 0.0
  %v687 = vadd.f32 %v685, %v686
  %v688 = vsel %vm660, %v654, 0.0
  %v689 = vadd.f32 %v687, %v688
  %v690 = vsel %vm660, %v657, 0.0
  %v691 = vadd.f32 %v689, %v690
  %v692 = vrot.slane %v691, 4
  %v693 = vadd.f32 %v691, %v692
  %v694 = vrot.slane %v693, 2
  %v695 = vadd.f32 %v693, %v694
  %v696 = vrot.slane %v695, 1
  %v697 = vadd.f32 %v695, %v696
  %v698 = vrcp.pop 128.0
  %v699 = vmul.f32 %v697, %v698
  %v700 = vmul.f32 %v598, %v598
  %v701 = vmul.f32 %v601, %v601
  %v702 = vmul.f32 %v606, %v606
  %v703 = vmul.f32 %v609, %v609
  %v704 = vmul.f32 %v614, %v614
  %v705 = vmul.f32 %v617, %v617
  %v706 = vmul.f32 %v622, %v622
  %v707 = vmul.f32 %v625, %v625
  %v708 = vmul.f32 %v630, %v630
  %v709 = vmul.f32 %v633, %v633
  %v710 = vmul.f32 %v638, %v638
  %v711 = vmul.f32 %v641, %v641
  %v712 = vmul.f32 %v646, %v646
  %v713 = vmul.f32 %v649, %v649
  %v714 = vmul.f32 %v654, %v654
  %v715 = vmul.f32 %v657, %v657
  %v716 = vsel %vm660, %v700, 0.0
  %v717 = vsel %vm660, %v701, 0.0
  %v718 = vadd.f32 %v716, %v717
  %v719 = vsel %vm660, %v702, 0.0
  %v720 = vadd.f32 %v718, %v719
  %v721 = vsel %vm660, %v703, 0.0
  %v722 = vadd.f32 %v720, %v721
  %v723 = vsel %vm660, %v704, 0.0
  %v724 = vadd.f32 %v722, %v723
  %v725 = vsel %vm660, %v705, 0.0
  %v726 = vadd.f32 %v724, %v725
  %v727 = vsel %vm660, %v706, 0.0
  %v728 = vadd.f32 %v726, %v727
  %v729 = vsel %vm660, %v707, 0.0
  %v730 = vadd.f32 %v728, %v729
  %v731 = vsel %vm660, %v708, 0.0
  %v732 = vadd.f32 %v730, %v731
  %v733 = vsel %vm660, %v709, 0.0
  %v734 = vadd.f32 %v732, %v733
  %v735 = vsel %vm660, %v710, 0.0
  %v736 = vadd.f32 %v734, %v735
  %v737 = vsel %vm660, %v711, 0.0
  %v738 = vadd.f32 %v736, %v737
  %v739 = vsel %vm660, %v712, 0.0
  %v740 = vadd.f32 %v738, %v739
  %v741 = vsel %vm660, %v713, 0.0
  %v742 = vadd.f32 %v740, %v741
  %v743 = vsel %vm660, %v714, 0.0
  %v744 = vadd.f32 %v742, %v743
  %v745 = vsel %vm660, %v715, 0.0
  %v746 = vadd.f32 %v744, %v745
  %v747 = vrot.slane %v746, 4
  %v748 = vadd.f32 %v746, %v747
  %v749 = vrot.slane %v748, 2
  %v750 = vadd.f32 %v748, %v749
  %v751 = vrot.slane %v750, 1
  %v752 = vadd.f32 %v750, %v751
  %v753 = vmul.f32 %v752, %v698
  %v754 = vmul.f32 %v699, %v699
  %v755 = vsub.f32 %v753, %v754
  %v756 = vmax.f32 %v755, 0.0
  %v757 = vsub.f32 %v598, %v699
  %v758 = vsub.f32 %v601, %v699
  %v759 = vsub.f32 %v606, %v699
  %v760 = vsub.f32 %v609, %v699
  %v761 = vsub.f32 %v614, %v699
  %v762 = vsub.f32 %v617, %v699
  %v763 = vsub.f32 %v622, %v699
  %v764 = vsub.f32 %v625, %v699
  %v765 = vsub.f32 %v630, %v699
  %v766 = vsub.f32 %v633, %v699
  %v767 = vsub.f32 %v638, %v699
  %v768 = vsub.f32 %v641, %v699
  %v769 = vsub.f32 %v646, %v699
  %v770 = vsub.f32 %v649, %v699
  %v771 = vsub.f32 %v654, %v699
  %v772 = vsub.f32 %v657, %v699
  %v773 = vadd.f32 %v756, 1e-05
  %v774 = vrsqrt.pop %v773
  %v775 = vmul.f32 %v757, %v774
  %v776 = vmul.f32 %v758, %v774
  %v777 = vmul.f32 %v759, %v774
  %v778 = vmul.f32 %v760, %v774
  %v779 = vmul.f32 %v761, %v774
  %v780 = vmul.f32 %v762, %v774
  %v781 = vmul.f32 %v763, %v774
  %v782 = vmul.f32 %v764, %v774
  %v783 = vmul.f32 %v765, %v774
  %v784 = vmul.f32 %v766, %v774
  %v785 = vmul.f32 %v767, %v774
  %v786 = vmul.f32 %v768, %v774
  %v787 = vmul.f32 %v769, %v774
  %v788 = vmul.f32 %v770, %v774
  %v789 = vmul.f32 %v771, %v774
  %v790 = vmul.f32 %v772, %v774
  %v791 = vld [vmem:[%s2] sm:$0x1]
  %v793 = vlaneseq
  %v794 = vshrl.u32 %v793, 7
  %v795 = vsub.s32 0, %v794
  %v796 = vrot.slane %v791, %v795
  %v798 = vmul.f32 %v775, %v796
  %v799 = vmul.f32 %v776, %v796
  %v800 = vmul.f32 %v777, %v796
  %v801 = vmul.f32 %v778, %v796
  %v802 = vmul.f32 %v779, %v796
  %v803 = vmul.f32 %v780, %v796
  %v804 = vmul.f32 %v781, %v796
  %v805 = vmul.f32 %v782, %v796
  %v806 = vmul.f32 %v783, %v796
  %v807 = vmul.f32 %v784, %v796
  %v808 = vmul.f32 %v785, %v796
  %v809 = vmul.f32 %v786, %v796
  %v810 = vmul.f32 %v787, %v796
  %v811 = vmul.f32 %v788, %v796
  %v812 = vmul.f32 %v789, %v796
  %v813 = vmul.f32 %v790, %v796
  %v814 = vld [vmem:[%s3] sm:$0x1]
  %v816 = vlaneseq
  %v817 = vshrl.u32 %v816, 7
  %v818 = vsub.s32 0, %v817
  %v819 = vrot.slane %v814, %v818
  %v821 = vadd.f32 %v798, %v819
  %v822 = vadd.f32 %v799, %v819
  %v823 = vadd.f32 %v800, %v819
  %v824 = vadd.f32 %v801, %v819
  %v825 = vadd.f32 %v802, %v819
  %v826 = vadd.f32 %v803, %v819
  %v827 = vadd.f32 %v804, %v819
  %v828 = vadd.f32 %v805, %v819
  %v829 = vadd.f32 %v806, %v819
  %v830 = vadd.f32 %v807, %v819
  %v831 = vadd.f32 %v808, %v819
  %v832 = vadd.f32 %v809, %v819
  %v833 = vadd.f32 %v810, %v819
  %v834 = vadd.f32 %v811, %v819
  %v835 = vadd.f32 %v812, %v819
  %v836 = vadd.f32 %v813, %v819
  %vm837 = vcmp.gt.f32.partialorder %v821, 0.0
  %vm838 = vcmp.gt.f32.partialorder %v822, 0.0
  %vm839 = vcmp.gt.f32.partialorder %v823, 0.0
  %vm840 = vcmp.gt.f32.partialorder %v824, 0.0
  %vm841 = vcmp.gt.f32.partialorder %v825, 0.0
  %vm842 = vcmp.gt.f32.partialorder %v826, 0.0
  %vm843 = vcmp.gt.f32.partialorder %v827, 0.0
  %vm844 = vcmp.gt.f32.partialorder %v828, 0.0
  %vm845 = vcmp.gt.f32.partialorder %v829, 0.0
  %vm846 = vcmp.gt.f32.partialorder %v830, 0.0
  %vm847 = vcmp.gt.f32.partialorder %v831, 0.0
  %vm848 = vcmp.gt.f32.partialorder %v832, 0.0
  %vm849 = vcmp.gt.f32.partialorder %v833, 0.0
  %vm850 = vcmp.gt.f32.partialorder %v834, 0.0
  %vm851 = vcmp.gt.f32.partialorder %v835, 0.0
  %vm852 = vcmp.gt.f32.partialorder %v836, 0.0
  %v853 = vmul.f32 %v821, 0.2
  %v854 = vmul.f32 %v822, 0.2
  %v855 = vmul.f32 %v823, 0.2
  %v856 = vmul.f32 %v824, 0.2
  %v857 = vmul.f32 %v825, 0.2
  %v858 = vmul.f32 %v826, 0.2
  %v859 = vmul.f32 %v827, 0.2
  %v860 = vmul.f32 %v828, 0.2
  %v861 = vmul.f32 %v829, 0.2
  %v862 = vmul.f32 %v830, 0.2
  %v863 = vmul.f32 %v831, 0.2
  %v864 = vmul.f32 %v832, 0.2
  %v865 = vmul.f32 %v833, 0.2
  %v866 = vmul.f32 %v834, 0.2
  %v867 = vmul.f32 %v835, 0.2
  %v868 = vmul.f32 %v836, 0.2
  %v869 = vsel %vm837, %v821, %v853
  %v870 = vsel %vm838, %v822, %v854
  %v871 = vsel %vm839, %v823, %v855
  %v872 = vsel %vm840, %v824, %v856
  %v873 = vsel %vm841, %v825, %v857
  %v874 = vsel %vm842, %v826, %v858
  %v875 = vsel %vm843, %v827, %v859
  %v876 = vsel %vm844, %v828, %v860
  %v877 = vsel %vm845, %v829, %v861
  %v878 = vsel %vm846, %v830, %v862
  %v879 = vsel %vm847, %v831, %v863
  %v880 = vsel %vm848, %v832, %v864
  %v881 = vsel %vm849, %v833, %v865
  %v882 = vsel %vm850, %v834, %v866
  %v883 = vsel %vm851, %v835, %v867
  %v884 = vsel %vm852, %v836, %v868
  %v885 = vpack.c.bf16 %v870, %v869
  %v886 = vpack.c.bf16 %v872, %v871
  %v887 = vpack.c.bf16 %v874, %v873
  %v888 = vpack.c.bf16 %v876, %v875
  %v889 = vpack.c.bf16 %v878, %v877
  %v890 = vpack.c.bf16 %v880, %v879
  %v891 = vpack.c.bf16 %v882, %v881
  %v892 = vpack.c.bf16 %v884, %v883
  %v901 = vunpack.c.l.b16 %v885
  %v902 = vunpack.c.h.b16 %v885
  %v903 = vunpack.c.l.b16 %v886
  %v904 = vunpack.c.h.b16 %v886
  %v905 = vunpack.c.l.b16 %v887
  %v906 = vunpack.c.h.b16 %v887
  %v907 = vunpack.c.l.b16 %v888
  %v908 = vunpack.c.h.b16 %v888
  %v909 = vunpack.c.l.b16 %v889
  %v910 = vunpack.c.h.b16 %v889
  %v911 = vunpack.c.l.b16 %v890
  %v912 = vunpack.c.h.b16 %v890
  %v913 = vunpack.c.l.b16 %v891
  %v914 = vunpack.c.h.b16 %v891
  %v915 = vunpack.c.l.b16 %v892
  %v916 = vunpack.c.h.b16 %v892
  %v917 = vpack.c.b16 %v901, %v901
  %v918 = vpack.c.b16 %v902, %v902
  %v919 = vpack.c.b16 %v903, %v903
  %v920 = vpack.c.b16 %v904, %v904
  %v921 = vpack.c.b16 %v905, %v905
  %v922 = vpack.c.b16 %v906, %v906
  %v923 = vpack.c.b16 %v907, %v907
  %v924 = vpack.c.b16 %v908, %v908
  %v925 = vpack.c.b16 %v909, %v909
  %v926 = vpack.c.b16 %v910, %v910
  %v927 = vpack.c.b16 %v911, %v911
  %v928 = vpack.c.b16 %v912, %v912
  %v929 = vpack.c.b16 %v913, %v913
  %v930 = vpack.c.b16 %v914, %v914
  %v931 = vpack.c.b16 %v915, %v915
  %v932 = vpack.c.b16 %v916, %v916
  %vm949 = vcmask 519168
  %950 = vst.msk [vmem:[%s4] sm:$0xf] %vm949, %v917
  %951 = vst.msk [vmem:[%s4 + $0x4] sm:$0xf] %vm949, %v918
  %952 = vst.msk [vmem:[%s4 + $0x8] sm:$0xf] %vm949, %v919
  %953 = vst.msk [vmem:[%s4 + $0xc] sm:$0xf] %vm949, %v920
  %954 = vst.msk [vmem:[%s4 + $0x10] sm:$0xf] %vm949, %v921
  %955 = vst.msk [vmem:[%s4 + $0x14] sm:$0xf] %vm949, %v922
  %956 = vst.msk [vmem:[%s4 + $0x18] sm:$0xf] %vm949, %v923
  %957 = vst.msk [vmem:[%s4 + $0x1c] sm:$0xf] %vm949, %v924
  %958 = vst.msk [vmem:[%s4 + $0x20] sm:$0xf] %vm949, %v925
  %959 = vst.msk [vmem:[%s4 + $0x24] sm:$0xf] %vm949, %v926
  %960 = vst.msk [vmem:[%s4 + $0x28] sm:$0xf] %vm949, %v927
  %961 = vst.msk [vmem:[%s4 + $0x2c] sm:$0xf] %vm949, %v928
  %962 = vst.msk [vmem:[%s4 + $0x30] sm:$0xf] %vm949, %v929
  %963 = vst.msk [vmem:[%s4 + $0x34] sm:$0xf] %vm949, %v930
  %964 = vst.msk [vmem:[%s4 + $0x38] sm:$0xf] %vm949, %v931
  %965 = vst.msk [vmem:[%s4 + $0x3c] sm:$0xf] %vm949, %v932
  // Predicated region
  $region18: #{discriminator_forward.6} parent=0 // pred_check
    _
  $region19: #{discriminator_forward.6} parent=0 // pred_check_branch
    %967 = sbr.rel (0) target = $region21
  $region20: #{discriminator_forward.6} parent=0 // pred_region
    _
  $region21: #{discriminator_forward.6} parent=0 // pred_fallthru
    _
  // Predicated region
  $region22: #{discriminator_forward.6} parent=0 // pred_check
    _
  $region23: #{discriminator_forward.6} parent=0 // pred_check_branch
    %969 = sbr.rel (0) target = $region25
  $region24: #{discriminator_forward.6} parent=0 // pred_region
    _
  $region25: #{discriminator_forward.6} parent=0 // pred_fallthru
    _

// kernel: discriminator_forward.7
$region0: #{discriminator_forward.7}
  #allocation0 [shape = 'u32[]', space=smem, size = 0x4, offset = 0x4, fixed_abs, tag = 'smem constant byte address 0x4 - core index']
  #allocation1 [shape = 'u32[144,128]{1,0:T(1,128)}', space=vmem, size = 0x12000, scoped, tag = 'internal scratch']
  %s0 = inlined_call_operand.vmem [shape: bf16[32,1024], index: 0, kind: input, shape index: {}]
  %s1 = inlined_call_operand.vmem [shape: bf16[1024,128], index: 1, kind: input, shape index: {}]
  %s2 = inlined_call_operand.vmem [shape: f32[1,128], index: 2, kind: input, shape index: {}]
  %s3 = inlined_call_operand.vmem [shape: f32[1,128], index: 3, kind: input, shape index: {}]
  %s4 = inlined_call_operand.vmem [shape: f32[32,128], index: 4, kind: input, shape index: {}]
  %s5 = inlined_call_operand.vmem [shape: f32[2,32], index: 5, kind: input, shape index: {}]
  %s6 = inlined_call_operand.vmem [shape: f32[2,1], index: 6, kind: output, shape index: {}]
  %s7 = sld [smem:[#allocation0]]
  $region34: #{discriminator_forward.7} parent=0
    _
  %s9 = ssub.s32 1, %s7
  %s10 = scalar_select 0, %s9, %s7
  // Predicated region
  $region2: #{discriminator_forward.7} parent=0 // pred_check
    _
  $region3: #{discriminator_forward.7} parent=0 // pred_check_branch
    %12 = sbr.rel (0) target = $region5
  $region4: #{discriminator_forward.7} parent=0 // pred_region
    _
  $region5: #{discriminator_forward.7} parent=0 // pred_fallthru
    _
  // Predicated region
  $region6: #{discriminator_forward.7} parent=0 // pred_check
    _
  $region7: #{discriminator_forward.7} parent=0 // pred_check_branch
    %14 = sbr.rel (0) target = $region9
  $region8: #{discriminator_forward.7} parent=0 // pred_region
    _
  $region9: #{discriminator_forward.7} parent=0 // pred_fallthru
    _
  // Predicated region
  $region10: #{discriminator_forward.7} parent=0 // pred_check
    _
  $region11: #{discriminator_forward.7} parent=0 // pred_check_branch
    %16 = sbr.rel (0) target = $region13
  $region12: #{discriminator_forward.7} parent=0 // pred_region
    _
  $region13: #{discriminator_forward.7} parent=0 // pred_fallthru
    _
  // Predicated region
  $region14: #{discriminator_forward.7} parent=0 // pred_check
    _
  $region15: #{discriminator_forward.7} parent=0 // pred_check_branch
    %18 = sbr.rel (0) target = $region17
  $region16: #{discriminator_forward.7} parent=0 // pred_region
    _
  $region17: #{discriminator_forward.7} parent=0 // pred_fallthru
    _
  // Predicated region
  $region18: #{discriminator_forward.7} parent=0 // pred_check
    _
  $region19: #{discriminator_forward.7} parent=0 // pred_check_branch
    %20 = sbr.rel (0) target = $region21
  $region20: #{discriminator_forward.7} parent=0 // pred_region
    _
  $region21: #{discriminator_forward.7} parent=0 // pred_fallthru
    _
  // Predicated region
  $region22: #{discriminator_forward.7} parent=0 // pred_check
    _
  $region23: #{discriminator_forward.7} parent=0 // pred_check_branch
    %22 = sbr.rel (0) target = $region25
  $region24: #{discriminator_forward.7} parent=0 // pred_region
    _
  $region25: #{discriminator_forward.7} parent=0 // pred_fallthru
    _
  %v24 = vld [vmem:[%s0] sm:$0xff]
  %v25 = vld [vmem:[%s0 + $0x8] sm:$0xff]
  %v26 = vld [vmem:[%s0 + $0x10] sm:$0xff]
  %v27 = vld [vmem:[%s0 + $0x18] sm:$0xff]
  %v28 = vld [vmem:[%s0 + $0x20] sm:$0xff]
  %v29 = vld [vmem:[%s0 + $0x28] sm:$0xff]
  %v30 = vld [vmem:[%s0 + $0x30] sm:$0xff]
  %v31 = vld [vmem:[%s0 + $0x38] sm:$0xff]
  %v32 = vld [vmem:[%s0 + $0x40] sm:$0xff]
  %v33 = vld [vmem:[%s0 + $0x48] sm:$0xff]
  %v34 = vld [vmem:[%s0 + $0x50] sm:$0xff]
  %v35 = vld [vmem:[%s0 + $0x58] sm:$0xff]
  %v36 = vld [vmem:[%s0 + $0x60] sm:$0xff]
  %v37 = vld [vmem:[%s0 + $0x68] sm:$0xff]
  %v38 = vld [vmem:[%s0 + $0x70] sm:$0xff]
  %v39 = vld [vmem:[%s0 + $0x78] sm:$0xff]
  %v40 = vld [vmem:[%s1] sm:$0xf]
  %v41 = vld [vmem:[%s1 + $0x4] sm:$0xf]
  %v42 = vld [vmem:[%s1 + $0x8] sm:$0xf]
  %v43 = vld [vmem:[%s1 + $0xc] sm:$0xf]
  %v44 = vld [vmem:[%s1 + $0x10] sm:$0xf]
  %v45 = vld [vmem:[%s1 + $0x14] sm:$0xf]
  %v46 = vld [vmem:[%s1 + $0x18] sm:$0xf]
  %v47 = vld [vmem:[%s1 + $0x1c] sm:$0xf]
  %v48 = vld [vmem:[%s1 + $0x20] sm:$0xf]
  %v49 = vld [vmem:[%s1 + $0x24] sm:$0xf]
  %v50 = vld [vmem:[%s1 + $0x28] sm:$0xf]
  %v51 = vld [vmem:[%s1 + $0x2c] sm:$0xf]
  %v52 = vld [vmem:[%s1 + $0x30] sm:$0xf]
  %v53 = vld [vmem:[%s1 + $0x34] sm:$0xf]
  %v54 = vld [vmem:[%s1 + $0x38] sm:$0xf]
  %v55 = vld [vmem:[%s1 + $0x3c] sm:$0xf]
  %v56 = vld [vmem:[%s1 + $0x40] sm:$0xf]
  %v57 = vld [vmem:[%s1 + $0x44] sm:$0xf]
  %v58 = vld [vmem:[%s1 + $0x48] sm:$0xf]
  %v59 = vld [vmem:[%s1 + $0x4c] sm:$0xf]
  %v60 = vld [vmem:[%s1 + $0x50] sm:$0xf]
  %v61 = vld [vmem:[%s1 + $0x54] sm:$0xf]
  %v62 = vld [vmem:[%s1 + $0x58] sm:$0xf]
  %v63 = vld [vmem:[%s1 + $0x5c] sm:$0xf]
  %v64 = vld [vmem:[%s1 + $0x60] sm:$0xf]
  %v65 = vld [vmem:[%s1 + $0x64] sm:$0xf]
  %v66 = vld [vmem:[%s1 + $0x68] sm:$0xf]
  %v67 = vld [vmem:[%s1 + $0x6c] sm:$0xf]
  %v68 = vld [vmem:[%s1 + $0x70] sm:$0xf]
  %v69 = vld [vmem:[%s1 + $0x74] sm:$0xf]
  %v70 = vld [vmem:[%s1 + $0x78] sm:$0xf]
  %v71 = vld [vmem:[%s1 + $0x7c] sm:$0xf]
  %v72 = vld [vmem:[%s1 + $0x80] sm:$0xf]
  %v73 = vld [vmem:[%s1 + $0x84] sm:$0xf]
  %v74 = vld [vmem:[%s1 + $0x88] sm:$0xf]
  %v75 = vld [vmem:[%s1 + $0x8c] sm:$0xf]
  %v76 = vld [vmem:[%s1 + $0x90] sm:$0xf]
  %v77 = vld [vmem:[%s1 + $0x94] sm:$0xf]
  %v78 = vld [vmem:[%s1 + $0x98] sm:$0xf]
  %v79 = vld [vmem:[%s1 + $0x9c] sm:$0xf]
  %v80 = vld [vmem:[%s1 + $0xa0] sm:$0xf]
  %v81 = vld [vmem:[%s1 + $0xa4] sm:$0xf]
  %v82 = vld [vmem:[%s1 + $0xa8] sm:$0xf]
  %v83 = vld [vmem:[%s1 + $0xac] sm:$0xf]
  %v84 = vld [vmem:[%s1 + $0xb0] sm:$0xf]
  %v85 = vld [vmem:[%s1 + $0xb4] sm:$0xf]
  %v86 = vld [vmem:[%s1 + $0xb8] sm:$0xf]
  %v87 = vld [vmem:[%s1 + $0xbc] sm:$0xf]
  %v88 = vld [vmem:[%s1 + $0xc0] sm:$0xf]
  %v89 = vld [vmem:[%s1 + $0xc4] sm:$0xf]
  %v90 = vld [vmem:[%s1 + $0xc8] sm:$0xf]
  %v91 = vld [vmem:[%s1 + $0xcc] sm:$0xf]
  %v92 = vld [vmem:[%s1 + $0xd0] sm:$0xf]
  %v93 = vld [vmem:[%s1 + $0xd4] sm:$0xf]
  %v94 = vld [vmem:[%s1 + $0xd8] sm:$0xf]
  %v95 = vld [vmem:[%s1 + $0xdc] sm:$0xf]
  %v96 = vld [vmem:[%s1 + $0xe0] sm:$0xf]
  %v97 = vld [vmem:[%s1 + $0xe4] sm:$0xf]
  %v98 = vld [vmem:[%s1 + $0xe8] sm:$0xf]
  %v99 = vld [vmem:[%s1 + $0xec] sm:$0xf]
  %v100 = vld [vmem:[%s1 + $0xf0] sm:$0xf]
  %v101 = vld [vmem:[%s1 + $0xf4] sm:$0xf]
  %v102 = vld [vmem:[%s1 + $0xf8] sm:$0xf]
  %v103 = vld [vmem:[%s1 + $0xfc] sm:$0xf]
  %v104 = vld [vmem:[%s1 + $0x100] sm:$0xf]
  %v105 = vld [vmem:[%s1 + $0x104] sm:$0xf]
  %v106 = vld [vmem:[%s1 + $0x108] sm:$0xf]
  %v107 = vld [vmem:[%s1 + $0x10c] sm:$0xf]
  %v108 = vld [vmem:[%s1 + $0x110] sm:$0xf]
  %v109 = vld [vmem:[%s1 + $0x114] sm:$0xf]
  %v110 = vld [vmem:[%s1 + $0x118] sm:$0xf]
  %v111 = vld [vmem:[%s1 + $0x11c] sm:$0xf]
  %v112 = vld [vmem:[%s1 + $0x120] sm:$0xf]
  %v113 = vld [vmem:[%s1 + $0x124] sm:$0xf]
  %v114 = vld [vmem:[%s1 + $0x128] sm:$0xf]
  %v115 = vld [vmem:[%s1 + $0x12c] sm:$0xf]
  %v116 = vld [vmem:[%s1 + $0x130] sm:$0xf]
  %v117 = vld [vmem:[%s1 + $0x134] sm:$0xf]
  %v118 = vld [vmem:[%s1 + $0x138] sm:$0xf]
  %v119 = vld [vmem:[%s1 + $0x13c] sm:$0xf]
  %v120 = vld [vmem:[%s1 + $0x140] sm:$0xf]
  %v121 = vld [vmem:[%s1 + $0x144] sm:$0xf]
  %v122 = vld [vmem:[%s1 + $0x148] sm:$0xf]
  %v123 = vld [vmem:[%s1 + $0x14c] sm:$0xf]
  %v124 = vld [vmem:[%s1 + $0x150] sm:$0xf]
  %v125 = vld [vmem:[%s1 + $0x154] sm:$0xf]
  %v126 = vld [vmem:[%s1 + $0x158] sm:$0xf]
  %v127 = vld [vmem:[%s1 + $0x15c] sm:$0xf]
  %v128 = vld [vmem:[%s1 + $0x160] sm:$0xf]
  %v129 = vld [vmem:[%s1 + $0x164] sm:$0xf]
  %v130 = vld [vmem:[%s1 + $0x168] sm:$0xf]
  %v131 = vld [vmem:[%s1 + $0x16c] sm:$0xf]
  %v132 = vld [vmem:[%s1 + $0x170] sm:$0xf]
  %v133 = vld [vmem:[%s1 + $0x174] sm:$0xf]
  %v134 = vld [vmem:[%s1 + $0x178] sm:$0xf]
  %v135 = vld [vmem:[%s1 + $0x17c] sm:$0xf]
  %v136 = vld [vmem:[%s1 + $0x180] sm:$0xf]
  %v137 = vld [vmem:[%s1 + $0x184] sm:$0xf]
  %v138 = vld [vmem:[%s1 + $0x188] sm:$0xf]
  %v139 = vld [vmem:[%s1 + $0x18c] sm:$0xf]
  %v140 = vld [vmem:[%s1 + $0x190] sm:$0xf]
  %v141 = vld [vmem:[%s1 + $0x194] sm:$0xf]
  %v142 = vld [vmem:[%s1 + $0x198] sm:$0xf]
  %v143 = vld [vmem:[%s1 + $0x19c] sm:$0xf]
  %v144 = vld [vmem:[%s1 + $0x1a0] sm:$0xf]
  %v145 = vld [vmem:[%s1 + $0x1a4] sm:$0xf]
  %v146 = vld [vmem:[%s1 + $0x1a8] sm:$0xf]
  %v147 = vld [vmem:[%s1 + $0x1ac] sm:$0xf]
  %v148 = vld [vmem:[%s1 + $0x1b0] sm:$0xf]
  %v149 = vld [vmem:[%s1 + $0x1b4] sm:$0xf]
  %v150 = vld [vmem:[%s1 + $0x1b8] sm:$0xf]
  %v151 = vld [vmem:[%s1 + $0x1bc] sm:$0xf]
  %v152 = vld [vmem:[%s1 + $0x1c0] sm:$0xf]
  %v153 = vld [vmem:[%s1 + $0x1c4] sm:$0xf]
  %v154 = vld [vmem:[%s1 + $0x1c8] sm:$0xf]
  %v155 = vld [vmem:[%s1 + $0x1cc] sm:$0xf]
  %v156 = vld [vmem:[%s1 + $0x1d0] sm:$0xf]
  %v157 = vld [vmem:[%s1 + $0x1d4] sm:$0xf]
  %v158 = vld [vmem:[%s1 + $0x1d8] sm:$0xf]
  %v159 = vld [vmem:[%s1 + $0x1dc] sm:$0xf]
  %v160 = vld [vmem:[%s1 + $0x1e0] sm:$0xf]
  %v161 = vld [vmem:[%s1 + $0x1e4] sm:$0xf]
  %v162 = vld [vmem:[%s1 + $0x1e8] sm:$0xf]
  %v163 = vld [vmem:[%s1 + $0x1ec] sm:$0xf]
  %v164 = vld [vmem:[%s1 + $0x1f0] sm:$0xf]
  %v165 = vld [vmem:[%s1 + $0x1f4] sm:$0xf]
  %v166 = vld [vmem:[%s1 + $0x1f8] sm:$0xf]
  %v167 = vld [vmem:[%s1 + $0x1fc] sm:$0xf]
  %v184 = vunpack.c.l.b16 %v24
  %v185 = vunpack.c.h.b16 %v24
  %v186 = vunpack.c.l.b16 %v25
  %v187 = vunpack.c.h.b16 %v25
  %v188 = vunpack.c.l.b16 %v26
  %v189 = vunpack.c.h.b16 %v26
  %v190 = vunpack.c.l.b16 %v27
  %v191 = vunpack.c.h.b16 %v27
  %v192 = vunpack.c.l.b16 %v28
  %v193 = vunpack.c.h.b16 %v28
  %v194 = vunpack.c.l.b16 %v29
  %v195 = vunpack.c.h.b16 %v29
  %v196 = vunpack.c.l.b16 %v30
  %v197 = vunpack.c.h.b16 %v30
  %v198 = vunpack.c.l.b16 %v31
  %v199 = vunpack.c.h.b16 %v31
  %v200 = vunpack.c.l.b16 %v32
  %v201 = vunpack.c.h.b16 %v32
  %v202 = vunpack.c.l.b16 %v33
  %v203 = vunpack.c.h.b16 %v33
  %v204 = vunpack.c.l.b16 %v34
  %v205 = vunpack.c.h.b16 %v34
  %v206 = vunpack.c.l.b16 %v35
  %v207 = vunpack.c.h.b16 %v35
  %v208 = vunpack.c.l.b16 %v36
  %v209 = vunpack.c.h.b16 %v36
  %v210 = vunpack.c.l.b16 %v37
  %v211 = vunpack.c.h.b16 %v37
  %v212 = vunpack.c.l.b16 %v38
  %v213 = vunpack.c.h.b16 %v38
  %v214 = vunpack.c.l.b16 %v39
  %v215 = vunpack.c.h.b16 %v39
  %v216 = vpack.c.b16 %v192, %v184
  %v217 = vpack.c.b16 %v193, %v185
  %v218 = vpack.c.b16 %v194, %v186
  %v219 = vpack.c.b16 %v195, %v187
  %v220 = vpack.c.b16 %v196, %v188
  %v221 = vpack.c.b16 %v197, %v189
  %v222 = vpack.c.b16 %v198, %v190
  %v223 = vpack.c.b16 %v199, %v191
  %v224 = vpack.c.b16 %v208, %v200
  %v225 = vpack.c.b16 %v209, %v201
  %v226 = vpack.c.b16 %v210, %v202
  %v227 = vpack.c.b16 %v211, %v203
  %v228 = vpack.c.b16 %v212, %v204
  %v229 = vpack.c.b16 %v213, %v205
  %v230 = vpack.c.b16 %v214, %v206
  %v231 = vpack.c.b16 %v215, %v207
  %v376 = vunpack.c.l.b16 %v40
  %v377 = vunpack.c.l.b16 %v41
  %v378 = vunpack.c.l.b16 %v42
  %v379 = vunpack.c.l.b16 %v43
  %v380 = vunpack.c.l.b16 %v44
  %v381 = vunpack.c.l.b16 %v45
  %v382 = vunpack.c.l.b16 %v46
  %v383 = vunpack.c.l.b16 %v47
  %v384 = vunpack.c.l.b16 %v48
  %v385 = vunpack.c.l.b16 %v49
  %v386 = vunpack.c.l.b16 %v50
  %v387 = vunpack.c.l.b16 %v51
  %v388 = vunpack.c.l.b16 %v52
  %v389 = vunpack.c.l.b16 %v53
  %v390 = vunpack.c.l.b16 %v54
  %v391 = vunpack.c.l.b16 %v55
  %v392 = vunpack.c.l.b16 %v56
  %v393 = vunpack.c.l.b16 %v57
  %v394 = vunpack.c.l.b16 %v58
  %v395 = vunpack.c.l.b16 %v59
  %v396 = vunpack.c.l.b16 %v60
  %v397 = vunpack.c.l.b16 %v61
  %v398 = vunpack.c.l.b16 %v62
  %v399 = vunpack.c.l.b16 %v63
  %v400 = vunpack.c.l.b16 %v64
  %v401 = vunpack.c.l.b16 %v65
  %v402 = vunpack.c.l.b16 %v66
  %v403 = vunpack.c.l.b16 %v67
  %v404 = vunpack.c.l.b16 %v68
  %v405 = vunpack.c.l.b16 %v69
  %v406 = vunpack.c.l.b16 %v70
  %v407 = vunpack.c.l.b16 %v71
  %v408 = vunpack.c.l.b16 %v72
  %v409 = vunpack.c.l.b16 %v73
  %v410 = vunpack.c.l.b16 %v74
  %v411 = vunpack.c.l.b16 %v75
  %v412 = vunpack.c.l.b16 %v76
  %v413 = vunpack.c.l.b16 %v77
  %v414 = vunpack.c.l.b16 %v78
  %v415 = vunpack.c.l.b16 %v79
  %v416 = vunpack.c.l.b16 %v80
  %v417 = vunpack.c.l.b16 %v81
  %v418 = vunpack.c.l.b16 %v82
  %v419 = vunpack.c.l.b16 %v83
  %v420 = vunpack.c.l.b16 %v84
  %v421 = vunpack.c.l.b16 %v85
  %v422 = vunpack.c.l.b16 %v86
  %v423 = vunpack.c.l.b16 %v87
  %v424 = vunpack.c.l.b16 %v88
  %v425 = vunpack.c.l.b16 %v89
  %v426 = vunpack.c.l.b16 %v90
  %v427 = vunpack.c.l.b16 %v91
  %v428 = vunpack.c.l.b16 %v92
  %v429 = vunpack.c.l.b16 %v93
  %v430 = vunpack.c.l.b16 %v94
  %v431 = vunpack.c.l.b16 %v95
  %v432 = vunpack.c.l.b16 %v96
  %v433 = vunpack.c.l.b16 %v97
  %v434 = vunpack.c.l.b16 %v98
  %v435 = vunpack.c.l.b16 %v99
  %v436 = vunpack.c.l.b16 %v100
  %v437 = vunpack.c.l.b16 %v101
  %v438 = vunpack.c.l.b16 %v102
  %v439 = vunpack.c.l.b16 %v103
  %v440 = vunpack.c.l.b16 %v104
  %v441 = vunpack.c.l.b16 %v105
  %v442 = vunpack.c.l.b16 %v106
  %v443 = vunpack.c.l.b16 %v107
  %v444 = vunpack.c.l.b16 %v108
  %v445 = vunpack.c.l.b16 %v109
  %v446 = vunpack.c.l.b16 %v110
  %v447 = vunpack.c.l.b16 %v111
  %v448 = vunpack.c.l.b16 %v112
  %v449 = vunpack.c.l.b16 %v113
  %v450 = vunpack.c.l.b16 %v114
  %v451 = vunpack.c.l.b16 %v115
  %v452 = vunpack.c.l.b16 %v116
  %v453 = vunpack.c.l.b16 %v117
  %v454 = vunpack.c.l.b16 %v118
  %v455 = vunpack.c.l.b16 %v119
  %v456 = vunpack.c.l.b16 %v120
  %v457 = vunpack.c.l.b16 %v121
  %v458 = vunpack.c.l.b16 %v122
  %v459 = vunpack.c.l.b16 %v123
  %v460 = vunpack.c.l.b16 %v124
  %v461 = vunpack.c.l.b16 %v125
  %v462 = vunpack.c.l.b16 %v126
  %v463 = vunpack.c.l.b16 %v127
  %v464 = vunpack.c.l.b16 %v128
  %v465 = vunpack.c.l.b16 %v129
  %v466 = vunpack.c.l.b16 %v130
  %v467 = vunpack.c.l.b16 %v131
  %v468 = vunpack.c.l.b16 %v132
  %v469 = vunpack.c.l.b16 %v133
  %v470 = vunpack.c.l.b16 %v134
  %v471 = vunpack.c.l.b16 %v135
  %v472 = vunpack.c.l.b16 %v136
  %v473 = vunpack.c.l.b16 %v137
  %v474 = vunpack.c.l.b16 %v138
  %v475 = vunpack.c.l.b16 %v139
  %v476 = vunpack.c.l.b16 %v140
  %v477 = vunpack.c.l.b16 %v141
  %v478 = vunpack.c.l.b16 %v142
  %v479 = vunpack.c.l.b16 %v143
  %v480 = vunpack.c.l.b16 %v144
  %v481 = vunpack.c.l.b16 %v145
  %v482 = vunpack.c.l.b16 %v146
  %v483 = vunpack.c.l.b16 %v147
  %v484 = vunpack.c.l.b16 %v148
  %v485 = vunpack.c.l.b16 %v149
  %v486 = vunpack.c.l.b16 %v150
  %v487 = vunpack.c.l.b16 %v151
  %v488 = vunpack.c.l.b16 %v152
  %v489 = vunpack.c.l.b16 %v153
  %v490 = vunpack.c.l.b16 %v154
  %v491 = vunpack.c.l.b16 %v155
  %v492 = vunpack.c.l.b16 %v156
  %v493 = vunpack.c.l.b16 %v157
  %v494 = vunpack.c.l.b16 %v158
  %v495 = vunpack.c.l.b16 %v159
  %v496 = vunpack.c.l.b16 %v160
  %v497 = vunpack.c.l.b16 %v161
  %v498 = vunpack.c.l.b16 %v162
  %v499 = vunpack.c.l.b16 %v163
  %v500 = vunpack.c.l.b16 %v164
  %v501 = vunpack.c.l.b16 %v165
  %v502 = vunpack.c.l.b16 %v166
  %v503 = vunpack.c.l.b16 %v167
  %v504 = vpack.c.b16 %v377, %v376
  %v505 = vpack.c.b16 %v379, %v378
  %v506 = vpack.c.b16 %v381, %v380
  %v507 = vpack.c.b16 %v383, %v382
  %v508 = vpack.c.b16 %v385, %v384
  %v509 = vpack.c.b16 %v387, %v386
  %v510 = vpack.c.b16 %v389, %v388
  %v511 = vpack.c.b16 %v391, %v390
  %v512 = vpack.c.b16 %v393, %v392
  %v513 = vpack.c.b16 %v395, %v394
  %v514 = vpack.c.b16 %v397, %v396
  %v515 = vpack.c.b16 %v399, %v398
  %v516 = vpack.c.b16 %v401, %v400
  %v517 = vpack.c.b16 %v403, %v402
  %v518 = vpack.c.b16 %v405, %v404
  %v519 = vpack.c.b16 %v407, %v406
  %v520 = vpack.c.b16 %v409, %v408
  %v521 = vpack.c.b16 %v411, %v410
  %v522 = vpack.c.b16 %v413, %v412
  %v523 = vpack.c.b16 %v415, %v414
  %v524 = vpack.c.b16 %v417, %v416
  %v525 = vpack.c.b16 %v419, %v418
  %v526 = vpack.c.b16 %v421, %v420
  %v527 = vpack.c.b16 %v423, %v422
  %v528 = vpack.c.b16 %v425, %v424
  %v529 = vpack.c.b16 %v427, %v426
  %v530 = vpack.c.b16 %v429, %v428
  %v531 = vpack.c.b16 %v431, %v430
  %v532 = vpack.c.b16 %v433, %v432
  %v533 = vpack.c.b16 %v435, %v434
  %v534 = vpack.c.b16 %v437, %v436
  %v535 = vpack.c.b16 %v439, %v438
  %v536 = vpack.c.b16 %v441, %v440
  %v537 = vpack.c.b16 %v443, %v442
  %v538 = vpack.c.b16 %v445, %v444
  %v539 = vpack.c.b16 %v447, %v446
  %v540 = vpack.c.b16 %v449, %v448
  %v541 = vpack.c.b16 %v451, %v450
  %v542 = vpack.c.b16 %v453, %v452
  %v543 = vpack.c.b16 %v455, %v454
  %v544 = vpack.c.b16 %v457, %v456
  %v545 = vpack.c.b16 %v459, %v458
  %v546 = vpack.c.b16 %v461, %v460
  %v547 = vpack.c.b16 %v463, %v462
  %v548 = vpack.c.b16 %v465, %v464
  %v549 = vpack.c.b16 %v467, %v466
  %v550 = vpack.c.b16 %v469, %v468
  %v551 = vpack.c.b16 %v471, %v470
  %v552 = vpack.c.b16 %v473, %v472
  %v553 = vpack.c.b16 %v475, %v474
  %v554 = vpack.c.b16 %v477, %v476
  %v555 = vpack.c.b16 %v479, %v478
  %v556 = vpack.c.b16 %v481, %v480
  %v557 = vpack.c.b16 %v483, %v482
  %v558 = vpack.c.b16 %v485, %v484
  %v559 = vpack.c.b16 %v487, %v486
  %v560 = vpack.c.b16 %v489, %v488
  %v561 = vpack.c.b16 %v491, %v490
  %v562 = vpack.c.b16 %v493, %v492
  %v563 = vpack.c.b16 %v495, %v494
  %v564 = vpack.c.b16 %v497, %v496
  %v565 = vpack.c.b16 %v499, %v498
  %v566 = vpack.c.b16 %v501, %v500
  %v567 = vpack.c.b16 %v503, %v502
  %632 = vmatprep.subr.bf16.mxu0 0
  %633 = vmatpush1.bf16.msra.mxu0 %v511
  %634 = vmatprep.subr.bf16.mxu0 0
  %635 = vmatpush1.bf16.msra.mxu0 %v510
  %636 = vmatprep.subr.bf16.mxu0 0
  %637 = vmatpush1.bf16.msra.mxu0 %v509
  %638 = vmatprep.subr.bf16.mxu0 0
  %639 = vmatpush1.bf16.msra.mxu0 %v508
  %640 = vmatprep.subr.bf16.mxu0 0
  %641 = vmatpush1.bf16.msra.mxu0 %v507
  %642 = vmatprep.subr.bf16.mxu0 0
  %643 = vmatpush1.bf16.msra.mxu0 %v506
  %644 = vmatprep.subr.bf16.mxu0 0
  %645 = vmatpush1.bf16.msra.mxu0 %v505
  %646 = vmatprep.subr.bf16.mxu0 0
  %647 = vmatpush1.bf16.msra.mxu0 %v504
  %648 = vmatprep.subr.bf16.mxu0 0
  %649 = vmatpush2.bf16.msra.mxu0 %v519
  %650 = vmatprep.subr.bf16.mxu0 0
  %651 = vmatpush2.bf16.msra.mxu0 %v518
  %652 = vmatprep.subr.bf16.mxu0 0
  %653 = vmatpush2.bf16.msra.mxu0 %v517
  %654 = vmatprep.subr.bf16.mxu0 0
  %655 = vmatpush2.bf16.msra.mxu0 %v516
  %656 = vmatprep.subr.bf16.mxu0 0
  %657 = vmatpush2.bf16.msra.mxu0 %v515
  %658 = vmatprep.subr.bf16.mxu0 0
  %659 = vmatpush2.bf16.msra.mxu0 %v514
  %660 = vmatprep.subr.bf16.mxu0 0
  %661 = vmatpush2.bf16.msra.mxu0 %v513
  %662 = vmatprep.subr.bf16.mxu0 0
  %663 = vmatpush2.bf16.msra.mxu0 %v512
  %664 = vmatprep.mubr.bf16.mxu0 %v217
  %665 = vmatmul.mubr.bf16.gmra.mxu0 %v216
  %v666 = vpop.f32.mrf.mxu0
  %v667 = vadd.f32 0.0, %v666
  %v668 = vpop.f32.mrf.mxu0
  %v669 = vpop.f32.mrf.mxu0
  %v670 = vadd.f32 0.0, %v669
  %v671 = vpop.f32.mrf.mxu0
  %672 = vmatprep.mubr.bf16.mxu0 %v225
  %673 = vmatmul.mubr.bf16.gmra.mxu0 %v224
  %v674 = vpop.f32.mrf.mxu0
  %v675 = vadd.f32 0.0, %v674
  %v676 = vpop.f32.mrf.mxu0
  %v677 = vpop.f32.mrf.mxu0
  %v678 = vadd.f32 0.0, %v677
  %v679 = vpop.f32.mrf.mxu0
  %680 = vdwg.mxu0
  %681 = vmatprep.subr.bf16.mxu0 0
  %682 = vmatpush1.bf16.msra.mxu0 %v527
  %683 = vmatprep.subr.bf16.mxu0 0
  %684 = vmatpush1.bf16.msra.mxu0 %v526
  %685 = vmatprep.subr.bf16.mxu0 0
  %686 = vmatpush1.bf16.msra.mxu0 %v525
  %687 = vmatprep.subr.bf16.mxu0 0
  %688 = vmatpush1.bf16.msra.mxu0 %v524
  %689 = vmatprep.subr.bf16.mxu0 0
  %690 = vmatpush1.bf16.msra.mxu0 %v523
  %691 = vmatprep.subr.bf16.mxu0 0
  %692 = vmatpush1.bf16.msra.mxu0 %v522
  %693 = vmatprep.subr.bf16.mxu0 0
  %694 = vmatpush1.bf16.msra.mxu0 %v521
  %695 = vmatprep.subr.bf16.mxu0 0
  %696 = vmatpush1.bf16.msra.mxu0 %v520
  %697 = vmatprep.subr.bf16.mxu0 0
  %698 = vmatpush2.bf16.msra.mxu0 %v535
  %699 = vmatprep.subr.bf16.mxu0 0
  %700 = vmatpush2.bf16.msra.mxu0 %v534
  %701 = vmatprep.subr.bf16.mxu0 0
  %702 = vmatpush2.bf16.msra.mxu0 %v533
  %703 = vmatprep.subr.bf16.mxu0 0
  %704 = vmatpush2.bf16.msra.mxu0 %v532
  %705 = vmatprep.subr.bf16.mxu0 0
  %706 = vmatpush2.bf16.msra.mxu0 %v531
  %707 = vmatprep.subr.bf16.mxu0 0
  %708 = vmatpush2.bf16.msra.mxu0 %v530
  %709 = vmatprep.subr.bf16.mxu0 0
  %710 = vmatpush2.bf16.msra.mxu0 %v529
  %711 = vmatprep.subr.bf16.mxu0 0
  %712 = vmatpush2.bf16.msra.mxu0 %v528
  %713 = vmatprep.mubr.bf16.mxu0 %v219
  %714 = vmatmul.mubr.bf16.gmra.mxu0 %v218
  %v715 = vpop.f32.mrf.mxu0
  %v716 = vadd.f32 %v667, %v715
  %v717 = vpop.f32.mrf.mxu0
  %v718 = vpop.f32.mrf.mxu0
  %v719 = vadd.f32 %v670, %v718
  %v720 = vpop.f32.mrf.mxu0
  %721 = vmatprep.mubr.bf16.mxu0 %v227
  %722 = vmatmul.mubr.bf16.gmra.mxu0 %v226
  %v723 = vpop.f32.mrf.mxu0
  %v724 = vadd.f32 %v675, %v723
  %v725 = vpop.f32.mrf.mxu0
  %v726 = vpop.f32.mrf.mxu0
  %v727 = vadd.f32 %v678, %v726
  %v728 = vpop.f32.mrf.mxu0
  %729 = vdwg.mxu0
  %730 = vmatprep.subr.bf16.mxu0 0
  %731 = vmatpush1.bf16.msra.mxu0 %v543
  %732 = vmatprep.subr.bf16.mxu0 0
  %733 = vmatpush1.bf16.msra.mxu0 %v542
  %734 = vmatprep.subr.bf16.mxu0 0
  %735 = vmatpush1.bf16.msra.mxu0 %v541
  %736 = vmatprep.subr.bf16.mxu0 0
  %737 = vmatpush1.bf16.msra.mxu0 %v540
  %738 = vmatprep.subr.bf16.mxu0 0
  %739 = vmatpush1.bf16.msra.mxu0 %v539
  %740 = vmatprep.subr.bf16.mxu0 0
  %741 = vmatpush1.bf16.msra.mxu0 %v538
  %742 = vmatprep.subr.bf16.mxu0 0
  %743 = vmatpush1.bf16.msra.mxu0 %v537
  %744 = vmatprep.subr.bf16.mxu0 0
  %745 = vmatpush1.bf16.msra.mxu0 %v536
  %746 = vmatprep.subr.bf16.mxu0 0
  %747 = vmatpush2.bf16.msra.mxu0 %v551
  %748 = vmatprep.subr.bf16.mxu0 0
  %749 = vmatpush2.bf16.msra.mxu0 %v550
  %750 = vmatprep.subr.bf16.mxu0 0
  %751 = vmatpush2.bf16.msra.mxu0 %v549
  %752 = vmatprep.subr.bf16.mxu0 0
  %753 = vmatpush2.bf16.msra.mxu0 %v548
  %754 = vmatprep.subr.bf16.mxu0 0
  %755 = vmatpush2.bf16.msra.mxu0 %v547
  %756 = vmatprep.subr.bf16.mxu0 0
  %757 = vmatpush2.bf16.msra.mxu0 %v546
  %758 = vmatprep.subr.bf16.mxu0 0
  %759 = vmatpush2.bf16.msra.mxu0 %v545
  %760 = vmatprep.subr.bf16.mxu0 0
  %761 = vmatpush2.bf16.msra.mxu0 %v544
  %762 = vmatprep.mubr.bf16.mxu0 %v221
  %763 = vmatmul.mubr.bf16.gmra.mxu0 %v220
  %v764 = vpop.f32.mrf.mxu0
  %v765 = vadd.f32 %v716, %v764
  %v766 = vpop.f32.mrf.mxu0
  %v767 = vpop.f32.mrf.mxu0
  %v768 = vadd.f32 %v719, %v767
  %v769 = vpop.f32.mrf.mxu0
  %770 = vmatprep.mubr.bf16.mxu0 %v229
  %771 = vmatmul.mubr.bf16.gmra.mxu0 %v228
  %v772 = vpop.f32.mrf.mxu0
  %v773 = vadd.f32 %v724, %v772
  %v774 = vpop.f32.mrf.mxu0
  %v775 = vpop.f32.mrf.mxu0
  %v776 = vadd.f32 %v727, %v775
  %v777 = vpop.f32.mrf.mxu0
  %778 = vdwg.mxu0
  %779 = vmatprep.subr.bf16.mxu0 0
  %780 = vmatpush1.bf16.msra.mxu0 %v559
  %781 = vmatprep.subr.bf16.mxu0 0
  %782 = vmatpush1.bf16.msra.mxu0 %v558
  %783 = vmatprep.subr.bf16.mxu0 0
  %784 = vmatpush1.bf16.msra.mxu0 %v557
  %785 = vmatprep.subr.bf16.mxu0 0
  %786 = vmatpush1.bf16.msra.mxu0 %v556
  %787 = vmatprep.subr.bf16.mxu0 0
  %788 = vmatpush1.bf16.msra.mxu0 %v555
  %789 = vmatprep.subr.bf16.mxu0 0
  %790 = vmatpush1.bf16.msra.mxu0 %v554
  %791 = vmatprep.subr.bf16.mxu0 0
  %792 = vmatpush1.bf16.msra.mxu0 %v553
  %793 = vmatprep.subr.bf16.mxu0 0
  %794 = vmatpush1.bf16.msra.mxu0 %v552
  %795 = vmatprep.subr.bf16.mxu0 0
  %796 = vmatpush2.bf16.msra.mxu0 %v567
  %797 = vmatprep.subr.bf16.mxu0 0
  %798 = vmatpush2.bf16.msra.mxu0 %v566
  %799 = vmatprep.subr.bf16.mxu0 0
  %800 = vmatpush2.bf16.msra.mxu0 %v565
  %801 = vmatprep.subr.bf16.mxu0 0
  %802 = vmatpush2.bf16.msra.mxu0 %v564
  %803 = vmatprep.subr.bf16.mxu0 0
  %804 = vmatpush2.bf16.msra.mxu0 %v563
  %805 = vmatprep.subr.bf16.mxu0 0
  %806 = vmatpush2.bf16.msra.mxu0 %v562
  %807 = vmatprep.subr.bf16.mxu0 0
  %808 = vmatpush2.bf16.msra.mxu0 %v561
  %809 = vmatprep.subr.bf16.mxu0 0
  %810 = vmatpush2.bf16.msra.mxu0 %v560
  %811 = vmatprep.mubr.bf16.mxu0 %v223
  %812 = vmatmul.mubr.bf16.gmra.mxu0 %v222
  %v813 = vpop.f32.mrf.mxu0
  %v814 = vadd.f32 %v765, %v813
  %v815 = vpop.f32.mrf.mxu0
  %v816 = vpop.f32.mrf.mxu0
  %v817 = vadd.f32 %v768, %v816
  %v818 = vpop.f32.mrf.mxu0
  %819 = vmatprep.mubr.bf16.mxu0 %v231
  %820 = vmatmul.mubr.bf16.gmra.mxu0 %v230
  %v821 = vpop.f32.mrf.mxu0
  %v822 = vadd.f32 %v773, %v821
  %v823 = vpop.f32.mrf.mxu0
  %v824 = vpop.f32.mrf.mxu0
  %v825 = vadd.f32 %v776, %v824
  %v826 = vpop.f32.mrf.mxu0
  %827 = vdwg.mxu0
  %v828 = vadd.f32 %v814, %v817
  %v829 = vadd.f32 %v828, %v822
  %v830 = vadd.f32 %v829, %v825
  %v831 = vrot.slane %v830, 4
  %v832 = vadd.f32 %v830, %v831
  %v833 = vrot.slane %v832, 2
  %v834 = vadd.f32 %v832, %v833
  %v835 = vrot.slane %v834, 1
  %v836 = vadd.f32 %v834, %v835
  %v837 = vrcp.pop 32.0
  %v838 = vmul.f32 %v836, %v837
  %v839 = vmul.f32 %v814, %v814
  %v840 = vmul.f32 %v817, %v817
  %v841 = vmul.f32 %v822, %v822
  %v842 = vmul.f32 %v825, %v825
  %v843 = vadd.f32 %v839, %v840
  %v844 = vadd.f32 %v843, %v841
  %v845 = vadd.f32 %v844, %v842
  %v846 = vrot.slane %v845, 4
  %v847 = vadd.f32 %v845, %v846
  %v848 = vrot.slane %v847, 2
  %v849 = vadd.f32 %v847, %v848
  %v850 = vrot.slane %v849, 1
  %v851 = vadd.f32 %v849, %v850
  %v852 = vmul.f32 %v851, %v837
  %v853 = vmul.f32 %v838, %v838
  %v854 = vsub.f32 %v852, %v853
  %v855 = vmax.f32 %v854, 0.0
  %v856 = vsub.f32 %v814, %v838
  %v857 = vsub.f32 %v817, %v838
  %v858 = vsub.f32 %v822, %v838
  %v859 = vsub.f32 %v825, %v838
  %v860 = vadd.f32 %v855, 1e-05
  %v861 = vrsqrt.pop %v860
  %v862 = vmul.f32 %v856, %v861
  %v863 = vmul.f32 %v857, %v861
  %v864 = vmul.f32 %v858, %v861
  %v865 = vmul.f32 %v859, %v861
  %v866 = vld [vmem:[%s2] sm:$0x1]
  %v868 = vlaneseq
  %v869 = vshrl.u32 %v868, 7
  %v870 = vsub.s32 0, %v869
  %v871 = vrot.slane %v866, %v870
  %v873 = vmul.f32 %v862, %v871
  %v874 = vmul.f32 %v863, %v871
  %v875 = vmul.f32 %v864, %v871
  %v876 = vmul.f32 %v865, %v871
  %v877 = vld [vmem:[%s3] sm:$0x1]
  %v879 = vlaneseq
  %v880 = vshrl.u32 %v879, 7
  %v881 = vsub.s32 0, %v880
  %v882 = vrot.slane %v877, %v881
  %v884 = vadd.f32 %v873, %v882
  %v885 = vadd.f32 %v874, %v882
  %v886 = vadd.f32 %v875, %v882
  %v887 = vadd.f32 %v876, %v882
  %vm888 = vcmp.gt.f32.partialorder %v884, 0.0
  %vm889 = vcmp.gt.f32.partialorder %v885, 0.0
  %vm890 = vcmp.gt.f32.partialorder %v886, 0.0
  %vm891 = vcmp.gt.f32.partialorder %v887, 0.0
  %v892 = vmul.f32 %v884, 0.2
  %v893 = vmul.f32 %v885, 0.2
  %v894 = vmul.f32 %v886, 0.2
  %v895 = vmul.f32 %v887, 0.2
  %v896 = vsel %vm888, %v884, %v892
  %v897 = vsel %vm889, %v885, %v893
  %v898 = vsel %vm890, %v886, %v894
  %v899 = vsel %vm891, %v887, %v895
  %v900 = vld [vmem:[%s4] sm:$0xff]
  %v901 = vld [vmem:[%s4 + $0x8] sm:$0xff]
  %v902 = vld [vmem:[%s4 + $0x10] sm:$0xff]
  %v903 = vld [vmem:[%s4 + $0x18] sm:$0xff]
  %v904 = vmul.f32 %v896, %v900
  %v905 = vmul.f32 %v897, %v901
  %v906 = vmul.f32 %v898, %v902
  %v907 = vmul.f32 %v899, %v903
  %908 = vadd.xlane.f32.xlu0 %v904
  %v909 = vpop.xlane.xlu0 %908
  %910 = vadd.xlane.f32.xlu0 %v905
  %v911 = vpop.xlane.xlu0 %910
  %912 = vadd.xlane.f32.xlu0 %v906
  %v913 = vpop.xlane.xlu0 %912
  %914 = vadd.xlane.f32.xlu0 %v907
  %v915 = vpop.xlane.xlu0 %914
  %v916 = vld [vmem:[%s5] sm:$0x3]
  %vm917 = vcmask 261120
  %v919 = vsel %vm917, %v916, 0
  %921 = vmatprep.subr.mxu0 0.0
  %922 = vmatpush1.msra.mxu0 0.0
  %923 = vmatprep.subr.mxu0 0.0
  %924 = vmatpush1.msra.mxu0 0.0
  %925 = vmatprep.subr.mxu0 0.0
  %926 = vmatpush1.msra.mxu0 0.0
  %927 = vmatprep.subr.mxu0 0.0
  %928 = vmatpush1.msra.mxu0 0.0
  %929 = vmatprep.subr.mxu0 0.0
  %930 = vmatpush1.msra.mxu0 0.0
  %931 = vmatprep.subr.mxu0 0.0
  %932 = vmatpush1.msra.mxu0 0.0
  %933 = vmatprep.subr.mxu0 0.0
  %934 = vmatpush1.msra.mxu0 0.0
  %935 = vmatprep.subr.mxu0 0.0
  %936 = vmatpush1.msra.mxu0 0.0
  %937 = vmatprep.subr.mxu0 0.0
  %938 = vmatpush1.msra.mxu0 0.0
  %939 = vmatprep.subr.mxu0 0.0
  %940 = vmatpush1.msra.mxu0 0.0
  %941 = vmatprep.subr.mxu0 0.0
  %942 = vmatpush1.msra.mxu0 0.0
  %943 = vmatprep.subr.mxu0 0.0
  %944 = vmatpush1.msra.mxu0 0.0
  %945 = vmatprep.subr.mxu0 0.0
  %946 = vmatpush1.msra.mxu0 %v915
  %947 = vmatprep.subr.mxu0 0.0
  %948 = vmatpush1.msra.mxu0 %v913
  %949 = vmatprep.subr.mxu0 0.0
  %950 = vmatpush1.msra.mxu0 %v911
  %951 = vmatprep.subr.mxu0 0.0
  %952 = vmatpush1.msra.mxu0 %v909
  %953 = vmatprep.subr.mxu0 0.0
  %954 = vmatpush2.msra.mxu0 0.0
  %955 = vmatprep.subr.mxu0 0.0
  %956 = vmatpush2.msra.mxu0 0.0
  %957 = vmatprep.subr.mxu0 0.0
  %958 = vmatpush2.msra.mxu0 0.0
  %959 = vmatprep.subr.mxu0 0.0
  %960 = vmatpush2.msra.mxu0 0.0
  %961 = vmatprep.subr.mxu0 0.0
  %962 = vmatpush2.msra.mxu0 0.0
  %963 = vmatprep.subr.mxu0 0.0
  %964 = vmatpush2.msra.mxu0 0.0
  %965 = vmatprep.subr.mxu0 0.0
  %966 = vmatpush2.msra.mxu0 0.0
  %967 = vmatprep.subr.mxu0 0.0
  %968 = vmatpush2.msra.mxu0 0.0
  %969 = vmatprep.subr.mxu0 0.0
  %970 = vmatpush2.msra.mxu0 0.0
  %971 = vmatprep.subr.mxu0 0.0
  %972 = vmatpush2.msra.mxu0 0.0
  %973 = vmatprep.subr.mxu0 0.0
  %974 = vmatpush2.msra.mxu0 0.0
  %975 = vmatprep.subr.mxu0 0.0
  %976 = vmatpush2.msra.mxu0 0.0
  %977 = vmatprep.subr.mxu0 0.0
  %978 = vmatpush2.msra.mxu0 0.0
  %979 = vmatprep.subr.mxu0 0.0
  %980 = vmatpush2.msra.mxu0 0.0
  %981 = vmatprep.subr.mxu0 0.0
  %982 = vmatpush2.msra.mxu0 0.0
  %983 = vmatprep.subr.mxu0 0.0
  %984 = vmatpush2.msra.mxu0 0.0
  %985 = vmatprep.mubr.f32.mxu0 0.0
  %986 = vmatmul.mubr.f32.gmra.mxu0 %v919
  %v987 = vpop.f32.mrf.mxu0
  %v988 = vadd.f32 0.0, %v987
  %v989 = vpop.f32.mrf.mxu0
  %990 = vdwg.mxu0
  %v991 = vxor.u32 %v988, 2147483648
  %v992 = vmul.f32 %v991, 1.442695
  %v993 = vpow.pop %v992
  %v994 = vadd.f32 %v993, 1.0
  %v995 = vrcp.pop %v994
  %v996 = vmul.f32 1.0, %v995
  %vm997 = vcmask 1024
  %998 = vst.msk [vmem:[%s6] sm:$0x3] %vm997, %v996
  // Predicated region
  $region26: #{discriminator_forward.7} parent=0 // pred_check
    _
  $region27: #{discriminator_forward.7} parent=0 // pred_check_branch
    %1000 = sbr.rel (0) target = $region29
  $region28: #{discriminator_forward.7} parent=0 // pred_region
    _
  $region29: #{discriminator_forward.7} parent=0 // pred_fallthru
    _
  // Predicated region
  $region30: #{discriminator_forward.7} parent=0 // pred_check
    _
  $region31: #{discriminator_forward.7} parent=0 // pred_check_branch
    %1002 = sbr.rel (0) target = $region33
  $region32: #{discriminator_forward.7} parent=0 // pred_region
    _
  $region33: #{discriminator_forward.7} parent=0 // pred_fallthru
    _

</llo_original>
